<compile_context>
chip_gen: v7x
topology: tpu7x:2x2x1
jax: 0.10.0
libtpu: 0.0.40
codegen_flags: <defaults>
</compile_context>

<pallas_src>
from functools import partial

import jax
import jax.numpy as jnp
from jax.experimental import pallas as pl
from jax.experimental.pallas import tpu as pltpu

FEAT_DIM = 8                    # backbone feature channels
_N_TAP_ROWS = 9 * FEAT_DIM      # rows of packed 3x3 conv weights (tap-major)


# ----------------------------- in-kernel helpers -----------------------------

def _grid_xy(h, w):
    """(1, h*w) float32 x/y pixel indices of the row-major flattened map."""
    col = jax.lax.broadcasted_iota(jnp.int32, (1, h * w), 1).astype(jnp.float32)
    y = jnp.floor((col + 0.5) * (1.0 / w))
    x = col - y * w
    return x, y


def _lane_roll(x, shift):
    """out[:, l] = x[:, (l + shift) % n]; wrapped lanes are masked by the caller."""
    n = x.shape[1]
    s = shift % n
    if s == 0:
        return x
    return pltpu.roll(x, n - s, axis=1)


def _conv3x3_relu_cm(maps, h, w, bb_ref):
    """Same 3x3 / stride 1 / pad 1 conv (+bias, ReLU) applied to each (3, h*w)
    channel-major map in `maps`, as 9 lane-rolled MXU accumulations with border masks.
    bb_ref is packed (80, 3): rows 8t:8t+8 = tap-t weight (out, in), rows 72:80 col 0 = bias.
    """
    hw = h * w
    xg, yg = _grid_xy(h, w)
    bias = bb_ref[_N_TAP_ROWS:_N_TAP_ROWS + FEAT_DIM, 0:1]            # (8, 1)
    accs = [jnp.zeros((FEAT_DIM, hw), jnp.float32) + bias for _ in maps]
    for dy in (-1, 0, 1):
        for dx in (-1, 0, 1):
            t = (dy + 1) * 3 + (dx + 1)
            w_t = bb_ref[FEAT_DIM * t:FEAT_DIM * t + FEAT_DIM, :]     # (8, 3)
            valid_y = jnp.logical_and(yg + dy >= 0.0, yg + dy <= float(h - 1))
            valid_x = jnp.logical_and(xg + dx >= 0.0, xg + dx <= float(w - 1))
            mask = jnp.where(jnp.logical_and(valid_y, valid_x), 1.0, 0.0)  # (1, hw)
            shift = dy * w + dx
            for n, x3 in enumerate(maps):
                xs = _lane_roll(x3, shift)
                accs[n] = accs[n] + jnp.dot(w_t, xs * mask,
                                            preferred_element_type=jnp.float32)
    return tuple(jnp.maximum(a, 0.0) for a in accs)


# ----------------------------- fused Pallas kernel -----------------------------

def _fused_kernel(search_ref, tmpl_ref, wsel_ref, wplug_ref, b2tb_ref, tvisb_ref,
                  bb_ref, cn_ref, sc_ref, gtb_ref, box_ref, pred_ref,
                  *, Hs, Ws, Ht, Wt, use_external_gt):
    x_s = search_ref[0]                                   # (C, Hs*Ws)  channel-major
    x_t = tmpl_ref[0]                                     # (C, Ht*Wt)

    # ---- band-selection-folded 1x1 convs (bands2three / transband_vis)
    sel3 = jnp.dot(wsel_ref[0], x_s, preferred_element_type=jnp.float32) + b2tb_ref[...]
    plug3 = jnp.dot(wplug_ref[0], x_s, preferred_element_type=jnp.float32) + tvisb_ref[...]
    tmpl3 = jnp.dot(wsel_ref[0], x_t, preferred_element_type=jnp.float32) + b2tb_ref[...]

    # ---- shared backbone 3x3 conv + ReLU (in-kernel rolled accumulation)
    s_feat, p_feat = _conv3x3_relu_cm((sel3, plug3), Hs, Ws, bb_ref)   # (8, HWs) each
    (t_feat,) = _conv3x3_relu_cm((tmpl3,), Ht, Wt, bb_ref)             # (8, HWt)

    # ---- search = where(|search| >= |search_plug|, search, search_plug)
    fused = jnp.where(jnp.abs(s_feat) >= jnp.abs(p_feat), s_feat, p_feat)

    # ---- CORNER box head: two spatial soft-argmaxes over the lane (HW) axis
    HWs = Hs * Ws
    xg, yg = _grid_xy(Hs, Ws)
    xg = (xg + 0.5) * (1.0 / Ws)          # normalized pixel-center convention
    yg = (yg + 0.5) * (1.0 / Hs)

    def soft_argmax(w_row, b_scalar):
        m = jnp.dot(w_row, fused, preferred_element_type=jnp.float32) + b_scalar  # (1, HWs)
        m = m - jnp.max(m, axis=1, keepdims=True)
        p = jnp.exp(m)
        p = p * pl.reciprocal(jnp.sum(p, axis=1, keepdims=True), approx=True)
        return (jnp.sum(p * xg, axis=1, keepdims=True),
                jnp.sum(p * yg, axis=1, keepdims=True))                            # (1,1) each

    # corner pack (32, 8): row0 = tl weights, row8 = br weights, row16/24 col0 = biases
    tlx, tly = soft_argmax(cn_ref[0:1, :], cn_ref[16:17, 0:1])
    brx, bry = soft_argmax(cn_ref[8:9, :], cn_ref[24:25, 0:1])

    cx = (tlx + brx) * 0.5
    cy = (tly + bry) * 0.5
    bw = brx - tlx
    bh = bry - tly
    lane4 = jax.lax.broadcasted_iota(jnp.int32, (1, 4), 1)
    box_ref[0] = jnp.where(lane4 == 0, cx,
                           jnp.where(lane4 == 1, cy,
                                     jnp.where(lane4 == 2, bw, bh)))   # (1, 4) cxcywh

    # ---- score branch: [GAP(search_fused), GAP(template), gt/pred xyxy] . w + b
    gs = jnp.sum(fused, axis=1, keepdims=True) * (1.0 / HWs)           # (8, 1)
    gt = jnp.sum(t_feat, axis=1, keepdims=True) * (1.0 / (Ht * Wt))    # (8, 1)
    if use_external_gt:
        gbox = gtb_ref[0]                                              # (4, 1) xyxy
    else:
        # box_cxcywh_to_xyxy(box_xyxy_to_cxcywh(xyxy)) == xyxy, exactly as in the reference
        sub4 = jax.lax.broadcasted_iota(jnp.int32, (4, 1), 0)
        gbox = jnp.where(sub4 == 0, tlx,
                         jnp.where(sub4 == 1, tly,
                                   jnp.where(sub4 == 2, brx, bry)))    # (4, 1)
    # score pack (32, 1): rows 0:8 search-GAP w, 8:16 template-GAP w, 16:20 box w, row 24 bias
    pred = (jnp.sum(gs * sc_ref[0:FEAT_DIM, :], axis=0, keepdims=True)
            + jnp.sum(gt * sc_ref[FEAT_DIM:2 * FEAT_DIM, :], axis=0, keepdims=True)
            + jnp.sum(gbox * sc_ref[2 * FEAT_DIM:2 * FEAT_DIM + 4, :], axis=0, keepdims=True)
            + sc_ref[24:25, :])
    pred_ref[0] = pred                                                 # (1, 1)


def _hypertrack_fused(search_cm, template_cm, w_sel_eff, w_plug_eff,
                      b2t_b, tvis_b, bb_pack, corner_pack, score_pack, gtb,
                      *, Hs, Ws, Ht, Wt, use_external_gt):
    B, C, HW_s = search_cm.shape
    HW_t = template_cm.shape[2]

    def _shared(a):
        nd = a.ndim
        return pl.BlockSpec(a.shape, lambda b: (0,) * nd)

    kernel = partial(_fused_kernel, Hs=Hs, Ws=Ws, Ht=Ht, Wt=Wt,
                     use_external_gt=use_external_gt)
    return pl.pallas_call(
        kernel,
        out_shape=(jax.ShapeDtypeStruct((B, 1, 4), jnp.float32),
                   jax.ShapeDtypeStruct((B, 1, 1), jnp.float32)),
        grid=(B,),
        in_specs=[
            pl.BlockSpec((1, C, HW_s), lambda b: (b, 0, 0)),
            pl.BlockSpec((1, C, HW_t), lambda b: (b, 0, 0)),
            pl.BlockSpec((1, 3, C), lambda b: (b, 0, 0)),
            pl.BlockSpec((1, 3, C), lambda b: (b, 0, 0)),
            _shared(b2t_b),
            _shared(tvis_b),
            _shared(bb_pack),
            _shared(corner_pack),
            _shared(score_pack),
            pl.BlockSpec((1, 4, 1), lambda b: (b, 0, 0)),
        ],
        out_specs=(pl.BlockSpec((1, 1, 4), lambda b: (b, 0, 0)),
                   pl.BlockSpec((1, 1, 1), lambda b: (b, 0, 0))),
        compiler_params=pltpu.CompilerParams(dimension_semantics=("parallel",)),
    )(search_cm, template_cm, w_sel_eff, w_plug_eff,
      b2t_b, tvis_b, bb_pack, corner_pack, score_pack, gtb)


# ----------------------------- parameters -----------------------------

def init_params(key, c_pad):
    ks = jax.random.split(key, 12)
    p = {}
    p["gate_w"] = jax.random.normal(ks[0], (c_pad,), jnp.float32) * 0.5
    p["gate_b"] = jax.random.normal(ks[1], (c_pad,), jnp.float32) * 0.1
    p["b2t_w"] = jax.random.normal(ks[2], (3, 10), jnp.float32) * 0.1      # bands2three 1x1
    p["b2t_b"] = jax.random.normal(ks[3], (3,), jnp.float32) * 0.01
    p["tvis_w"] = jax.random.normal(ks[4], (3, 6), jnp.float32) * 0.1      # transband_vis 1x1
    p["tvis_b"] = jax.random.normal(ks[5], (3,), jnp.float32) * 0.01
    p["bb_w"] = jax.random.normal(ks[6], (FEAT_DIM, 3, 3, 3), jnp.float32) * 0.1
    p["bb_b"] = jax.random.normal(ks[7], (FEAT_DIM,), jnp.float32) * 0.01
    p["corner_w"] = jax.random.normal(ks[8], (2, FEAT_DIM), jnp.float32) * 0.1
    p["corner_b"] = jax.random.normal(ks[9], (2,), jnp.float32) * 0.01
    p["score_w"] = jax.random.normal(ks[10], (2 * FEAT_DIM + 4, 1), jnp.float32) * 0.1
    p["score_b"] = jax.random.normal(ks[11], (1,), jnp.float32) * 0.01
    return p


# ----------------------------- forward pass -----------------------------

@partial(jax.jit, static_argnames=("run_score_head",))
def hypertrack_forward(params, template, online_template, search,
                       run_score_head=True, gt_bboxes=None):
    """datatype == 'hypertrack_vis' path of hypertrackOnlineScore.forward."""
    if template.ndim == 5:
        template = template[0]
    if online_template.ndim == 5:
        online_template = online_template[0]
    if search.ndim == 5:
        search = search[0]
    # In the vis path rank_online_template is gathered from `template` and the online
    # feature is never consumed by forward_head -> dead compute removed.
    del online_template

    B, C, Ht, Wt = template.shape
    Hs, Ws = search.shape[2], search.shape[3]
    HW_s, HW_t = Hs * Ws, Ht * Wt
    n_sel, n_plug = C - 6, 6

    # channel-major (C, HW): plain reshape of NCHW, zero transposes.
    search_cm = search.reshape(B, C, HW_s).astype(jnp.float32)
    template_cm = template.reshape(B, C, HW_t).astype(jnp.float32)

    # ---- bandsgate (synthetic: sigmoid(GAP * w + b)); zero-band scores are analytic.
    m = jnp.mean(search_cm, axis=-1)                                       # (B, C)
    real_scores = jax.nn.sigmoid(m * params["gate_w"][:C] + params["gate_b"][:C])
    zero_scores = jnp.broadcast_to(
        jax.nn.sigmoid(params["gate_b"][C:])[None, :], (B, 9))
    scores = jnp.concatenate([real_scores, zero_scores], axis=1)           # (B, C+9)
    indice_topall = jnp.argsort(-scores, axis=-1)[:, :C]                   # (B, C)
    sel_idx = indice_topall[:, :n_sel]                                     # top 10 bands
    plug_idx = indice_topall[:, n_sel:]                                    # next 6 bands

    # ---- fold band selection into per-batch effective 1x1 weights
    #      (gather-then-1x1  ==  1x1 with one-hot-selected weight columns; indices >= C
    #       hit the never-materialized zero bands and give zero columns).
    sel_oh = jax.nn.one_hot(sel_idx, C, dtype=jnp.float32)                 # (B, 10, C)
    plug_oh = jax.nn.one_hot(plug_idx, C, dtype=jnp.float32)               # (B, 6, C)
    w_sel_eff = jnp.einsum("oj,bjc->boc", params["b2t_w"], sel_oh)         # (B, 3, C)
    w_plug_eff = jnp.einsum("oj,bjc->boc", params["tvis_w"], plug_oh)      # (B, 3, C)
    b2t_b = params["b2t_b"].reshape(3, 1)
    tvis_b = params["tvis_b"].reshape(3, 1)

    # ---- pack the 3x3 conv weights tap-major with 8-sublane-aligned rows: (80, 3)
    w_taps = params["bb_w"].transpose(2, 3, 0, 1)                          # (kh, kw, out, in)
    bb_pack = jnp.zeros((_N_TAP_ROWS + FEAT_DIM, 3), jnp.float32)
    bb_pack = bb_pack.at[0:_N_TAP_ROWS, :].set(w_taps.reshape(_N_TAP_ROWS, 3))
    bb_pack = bb_pack.at[_N_TAP_ROWS:_N_TAP_ROWS + FEAT_DIM, 0].set(params["bb_b"])

    # ---- corner head pack (32, 8): rows 0 / 8 = tl / br weights, rows 16 / 24 col0 = biases
    corner_pack = jnp.zeros((32, FEAT_DIM), jnp.float32)
    corner_pack = corner_pack.at[0, :].set(params["corner_w"][0])
    corner_pack = corner_pack.at[8, :].set(params["corner_w"][1])
    corner_pack = corner_pack.at[16, 0].set(params["corner_b"][0])
    corner_pack = corner_pack.at[24, 0].set(params["corner_b"][1])

    # ---- score head pack (32, 1)
    sw = params["score_w"].reshape(-1)
    score_pack = jnp.zeros((32, 1), jnp.float32)
    score_pack = score_pack.at[0:FEAT_DIM, 0].set(sw[0:FEAT_DIM])
    score_pack = score_pack.at[FEAT_DIM:2 * FEAT_DIM, 0].set(sw[FEAT_DIM:2 * FEAT_DIM])
    score_pack = score_pack.at[2 * FEAT_DIM:2 * FEAT_DIM + 4, 0].set(sw[2 * FEAT_DIM:])
    score_pack = score_pack.at[24, 0].set(params["score_b"][0])

    if gt_bboxes is None:
        gtb = jnp.zeros((B, 4, 1), jnp.float32)
        use_external_gt = False
    else:
        gtb = gt_bboxes.reshape(B, 4, 1).astype(jnp.float32)
        use_external_gt = True

    # TODO(synk): the in-kernel rolled-accumulation conv assumes H*W is a multiple of
    # 128 (lane-axis pltpu.roll); generalize with masked shifts for e.g. 8x8 templates.
    boxes, preds = _hypertrack_fused(
        search_cm, template_cm, w_sel_eff, w_plug_eff,
        b2t_b, tvis_b, bb_pack, corner_pack, score_pack, gtb,
        Hs=Hs, Ws=Ws, Ht=Ht, Wt=Wt, use_external_gt=use_external_gt)

    outputs_coord_new = boxes.reshape(B, 1, 4)
    out = {"pred_boxes": outputs_coord_new}
    if run_score_head:
        out["pred_scores"] = preds.reshape(-1)
    return out, outputs_coord_new


# ----------------------------- main -----------------------------

if __name__ == "__main__":
    key = jax.random.PRNGKey(0)
    kt, ko, ks, kp = jax.random.split(key, 4)
    B, C, Ht, Hs = 2, 16, 16, 16
    template = jax.random.normal(kt, (B, C, Ht, Ht), jnp.float32)
    online_template = jax.random.normal(ko, (B, C, Ht, Ht), jnp.float32)
    search = jax.random.normal(ks, (B, C, Hs, Hs), jnp.float32)
    params = init_params(kp, C + 9)

    out, coord = hypertrack_forward(params, template, online_template, search)
    jax.block_until_ready(out["pred_boxes"])
    jax.block_until_ready(out["pred_scores"])
    jax.block_until_ready(coord)
    assert out["pred_boxes"].shape == (B, 1, 4)
    assert out["pred_scores"].shape == (B,)
    assert bool(jnp.all(jnp.isfinite(out["pred_boxes"])))
    assert bool(jnp.all(jnp.isfinite(out["pred_scores"])))
    print("KERNEL_OK")
</pallas_src>

<mosaic_0001>
module attributes {stable_mosaic.version = 11 : i64} {
  func.func @_fused_kernel(%arg0: i32, %arg1: memref<1x16x256xf32, #tpu.memory_space<vmem>>, %arg2: memref<1x16x256xf32, #tpu.memory_space<vmem>>, %arg3: memref<1x3x16xf32, #tpu.memory_space<vmem>>, %arg4: memref<1x3x16xf32, #tpu.memory_space<vmem>>, %arg5: memref<3x1xf32, #tpu.memory_space<vmem>>, %arg6: memref<3x1xf32, #tpu.memory_space<vmem>>, %arg7: memref<80x3xf32, #tpu.memory_space<vmem>>, %arg8: memref<32x8xf32, #tpu.memory_space<vmem>>, %arg9: memref<32x1xf32, #tpu.memory_space<vmem>>, %arg10: memref<1x4x1xf32, #tpu.memory_space<vmem>>, %arg11: memref<1x1x4xf32, #tpu.memory_space<vmem>>, %arg12: memref<1x1x1xf32, #tpu.memory_space<vmem>>) attributes {dimension_semantics = [#tpu.dimension_semantics<parallel>], iteration_bounds = array<i64: 2>, scalar_prefetch = 0 : i64, scratch_operands = 0 : i64, tpu.core_type = #tpu.core_type<tc>, window_params = [{transform_indices = @transform_0, window_bounds = array<i64: 1, 16, 256>}, {transform_indices = @transform_1, window_bounds = array<i64: 1, 16, 256>}, {transform_indices = @transform_2, window_bounds = array<i64: 1, 3, 16>}, {transform_indices = @transform_3, window_bounds = array<i64: 1, 3, 16>}, {pipeline_mode = #tpu.pipeline_mode<synchronous>, transform_indices = @transform_4, window_bounds = array<i64: 3, 1>}, {pipeline_mode = #tpu.pipeline_mode<synchronous>, transform_indices = @transform_5, window_bounds = array<i64: 3, 1>}, {pipeline_mode = #tpu.pipeline_mode<synchronous>, transform_indices = @transform_6, window_bounds = array<i64: 80, 3>}, {pipeline_mode = #tpu.pipeline_mode<synchronous>, transform_indices = @transform_7, window_bounds = array<i64: 32, 8>}, {pipeline_mode = #tpu.pipeline_mode<synchronous>, transform_indices = @transform_8, window_bounds = array<i64: 32, 1>}, {transform_indices = @transform_9, window_bounds = array<i64: 1, 4, 1>}, {transform_indices = @transform_10, window_bounds = array<i64: 1, 1, 4>}, {transform_indices = @transform_11, window_bounds = array<i64: 1, 1, 1>}]} {
    %c0 = arith.constant 0 : index
    %c0_0 = arith.constant 0 : index
    %c0_1 = arith.constant 0 : index
    %0 = vector.load %arg1[%c0, %c0_0, %c0_1] : memref<1x16x256xf32, #tpu.memory_space<vmem>>, vector<1x16x256xf32>
    %1 = vector.shape_cast %0 : vector<1x16x256xf32> to vector<16x256xf32>
    %c0_2 = arith.constant 0 : index
    %c0_3 = arith.constant 0 : index
    %c0_4 = arith.constant 0 : index
    %2 = vector.load %arg2[%c0_2, %c0_3, %c0_4] : memref<1x16x256xf32, #tpu.memory_space<vmem>>, vector<1x16x256xf32>
    %3 = vector.shape_cast %2 : vector<1x16x256xf32> to vector<16x256xf32>
    %c0_5 = arith.constant 0 : index
    %c0_6 = arith.constant 0 : index
    %c0_7 = arith.constant 0 : index
    %4 = vector.load %arg3[%c0_5, %c0_6, %c0_7] : memref<1x3x16xf32, #tpu.memory_space<vmem>>, vector<1x3x16xf32>
    %5 = vector.shape_cast %4 : vector<1x3x16xf32> to vector<3x16xf32>
    %cst = arith.constant dense<0.000000e+00> : vector<3x256xf32>
    %6 = tpu.matmul %5, %1, %cst {dimension_numbers = #tpu.dot_dimension_numbers<[1], [0], [0], [1], [0, 0, 1, 1], [], []>} : vector<3x16xf32>, vector<16x256xf32>, vector<3x256xf32> -> vector<3x256xf32>
    %c0_8 = arith.constant 0 : index
    %c0_9 = arith.constant 0 : index
    %7 = vector.load %arg5[%c0_8, %c0_9] : memref<3x1xf32, #tpu.memory_space<vmem>>, vector<3x1xf32>
    %8 = vector.broadcast %7 : vector<3x1xf32> to vector<3x256xf32>
    %9 = arith.addf %6, %8 : vector<3x256xf32>
    %c0_10 = arith.constant 0 : index
    %c0_11 = arith.constant 0 : index
    %c0_12 = arith.constant 0 : index
    %10 = vector.load %arg4[%c0_10, %c0_11, %c0_12] : memref<1x3x16xf32, #tpu.memory_space<vmem>>, vector<1x3x16xf32>
    %11 = vector.shape_cast %10 : vector<1x3x16xf32> to vector<3x16xf32>
    %cst_13 = arith.constant dense<0.000000e+00> : vector<3x256xf32>
    %12 = tpu.matmul %11, %1, %cst_13 {dimension_numbers = #tpu.dot_dimension_numbers<[1], [0], [0], [1], [0, 0, 1, 1], [], []>} : vector<3x16xf32>, vector<16x256xf32>, vector<3x256xf32> -> vector<3x256xf32>
    %c0_14 = arith.constant 0 : index
    %c0_15 = arith.constant 0 : index
    %13 = vector.load %arg6[%c0_14, %c0_15] : memref<3x1xf32, #tpu.memory_space<vmem>>, vector<3x1xf32>
    %14 = vector.broadcast %13 : vector<3x1xf32> to vector<3x256xf32>
    %15 = arith.addf %12, %14 : vector<3x256xf32>
    %c0_16 = arith.constant 0 : index
    %c0_17 = arith.constant 0 : index
    %c0_18 = arith.constant 0 : index
    %16 = vector.load %arg3[%c0_16, %c0_17, %c0_18] : memref<1x3x16xf32, #tpu.memory_space<vmem>>, vector<1x3x16xf32>
    %17 = vector.shape_cast %16 : vector<1x3x16xf32> to vector<3x16xf32>
    %cst_19 = arith.constant dense<0.000000e+00> : vector<3x256xf32>
    %18 = tpu.matmul %17, %3, %cst_19 {dimension_numbers = #tpu.dot_dimension_numbers<[1], [0], [0], [1], [0, 0, 1, 1], [], []>} : vector<3x16xf32>, vector<16x256xf32>, vector<3x256xf32> -> vector<3x256xf32>
    %c0_20 = arith.constant 0 : index
    %c0_21 = arith.constant 0 : index
    %19 = vector.load %arg5[%c0_20, %c0_21] : memref<3x1xf32, #tpu.memory_space<vmem>>, vector<3x1xf32>
    %20 = vector.broadcast %19 : vector<3x1xf32> to vector<3x256xf32>
    %21 = arith.addf %18, %20 : vector<3x256xf32>
    %22 = tpu.iota {dimensions = array<i32: 1>} : vector<1x256xi32>
    %23 = arith.sitofp %22 : vector<1x256xi32> to vector<1x256xf32>
    %cst_22 = arith.constant 5.000000e-01 : f32
    %24 = vector.broadcast %cst_22 : f32 to vector<1x256xf32>
    %25 = arith.addf %23, %24 : vector<1x256xf32>
    %cst_23 = arith.constant 6.250000e-02 : f32
    %26 = vector.broadcast %cst_23 : f32 to vector<1x256xf32>
    %27 = arith.mulf %25, %26 : vector<1x256xf32>
    %28 = math.floor %27 : vector<1x256xf32>
    %cst_24 = arith.constant 1.600000e+01 : f32
    %29 = vector.broadcast %cst_24 : f32 to vector<1x256xf32>
    %30 = arith.mulf %28, %29 : vector<1x256xf32>
    %31 = arith.subf %23, %30 : vector<1x256xf32>
    %c72 = arith.constant 72 : index
    %c0_25 = arith.constant 0 : index
    %32 = vector.load %arg7[%c72, %c0_25] : memref<80x3xf32, #tpu.memory_space<vmem>>, vector<8x1xf32>
    %cst_26 = arith.constant 0.000000e+00 : f32
    %33 = vector.broadcast %cst_26 : f32 to vector<8x256xf32>
    %34 = vector.broadcast %32 : vector<8x1xf32> to vector<8x256xf32>
    %35 = arith.addf %33, %34 : vector<8x256xf32>
    %cst_27 = arith.constant 0.000000e+00 : f32
    %36 = vector.broadcast %cst_27 : f32 to vector<8x256xf32>
    %37 = vector.broadcast %32 : vector<8x1xf32> to vector<8x256xf32>
    %38 = arith.addf %36, %37 : vector<8x256xf32>
    %c0_28 = arith.constant 0 : index
    %c0_29 = arith.constant 0 : index
    %39 = vector.load %arg7[%c0_28, %c0_29] : memref<80x3xf32, #tpu.memory_space<vmem>>, vector<8x3xf32>
    %cst_30 = arith.constant -1.000000e+00 : f32
    %40 = vector.broadcast %cst_30 : f32 to vector<1x256xf32>
    %41 = arith.addf %28, %40 : vector<1x256xf32>
    %cst_31 = arith.constant 0.000000e+00 : f32
    %42 = vector.broadcast %cst_31 : f32 to vector<1x256xf32>
    %43 = arith.cmpf oge, %41, %42 : vector<1x256xf32>
    %cst_32 = arith.constant -1.000000e+00 : f32
    %44 = vector.broadcast %cst_32 : f32 to vector<1x256xf32>
    %45 = arith.addf %28, %44 : vector<1x256xf32>
    %cst_33 = arith.constant 1.500000e+01 : f32
    %46 = vector.broadcast %cst_33 : f32 to vector<1x256xf32>
    %47 = arith.cmpf ole, %45, %46 : vector<1x256xf32>
    %48 = arith.andi %43, %47 : vector<1x256xi1>
    %cst_34 = arith.constant -1.000000e+00 : f32
    %49 = vector.broadcast %cst_34 : f32 to vector<1x256xf32>
    %50 = arith.addf %31, %49 : vector<1x256xf32>
    %cst_35 = arith.constant 0.000000e+00 : f32
    %51 = vector.broadcast %cst_35 : f32 to vector<1x256xf32>
    %52 = arith.cmpf oge, %50, %51 : vector<1x256xf32>
    %cst_36 = arith.constant -1.000000e+00 : f32
    %53 = vector.broadcast %cst_36 : f32 to vector<1x256xf32>
    %54 = arith.addf %31, %53 : vector<1x256xf32>
    %cst_37 = arith.constant 1.500000e+01 : f32
    %55 = vector.broadcast %cst_37 : f32 to vector<1x256xf32>
    %56 = arith.cmpf ole, %54, %55 : vector<1x256xf32>
    %57 = arith.andi %52, %56 : vector<1x256xi1>
    %58 = arith.andi %48, %57 : vector<1x256xi1>
    %cst_38 = arith.constant 1.000000e+00 : f32
    %cst_39 = arith.constant 0.000000e+00 : f32
    %59 = vector.broadcast %cst_38 : f32 to vector<1x256xf32>
    %60 = vector.broadcast %cst_39 : f32 to vector<1x256xf32>
    %61 = arith.select %58, %59, %60 : vector<1x256xi1>, vector<1x256xf32>
    %c17_i32 = arith.constant 17 : i32
    %62 = tpu.dynamic_rotate %9 by %c17_i32 dim 1 : vector<3x256xf32>, i32 -> vector<3x256xf32>
    %63 = vector.broadcast %61 : vector<1x256xf32> to vector<3x256xf32>
    %64 = arith.mulf %62, %63 : vector<3x256xf32>
    %cst_40 = arith.constant dense<0.000000e+00> : vector<8x256xf32>
    %65 = tpu.matmul %39, %64, %cst_40 {dimension_numbers = #tpu.dot_dimension_numbers<[1], [0], [0], [1], [0, 0, 1, 1], [], []>} : vector<8x3xf32>, vector<3x256xf32>, vector<8x256xf32> -> vector<8x256xf32>
    %66 = arith.addf %35, %65 : vector<8x256xf32>
    %c17_i32_41 = arith.constant 17 : i32
    %67 = tpu.dynamic_rotate %15 by %c17_i32_41 dim 1 : vector<3x256xf32>, i32 -> vector<3x256xf32>
    %68 = vector.broadcast %61 : vector<1x256xf32> to vector<3x256xf32>
    %69 = arith.mulf %67, %68 : vector<3x256xf32>
    %cst_42 = arith.constant dense<0.000000e+00> : vector<8x256xf32>
    %70 = tpu.matmul %39, %69, %cst_42 {dimension_numbers = #tpu.dot_dimension_numbers<[1], [0], [0], [1], [0, 0, 1, 1], [], []>} : vector<8x3xf32>, vector<3x256xf32>, vector<8x256xf32> -> vector<8x256xf32>
    %71 = arith.addf %38, %70 : vector<8x256xf32>
    %c8 = arith.constant 8 : index
    %c0_43 = arith.constant 0 : index
    %72 = vector.load %arg7[%c8, %c0_43] : memref<80x3xf32, #tpu.memory_space<vmem>>, vector<8x3xf32>
    %cst_44 = arith.constant -1.000000e+00 : f32
    %73 = vector.broadcast %cst_44 : f32 to vector<1x256xf32>
    %74 = arith.addf %28, %73 : vector<1x256xf32>
    %cst_45 = arith.constant 0.000000e+00 : f32
    %75 = vector.broadcast %cst_45 : f32 to vector<1x256xf32>
    %76 = arith.cmpf oge, %74, %75 : vector<1x256xf32>
    %cst_46 = arith.constant -1.000000e+00 : f32
    %77 = vector.broadcast %cst_46 : f32 to vector<1x256xf32>
    %78 = arith.addf %28, %77 : vector<1x256xf32>
    %cst_47 = arith.constant 1.500000e+01 : f32
    %79 = vector.broadcast %cst_47 : f32 to vector<1x256xf32>
    %80 = arith.cmpf ole, %78, %79 : vector<1x256xf32>
    %81 = arith.andi %76, %80 : vector<1x256xi1>
    %cst_48 = arith.constant 0.000000e+00 : f32
    %82 = vector.broadcast %cst_48 : f32 to vector<1x256xf32>
    %83 = arith.addf %31, %82 : vector<1x256xf32>
    %cst_49 = arith.constant 0.000000e+00 : f32
    %84 = vector.broadcast %cst_49 : f32 to vector<1x256xf32>
    %85 = arith.cmpf oge, %83, %84 : vector<1x256xf32>
    %cst_50 = arith.constant 0.000000e+00 : f32
    %86 = vector.broadcast %cst_50 : f32 to vector<1x256xf32>
    %87 = arith.addf %31, %86 : vector<1x256xf32>
    %cst_51 = arith.constant 1.500000e+01 : f32
    %88 = vector.broadcast %cst_51 : f32 to vector<1x256xf32>
    %89 = arith.cmpf ole, %87, %88 : vector<1x256xf32>
    %90 = arith.andi %85, %89 : vector<1x256xi1>
    %91 = arith.andi %81, %90 : vector<1x256xi1>
    %cst_52 = arith.constant 1.000000e+00 : f32
    %cst_53 = arith.constant 0.000000e+00 : f32
    %92 = vector.broadcast %cst_52 : f32 to vector<1x256xf32>
    %93 = vector.broadcast %cst_53 : f32 to vector<1x256xf32>
    %94 = arith.select %91, %92, %93 : vector<1x256xi1>, vector<1x256xf32>
    %c16_i32 = arith.constant 16 : i32
    %95 = tpu.dynamic_rotate %9 by %c16_i32 dim 1 : vector<3x256xf32>, i32 -> vector<3x256xf32>
    %96 = vector.broadcast %94 : vector<1x256xf32> to vector<3x256xf32>
    %97 = arith.mulf %95, %96 : vector<3x256xf32>
    %cst_54 = arith.constant dense<0.000000e+00> : vector<8x256xf32>
    %98 = tpu.matmul %72, %97, %cst_54 {dimension_numbers = #tpu.dot_dimension_numbers<[1], [0], [0], [1], [0, 0, 1, 1], [], []>} : vector<8x3xf32>, vector<3x256xf32>, vector<8x256xf32> -> vector<8x256xf32>
    %99 = arith.addf %66, %98 : vector<8x256xf32>
    %c16_i32_55 = arith.constant 16 : i32
    %100 = tpu.dynamic_rotate %15 by %c16_i32_55 dim 1 : vector<3x256xf32>, i32 -> vector<3x256xf32>
    %101 = vector.broadcast %94 : vector<1x256xf32> to vector<3x256xf32>
    %102 = arith.mulf %100, %101 : vector<3x256xf32>
    %cst_56 = arith.constant dense<0.000000e+00> : vector<8x256xf32>
    %103 = tpu.matmul %72, %102, %cst_56 {dimension_numbers = #tpu.dot_dimension_numbers<[1], [0], [0], [1], [0, 0, 1, 1], [], []>} : vector<8x3xf32>, vector<3x256xf32>, vector<8x256xf32> -> vector<8x256xf32>
    %104 = arith.addf %71, %103 : vector<8x256xf32>
    %c16 = arith.constant 16 : index
    %c0_57 = arith.constant 0 : index
    %105 = vector.load %arg7[%c16, %c0_57] : memref<80x3xf32, #tpu.memory_space<vmem>>, vector<8x3xf32>
    %cst_58 = arith.constant -1.000000e+00 : f32
    %106 = vector.broadcast %cst_58 : f32 to vector<1x256xf32>
    %107 = arith.addf %28, %106 : vector<1x256xf32>
    %cst_59 = arith.constant 0.000000e+00 : f32
    %108 = vector.broadcast %cst_59 : f32 to vector<1x256xf32>
    %109 = arith.cmpf oge, %107, %108 : vector<1x256xf32>
    %cst_60 = arith.constant -1.000000e+00 : f32
    %110 = vector.broadcast %cst_60 : f32 to vector<1x256xf32>
    %111 = arith.addf %28, %110 : vector<1x256xf32>
    %cst_61 = arith.constant 1.500000e+01 : f32
    %112 = vector.broadcast %cst_61 : f32 to vector<1x256xf32>
    %113 = arith.cmpf ole, %111, %112 : vector<1x256xf32>
    %114 = arith.andi %109, %113 : vector<1x256xi1>
    %cst_62 = arith.constant 1.000000e+00 : f32
    %115 = vector.broadcast %cst_62 : f32 to vector<1x256xf32>
    %116 = arith.addf %31, %115 : vector<1x256xf32>
    %cst_63 = arith.constant 0.000000e+00 : f32
    %117 = vector.broadcast %cst_63 : f32 to vector<1x256xf32>
    %118 = arith.cmpf oge, %116, %117 : vector<1x256xf32>
    %cst_64 = arith.constant 1.000000e+00 : f32
    %119 = vector.broadcast %cst_64 : f32 to vector<1x256xf32>
    %120 = arith.addf %31, %119 : vector<1x256xf32>
    %cst_65 = arith.constant 1.500000e+01 : f32
    %121 = vector.broadcast %cst_65 : f32 to vector<1x256xf32>
    %122 = arith.cmpf ole, %120, %121 : vector<1x256xf32>
    %123 = arith.andi %118, %122 : vector<1x256xi1>
    %124 = arith.andi %114, %123 : vector<1x256xi1>
    %cst_66 = arith.constant 1.000000e+00 : f32
    %cst_67 = arith.constant 0.000000e+00 : f32
    %125 = vector.broadcast %cst_66 : f32 to vector<1x256xf32>
    %126 = vector.broadcast %cst_67 : f32 to vector<1x256xf32>
    %127 = arith.select %124, %125, %126 : vector<1x256xi1>, vector<1x256xf32>
    %c15_i32 = arith.constant 15 : i32
    %128 = tpu.dynamic_rotate %9 by %c15_i32 dim 1 : vector<3x256xf32>, i32 -> vector<3x256xf32>
    %129 = vector.broadcast %127 : vector<1x256xf32> to vector<3x256xf32>
    %130 = arith.mulf %128, %129 : vector<3x256xf32>
    %cst_68 = arith.constant dense<0.000000e+00> : vector<8x256xf32>
    %131 = tpu.matmul %105, %130, %cst_68 {dimension_numbers = #tpu.dot_dimension_numbers<[1], [0], [0], [1], [0, 0, 1, 1], [], []>} : vector<8x3xf32>, vector<3x256xf32>, vector<8x256xf32> -> vector<8x256xf32>
    %132 = arith.addf %99, %131 : vector<8x256xf32>
    %c15_i32_69 = arith.constant 15 : i32
    %133 = tpu.dynamic_rotate %15 by %c15_i32_69 dim 1 : vector<3x256xf32>, i32 -> vector<3x256xf32>
    %134 = vector.broadcast %127 : vector<1x256xf32> to vector<3x256xf32>
    %135 = arith.mulf %133, %134 : vector<3x256xf32>
    %cst_70 = arith.constant dense<0.000000e+00> : vector<8x256xf32>
    %136 = tpu.matmul %105, %135, %cst_70 {dimension_numbers = #tpu.dot_dimension_numbers<[1], [0], [0], [1], [0, 0, 1, 1], [], []>} : vector<8x3xf32>, vector<3x256xf32>, vector<8x256xf32> -> vector<8x256xf32>
    %137 = arith.addf %104, %136 : vector<8x256xf32>
    %c24 = arith.constant 24 : index
    %c0_71 = arith.constant 0 : index
    %138 = vector.load %arg7[%c24, %c0_71] : memref<80x3xf32, #tpu.memory_space<vmem>>, vector<8x3xf32>
    %cst_72 = arith.constant 0.000000e+00 : f32
    %139 = vector.broadcast %cst_72 : f32 to vector<1x256xf32>
    %140 = arith.addf %28, %139 : vector<1x256xf32>
    %cst_73 = arith.constant 0.000000e+00 : f32
    %141 = vector.broadcast %cst_73 : f32 to vector<1x256xf32>
    %142 = arith.cmpf oge, %140, %141 : vector<1x256xf32>
    %cst_74 = arith.constant 0.000000e+00 : f32
    %143 = vector.broadcast %cst_74 : f32 to vector<1x256xf32>
    %144 = arith.addf %28, %143 : vector<1x256xf32>
    %cst_75 = arith.constant 1.500000e+01 : f32
    %145 = vector.broadcast %cst_75 : f32 to vector<1x256xf32>
    %146 = arith.cmpf ole, %144, %145 : vector<1x256xf32>
    %147 = arith.andi %142, %146 : vector<1x256xi1>
    %cst_76 = arith.constant -1.000000e+00 : f32
    %148 = vector.broadcast %cst_76 : f32 to vector<1x256xf32>
    %149 = arith.addf %31, %148 : vector<1x256xf32>
    %cst_77 = arith.constant 0.000000e+00 : f32
    %150 = vector.broadcast %cst_77 : f32 to vector<1x256xf32>
    %151 = arith.cmpf oge, %149, %150 : vector<1x256xf32>
    %cst_78 = arith.constant -1.000000e+00 : f32
    %152 = vector.broadcast %cst_78 : f32 to vector<1x256xf32>
    %153 = arith.addf %31, %152 : vector<1x256xf32>
    %cst_79 = arith.constant 1.500000e+01 : f32
    %154 = vector.broadcast %cst_79 : f32 to vector<1x256xf32>
    %155 = arith.cmpf ole, %153, %154 : vector<1x256xf32>
    %156 = arith.andi %151, %155 : vector<1x256xi1>
    %157 = arith.andi %147, %156 : vector<1x256xi1>
    %cst_80 = arith.constant 1.000000e+00 : f32
    %cst_81 = arith.constant 0.000000e+00 : f32
    %158 = vector.broadcast %cst_80 : f32 to vector<1x256xf32>
    %159 = vector.broadcast %cst_81 : f32 to vector<1x256xf32>
    %160 = arith.select %157, %158, %159 : vector<1x256xi1>, vector<1x256xf32>
    %c1_i32 = arith.constant 1 : i32
    %161 = tpu.dynamic_rotate %9 by %c1_i32 dim 1 : vector<3x256xf32>, i32 -> vector<3x256xf32>
    %162 = vector.broadcast %160 : vector<1x256xf32> to vector<3x256xf32>
    %163 = arith.mulf %161, %162 : vector<3x256xf32>
    %cst_82 = arith.constant dense<0.000000e+00> : vector<8x256xf32>
    %164 = tpu.matmul %138, %163, %cst_82 {dimension_numbers = #tpu.dot_dimension_numbers<[1], [0], [0], [1], [0, 0, 1, 1], [], []>} : vector<8x3xf32>, vector<3x256xf32>, vector<8x256xf32> -> vector<8x256xf32>
    %165 = arith.addf %132, %164 : vector<8x256xf32>
    %c1_i32_83 = arith.constant 1 : i32
    %166 = tpu.dynamic_rotate %15 by %c1_i32_83 dim 1 : vector<3x256xf32>, i32 -> vector<3x256xf32>
    %167 = vector.broadcast %160 : vector<1x256xf32> to vector<3x256xf32>
    %168 = arith.mulf %166, %167 : vector<3x256xf32>
    %cst_84 = arith.constant dense<0.000000e+00> : vector<8x256xf32>
    %169 = tpu.matmul %138, %168, %cst_84 {dimension_numbers = #tpu.dot_dimension_numbers<[1], [0], [0], [1], [0, 0, 1, 1], [], []>} : vector<8x3xf32>, vector<3x256xf32>, vector<8x256xf32> -> vector<8x256xf32>
    %170 = arith.addf %137, %169 : vector<8x256xf32>
    %c32 = arith.constant 32 : index
    %c0_85 = arith.constant 0 : index
    %171 = vector.load %arg7[%c32, %c0_85] : memref<80x3xf32, #tpu.memory_space<vmem>>, vector<8x3xf32>
    %cst_86 = arith.constant 0.000000e+00 : f32
    %172 = vector.broadcast %cst_86 : f32 to vector<1x256xf32>
    %173 = arith.addf %28, %172 : vector<1x256xf32>
    %cst_87 = arith.constant 0.000000e+00 : f32
    %174 = vector.broadcast %cst_87 : f32 to vector<1x256xf32>
    %175 = arith.cmpf oge, %173, %174 : vector<1x256xf32>
    %cst_88 = arith.constant 0.000000e+00 : f32
    %176 = vector.broadcast %cst_88 : f32 to vector<1x256xf32>
    %177 = arith.addf %28, %176 : vector<1x256xf32>
    %cst_89 = arith.constant 1.500000e+01 : f32
    %178 = vector.broadcast %cst_89 : f32 to vector<1x256xf32>
    %179 = arith.cmpf ole, %177, %178 : vector<1x256xf32>
    %180 = arith.andi %175, %179 : vector<1x256xi1>
    %cst_90 = arith.constant 0.000000e+00 : f32
    %181 = vector.broadcast %cst_90 : f32 to vector<1x256xf32>
    %182 = arith.addf %31, %181 : vector<1x256xf32>
    %cst_91 = arith.constant 0.000000e+00 : f32
    %183 = vector.broadcast %cst_91 : f32 to vector<1x256xf32>
    %184 = arith.cmpf oge, %182, %183 : vector<1x256xf32>
    %cst_92 = arith.constant 0.000000e+00 : f32
    %185 = vector.broadcast %cst_92 : f32 to vector<1x256xf32>
    %186 = arith.addf %31, %185 : vector<1x256xf32>
    %cst_93 = arith.constant 1.500000e+01 : f32
    %187 = vector.broadcast %cst_93 : f32 to vector<1x256xf32>
    %188 = arith.cmpf ole, %186, %187 : vector<1x256xf32>
    %189 = arith.andi %184, %188 : vector<1x256xi1>
    %190 = arith.andi %180, %189 : vector<1x256xi1>
    %cst_94 = arith.constant 1.000000e+00 : f32
    %cst_95 = arith.constant 0.000000e+00 : f32
    %191 = vector.broadcast %cst_94 : f32 to vector<1x256xf32>
    %192 = vector.broadcast %cst_95 : f32 to vector<1x256xf32>
    %193 = arith.select %190, %191, %192 : vector<1x256xi1>, vector<1x256xf32>
    %194 = vector.broadcast %193 : vector<1x256xf32> to vector<3x256xf32>
    %195 = arith.mulf %9, %194 : vector<3x256xf32>
    %cst_96 = arith.constant dense<0.000000e+00> : vector<8x256xf32>
    %196 = tpu.matmul %171, %195, %cst_96 {dimension_numbers = #tpu.dot_dimension_numbers<[1], [0], [0], [1], [0, 0, 1, 1], [], []>} : vector<8x3xf32>, vector<3x256xf32>, vector<8x256xf32> -> vector<8x256xf32>
    %197 = arith.addf %165, %196 : vector<8x256xf32>
    %198 = vector.broadcast %193 : vector<1x256xf32> to vector<3x256xf32>
    %199 = arith.mulf %15, %198 : vector<3x256xf32>
    %cst_97 = arith.constant dense<0.000000e+00> : vector<8x256xf32>
    %200 = tpu.matmul %171, %199, %cst_97 {dimension_numbers = #tpu.dot_dimension_numbers<[1], [0], [0], [1], [0, 0, 1, 1], [], []>} : vector<8x3xf32>, vector<3x256xf32>, vector<8x256xf32> -> vector<8x256xf32>
    %201 = arith.addf %170, %200 : vector<8x256xf32>
    %c40 = arith.constant 40 : index
    %c0_98 = arith.constant 0 : index
    %202 = vector.load %arg7[%c40, %c0_98] : memref<80x3xf32, #tpu.memory_space<vmem>>, vector<8x3xf32>
    %cst_99 = arith.constant 0.000000e+00 : f32
    %203 = vector.broadcast %cst_99 : f32 to vector<1x256xf32>
    %204 = arith.addf %28, %203 : vector<1x256xf32>
    %cst_100 = arith.constant 0.000000e+00 : f32
    %205 = vector.broadcast %cst_100 : f32 to vector<1x256xf32>
    %206 = arith.cmpf oge, %204, %205 : vector<1x256xf32>
    %cst_101 = arith.constant 0.000000e+00 : f32
    %207 = vector.broadcast %cst_101 : f32 to vector<1x256xf32>
    %208 = arith.addf %28, %207 : vector<1x256xf32>
    %cst_102 = arith.constant 1.500000e+01 : f32
    %209 = vector.broadcast %cst_102 : f32 to vector<1x256xf32>
    %210 = arith.cmpf ole, %208, %209 : vector<1x256xf32>
    %211 = arith.andi %206, %210 : vector<1x256xi1>
    %cst_103 = arith.constant 1.000000e+00 : f32
    %212 = vector.broadcast %cst_103 : f32 to vector<1x256xf32>
    %213 = arith.addf %31, %212 : vector<1x256xf32>
    %cst_104 = arith.constant 0.000000e+00 : f32
    %214 = vector.broadcast %cst_104 : f32 to vector<1x256xf32>
    %215 = arith.cmpf oge, %213, %214 : vector<1x256xf32>
    %cst_105 = arith.constant 1.000000e+00 : f32
    %216 = vector.broadcast %cst_105 : f32 to vector<1x256xf32>
    %217 = arith.addf %31, %216 : vector<1x256xf32>
    %cst_106 = arith.constant 1.500000e+01 : f32
    %218 = vector.broadcast %cst_106 : f32 to vector<1x256xf32>
    %219 = arith.cmpf ole, %217, %218 : vector<1x256xf32>
    %220 = arith.andi %215, %219 : vector<1x256xi1>
    %221 = arith.andi %211, %220 : vector<1x256xi1>
    %cst_107 = arith.constant 1.000000e+00 : f32
    %cst_108 = arith.constant 0.000000e+00 : f32
    %222 = vector.broadcast %cst_107 : f32 to vector<1x256xf32>
    %223 = vector.broadcast %cst_108 : f32 to vector<1x256xf32>
    %224 = arith.select %221, %222, %223 : vector<1x256xi1>, vector<1x256xf32>
    %c255_i32 = arith.constant 255 : i32
    %225 = tpu.dynamic_rotate %9 by %c255_i32 dim 1 : vector<3x256xf32>, i32 -> vector<3x256xf32>
    %226 = vector.broadcast %224 : vector<1x256xf32> to vector<3x256xf32>
    %227 = arith.mulf %225, %226 : vector<3x256xf32>
    %cst_109 = arith.constant dense<0.000000e+00> : vector<8x256xf32>
    %228 = tpu.matmul %202, %227, %cst_109 {dimension_numbers = #tpu.dot_dimension_numbers<[1], [0], [0], [1], [0, 0, 1, 1], [], []>} : vector<8x3xf32>, vector<3x256xf32>, vector<8x256xf32> -> vector<8x256xf32>
    %229 = arith.addf %197, %228 : vector<8x256xf32>
    %c255_i32_110 = arith.constant 255 : i32
    %230 = tpu.dynamic_rotate %15 by %c255_i32_110 dim 1 : vector<3x256xf32>, i32 -> vector<3x256xf32>
    %231 = vector.broadcast %224 : vector<1x256xf32> to vector<3x256xf32>
    %232 = arith.mulf %230, %231 : vector<3x256xf32>
    %cst_111 = arith.constant dense<0.000000e+00> : vector<8x256xf32>
    %233 = tpu.matmul %202, %232, %cst_111 {dimension_numbers = #tpu.dot_dimension_numbers<[1], [0], [0], [1], [0, 0, 1, 1], [], []>} : vector<8x3xf32>, vector<3x256xf32>, vector<8x256xf32> -> vector<8x256xf32>
    %234 = arith.addf %201, %233 : vector<8x256xf32>
    %c48 = arith.constant 48 : index
    %c0_112 = arith.constant 0 : index
    %235 = vector.load %arg7[%c48, %c0_112] : memref<80x3xf32, #tpu.memory_space<vmem>>, vector<8x3xf32>
    %cst_113 = arith.constant 1.000000e+00 : f32
    %236 = vector.broadcast %cst_113 : f32 to vector<1x256xf32>
    %237 = arith.addf %28, %236 : vector<1x256xf32>
    %cst_114 = arith.constant 0.000000e+00 : f32
    %238 = vector.broadcast %cst_114 : f32 to vector<1x256xf32>
    %239 = arith.cmpf oge, %237, %238 : vector<1x256xf32>
    %cst_115 = arith.constant 1.000000e+00 : f32
    %240 = vector.broadcast %cst_115 : f32 to vector<1x256xf32>
    %241 = arith.addf %28, %240 : vector<1x256xf32>
    %cst_116 = arith.constant 1.500000e+01 : f32
    %242 = vector.broadcast %cst_116 : f32 to vector<1x256xf32>
    %243 = arith.cmpf ole, %241, %242 : vector<1x256xf32>
    %244 = arith.andi %239, %243 : vector<1x256xi1>
    %cst_117 = arith.constant -1.000000e+00 : f32
    %245 = vector.broadcast %cst_117 : f32 to vector<1x256xf32>
    %246 = arith.addf %31, %245 : vector<1x256xf32>
    %cst_118 = arith.constant 0.000000e+00 : f32
    %247 = vector.broadcast %cst_118 : f32 to vector<1x256xf32>
    %248 = arith.cmpf oge, %246, %247 : vector<1x256xf32>
    %cst_119 = arith.constant -1.000000e+00 : f32
    %249 = vector.broadcast %cst_119 : f32 to vector<1x256xf32>
    %250 = arith.addf %31, %249 : vector<1x256xf32>
    %cst_120 = arith.constant 1.500000e+01 : f32
    %251 = vector.broadcast %cst_120 : f32 to vector<1x256xf32>
    %252 = arith.cmpf ole, %250, %251 : vector<1x256xf32>
    %253 = arith.andi %248, %252 : vector<1x256xi1>
    %254 = arith.andi %244, %253 : vector<1x256xi1>
    %cst_121 = arith.constant 1.000000e+00 : f32
    %cst_122 = arith.constant 0.000000e+00 : f32
    %255 = vector.broadcast %cst_121 : f32 to vector<1x256xf32>
    %256 = vector.broadcast %cst_122 : f32 to vector<1x256xf32>
    %257 = arith.select %254, %255, %256 : vector<1x256xi1>, vector<1x256xf32>
    %c241_i32 = arith.constant 241 : i32
    %258 = tpu.dynamic_rotate %9 by %c241_i32 dim 1 : vector<3x256xf32>, i32 -> vector<3x256xf32>
    %259 = vector.broadcast %257 : vector<1x256xf32> to vector<3x256xf32>
    %260 = arith.mulf %258, %259 : vector<3x256xf32>
    %cst_123 = arith.constant dense<0.000000e+00> : vector<8x256xf32>
    %261 = tpu.matmul %235, %260, %cst_123 {dimension_numbers = #tpu.dot_dimension_numbers<[1], [0], [0], [1], [0, 0, 1, 1], [], []>} : vector<8x3xf32>, vector<3x256xf32>, vector<8x256xf32> -> vector<8x256xf32>
    %262 = arith.addf %229, %261 : vector<8x256xf32>
    %c241_i32_124 = arith.constant 241 : i32
    %263 = tpu.dynamic_rotate %15 by %c241_i32_124 dim 1 : vector<3x256xf32>, i32 -> vector<3x256xf32>
    %264 = vector.broadcast %257 : vector<1x256xf32> to vector<3x256xf32>
    %265 = arith.mulf %263, %264 : vector<3x256xf32>
    %cst_125 = arith.constant dense<0.000000e+00> : vector<8x256xf32>
    %266 = tpu.matmul %235, %265, %cst_125 {dimension_numbers = #tpu.dot_dimension_numbers<[1], [0], [0], [1], [0, 0, 1, 1], [], []>} : vector<8x3xf32>, vector<3x256xf32>, vector<8x256xf32> -> vector<8x256xf32>
    %267 = arith.addf %234, %266 : vector<8x256xf32>
    %c56 = arith.constant 56 : index
    %c0_126 = arith.constant 0 : index
    %268 = vector.load %arg7[%c56, %c0_126] : memref<80x3xf32, #tpu.memory_space<vmem>>, vector<8x3xf32>
    %cst_127 = arith.constant 1.000000e+00 : f32
    %269 = vector.broadcast %cst_127 : f32 to vector<1x256xf32>
    %270 = arith.addf %28, %269 : vector<1x256xf32>
    %cst_128 = arith.constant 0.000000e+00 : f32
    %271 = vector.broadcast %cst_128 : f32 to vector<1x256xf32>
    %272 = arith.cmpf oge, %270, %271 : vector<1x256xf32>
    %cst_129 = arith.constant 1.000000e+00 : f32
    %273 = vector.broadcast %cst_129 : f32 to vector<1x256xf32>
    %274 = arith.addf %28, %273 : vector<1x256xf32>
    %cst_130 = arith.constant 1.500000e+01 : f32
    %275 = vector.broadcast %cst_130 : f32 to vector<1x256xf32>
    %276 = arith.cmpf ole, %274, %275 : vector<1x256xf32>
    %277 = arith.andi %272, %276 : vector<1x256xi1>
    %cst_131 = arith.constant 0.000000e+00 : f32
    %278 = vector.broadcast %cst_131 : f32 to vector<1x256xf32>
    %279 = arith.addf %31, %278 : vector<1x256xf32>
    %cst_132 = arith.constant 0.000000e+00 : f32
    %280 = vector.broadcast %cst_132 : f32 to vector<1x256xf32>
    %281 = arith.cmpf oge, %279, %280 : vector<1x256xf32>
    %cst_133 = arith.constant 0.000000e+00 : f32
    %282 = vector.broadcast %cst_133 : f32 to vector<1x256xf32>
    %283 = arith.addf %31, %282 : vector<1x256xf32>
    %cst_134 = arith.constant 1.500000e+01 : f32
    %284 = vector.broadcast %cst_134 : f32 to vector<1x256xf32>
    %285 = arith.cmpf ole, %283, %284 : vector<1x256xf32>
    %286 = arith.andi %281, %285 : vector<1x256xi1>
    %287 = arith.andi %277, %286 : vector<1x256xi1>
    %cst_135 = arith.constant 1.000000e+00 : f32
    %cst_136 = arith.constant 0.000000e+00 : f32
    %288 = vector.broadcast %cst_135 : f32 to vector<1x256xf32>
    %289 = vector.broadcast %cst_136 : f32 to vector<1x256xf32>
    %290 = arith.select %287, %288, %289 : vector<1x256xi1>, vector<1x256xf32>
    %c240_i32 = arith.constant 240 : i32
    %291 = tpu.dynamic_rotate %9 by %c240_i32 dim 1 : vector<3x256xf32>, i32 -> vector<3x256xf32>
    %292 = vector.broadcast %290 : vector<1x256xf32> to vector<3x256xf32>
    %293 = arith.mulf %291, %292 : vector<3x256xf32>
    %cst_137 = arith.constant dense<0.000000e+00> : vector<8x256xf32>
    %294 = tpu.matmul %268, %293, %cst_137 {dimension_numbers = #tpu.dot_dimension_numbers<[1], [0], [0], [1], [0, 0, 1, 1], [], []>} : vector<8x3xf32>, vector<3x256xf32>, vector<8x256xf32> -> vector<8x256xf32>
    %295 = arith.addf %262, %294 : vector<8x256xf32>
    %c240_i32_138 = arith.constant 240 : i32
    %296 = tpu.dynamic_rotate %15 by %c240_i32_138 dim 1 : vector<3x256xf32>, i32 -> vector<3x256xf32>
    %297 = vector.broadcast %290 : vector<1x256xf32> to vector<3x256xf32>
    %298 = arith.mulf %296, %297 : vector<3x256xf32>
    %cst_139 = arith.constant dense<0.000000e+00> : vector<8x256xf32>
    %299 = tpu.matmul %268, %298, %cst_139 {dimension_numbers = #tpu.dot_dimension_numbers<[1], [0], [0], [1], [0, 0, 1, 1], [], []>} : vector<8x3xf32>, vector<3x256xf32>, vector<8x256xf32> -> vector<8x256xf32>
    %300 = arith.addf %267, %299 : vector<8x256xf32>
    %c64 = arith.constant 64 : index
    %c0_140 = arith.constant 0 : index
    %301 = vector.load %arg7[%c64, %c0_140] : memref<80x3xf32, #tpu.memory_space<vmem>>, vector<8x3xf32>
    %cst_141 = arith.constant 1.000000e+00 : f32
    %302 = vector.broadcast %cst_141 : f32 to vector<1x256xf32>
    %303 = arith.addf %28, %302 : vector<1x256xf32>
    %cst_142 = arith.constant 0.000000e+00 : f32
    %304 = vector.broadcast %cst_142 : f32 to vector<1x256xf32>
    %305 = arith.cmpf oge, %303, %304 : vector<1x256xf32>
    %cst_143 = arith.constant 1.000000e+00 : f32
    %306 = vector.broadcast %cst_143 : f32 to vector<1x256xf32>
    %307 = arith.addf %28, %306 : vector<1x256xf32>
    %cst_144 = arith.constant 1.500000e+01 : f32
    %308 = vector.broadcast %cst_144 : f32 to vector<1x256xf32>
    %309 = arith.cmpf ole, %307, %308 : vector<1x256xf32>
    %310 = arith.andi %305, %309 : vector<1x256xi1>
    %cst_145 = arith.constant 1.000000e+00 : f32
    %311 = vector.broadcast %cst_145 : f32 to vector<1x256xf32>
    %312 = arith.addf %31, %311 : vector<1x256xf32>
    %cst_146 = arith.constant 0.000000e+00 : f32
    %313 = vector.broadcast %cst_146 : f32 to vector<1x256xf32>
    %314 = arith.cmpf oge, %312, %313 : vector<1x256xf32>
    %cst_147 = arith.constant 1.000000e+00 : f32
    %315 = vector.broadcast %cst_147 : f32 to vector<1x256xf32>
    %316 = arith.addf %31, %315 : vector<1x256xf32>
    %cst_148 = arith.constant 1.500000e+01 : f32
    %317 = vector.broadcast %cst_148 : f32 to vector<1x256xf32>
    %318 = arith.cmpf ole, %316, %317 : vector<1x256xf32>
    %319 = arith.andi %314, %318 : vector<1x256xi1>
    %320 = arith.andi %310, %319 : vector<1x256xi1>
    %cst_149 = arith.constant 1.000000e+00 : f32
    %cst_150 = arith.constant 0.000000e+00 : f32
    %321 = vector.broadcast %cst_149 : f32 to vector<1x256xf32>
    %322 = vector.broadcast %cst_150 : f32 to vector<1x256xf32>
    %323 = arith.select %320, %321, %322 : vector<1x256xi1>, vector<1x256xf32>
    %c239_i32 = arith.constant 239 : i32
    %324 = tpu.dynamic_rotate %9 by %c239_i32 dim 1 : vector<3x256xf32>, i32 -> vector<3x256xf32>
    %325 = vector.broadcast %323 : vector<1x256xf32> to vector<3x256xf32>
    %326 = arith.mulf %324, %325 : vector<3x256xf32>
    %cst_151 = arith.constant dense<0.000000e+00> : vector<8x256xf32>
    %327 = tpu.matmul %301, %326, %cst_151 {dimension_numbers = #tpu.dot_dimension_numbers<[1], [0], [0], [1], [0, 0, 1, 1], [], []>} : vector<8x3xf32>, vector<3x256xf32>, vector<8x256xf32> -> vector<8x256xf32>
    %328 = arith.addf %295, %327 : vector<8x256xf32>
    %c239_i32_152 = arith.constant 239 : i32
    %329 = tpu.dynamic_rotate %15 by %c239_i32_152 dim 1 : vector<3x256xf32>, i32 -> vector<3x256xf32>
    %330 = vector.broadcast %323 : vector<1x256xf32> to vector<3x256xf32>
    %331 = arith.mulf %329, %330 : vector<3x256xf32>
    %cst_153 = arith.constant dense<0.000000e+00> : vector<8x256xf32>
    %332 = tpu.matmul %301, %331, %cst_153 {dimension_numbers = #tpu.dot_dimension_numbers<[1], [0], [0], [1], [0, 0, 1, 1], [], []>} : vector<8x3xf32>, vector<3x256xf32>, vector<8x256xf32> -> vector<8x256xf32>
    %333 = arith.addf %300, %332 : vector<8x256xf32>
    %cst_154 = arith.constant 0.000000e+00 : f32
    %334 = vector.broadcast %cst_154 : f32 to vector<8x256xf32>
    %335 = arith.maximumf %328, %334 : vector<8x256xf32>
    %cst_155 = arith.constant 0.000000e+00 : f32
    %336 = vector.broadcast %cst_155 : f32 to vector<8x256xf32>
    %337 = arith.maximumf %333, %336 : vector<8x256xf32>
    %338 = tpu.iota {dimensions = array<i32: 1>} : vector<1x256xi32>
    %339 = arith.sitofp %338 : vector<1x256xi32> to vector<1x256xf32>
    %cst_156 = arith.constant 5.000000e-01 : f32
    %340 = vector.broadcast %cst_156 : f32 to vector<1x256xf32>
    %341 = arith.addf %339, %340 : vector<1x256xf32>
    %cst_157 = arith.constant 6.250000e-02 : f32
    %342 = vector.broadcast %cst_157 : f32 to vector<1x256xf32>
    %343 = arith.mulf %341, %342 : vector<1x256xf32>
    %344 = math.floor %343 : vector<1x256xf32>
    %cst_158 = arith.constant 1.600000e+01 : f32
    %345 = vector.broadcast %cst_158 : f32 to vector<1x256xf32>
    %346 = arith.mulf %344, %345 : vector<1x256xf32>
    %347 = arith.subf %339, %346 : vector<1x256xf32>
    %c72_159 = arith.constant 72 : index
    %c0_160 = arith.constant 0 : index
    %348 = vector.load %arg7[%c72_159, %c0_160] : memref<80x3xf32, #tpu.memory_space<vmem>>, vector<8x1xf32>
    %cst_161 = arith.constant 0.000000e+00 : f32
    %349 = vector.broadcast %cst_161 : f32 to vector<8x256xf32>
    %350 = vector.broadcast %348 : vector<8x1xf32> to vector<8x256xf32>
    %351 = arith.addf %349, %350 : vector<8x256xf32>
    %c0_162 = arith.constant 0 : index
    %c0_163 = arith.constant 0 : index
    %352 = vector.load %arg7[%c0_162, %c0_163] : memref<80x3xf32, #tpu.memory_space<vmem>>, vector<8x3xf32>
    %cst_164 = arith.constant -1.000000e+00 : f32
    %353 = vector.broadcast %cst_164 : f32 to vector<1x256xf32>
    %354 = arith.addf %344, %353 : vector<1x256xf32>
    %cst_165 = arith.constant 0.000000e+00 : f32
    %355 = vector.broadcast %cst_165 : f32 to vector<1x256xf32>
    %356 = arith.cmpf oge, %354, %355 : vector<1x256xf32>
    %cst_166 = arith.constant -1.000000e+00 : f32
    %357 = vector.broadcast %cst_166 : f32 to vector<1x256xf32>
    %358 = arith.addf %344, %357 : vector<1x256xf32>
    %cst_167 = arith.constant 1.500000e+01 : f32
    %359 = vector.broadcast %cst_167 : f32 to vector<1x256xf32>
    %360 = arith.cmpf ole, %358, %359 : vector<1x256xf32>
    %361 = arith.andi %356, %360 : vector<1x256xi1>
    %cst_168 = arith.constant -1.000000e+00 : f32
    %362 = vector.broadcast %cst_168 : f32 to vector<1x256xf32>
    %363 = arith.addf %347, %362 : vector<1x256xf32>
    %cst_169 = arith.constant 0.000000e+00 : f32
    %364 = vector.broadcast %cst_169 : f32 to vector<1x256xf32>
    %365 = arith.cmpf oge, %363, %364 : vector<1x256xf32>
    %cst_170 = arith.constant -1.000000e+00 : f32
    %366 = vector.broadcast %cst_170 : f32 to vector<1x256xf32>
    %367 = arith.addf %347, %366 : vector<1x256xf32>
    %cst_171 = arith.constant 1.500000e+01 : f32
    %368 = vector.broadcast %cst_171 : f32 to vector<1x256xf32>
    %369 = arith.cmpf ole, %367, %368 : vector<1x256xf32>
    %370 = arith.andi %365, %369 : vector<1x256xi1>
    %371 = arith.andi %361, %370 : vector<1x256xi1>
    %cst_172 = arith.constant 1.000000e+00 : f32
    %cst_173 = arith.constant 0.000000e+00 : f32
    %372 = vector.broadcast %cst_172 : f32 to vector<1x256xf32>
    %373 = vector.broadcast %cst_173 : f32 to vector<1x256xf32>
    %374 = arith.select %371, %372, %373 : vector<1x256xi1>, vector<1x256xf32>
    %c17_i32_174 = arith.constant 17 : i32
    %375 = tpu.dynamic_rotate %21 by %c17_i32_174 dim 1 : vector<3x256xf32>, i32 -> vector<3x256xf32>
    %376 = vector.broadcast %374 : vector<1x256xf32> to vector<3x256xf32>
    %377 = arith.mulf %375, %376 : vector<3x256xf32>
    %cst_175 = arith.constant dense<0.000000e+00> : vector<8x256xf32>
    %378 = tpu.matmul %352, %377, %cst_175 {dimension_numbers = #tpu.dot_dimension_numbers<[1], [0], [0], [1], [0, 0, 1, 1], [], []>} : vector<8x3xf32>, vector<3x256xf32>, vector<8x256xf32> -> vector<8x256xf32>
    %379 = arith.addf %351, %378 : vector<8x256xf32>
    %c8_176 = arith.constant 8 : index
    %c0_177 = arith.constant 0 : index
    %380 = vector.load %arg7[%c8_176, %c0_177] : memref<80x3xf32, #tpu.memory_space<vmem>>, vector<8x3xf32>
    %cst_178 = arith.constant -1.000000e+00 : f32
    %381 = vector.broadcast %cst_178 : f32 to vector<1x256xf32>
    %382 = arith.addf %344, %381 : vector<1x256xf32>
    %cst_179 = arith.constant 0.000000e+00 : f32
    %383 = vector.broadcast %cst_179 : f32 to vector<1x256xf32>
    %384 = arith.cmpf oge, %382, %383 : vector<1x256xf32>
    %cst_180 = arith.constant -1.000000e+00 : f32
    %385 = vector.broadcast %cst_180 : f32 to vector<1x256xf32>
    %386 = arith.addf %344, %385 : vector<1x256xf32>
    %cst_181 = arith.constant 1.500000e+01 : f32
    %387 = vector.broadcast %cst_181 : f32 to vector<1x256xf32>
    %388 = arith.cmpf ole, %386, %387 : vector<1x256xf32>
    %389 = arith.andi %384, %388 : vector<1x256xi1>
    %cst_182 = arith.constant 0.000000e+00 : f32
    %390 = vector.broadcast %cst_182 : f32 to vector<1x256xf32>
    %391 = arith.addf %347, %390 : vector<1x256xf32>
    %cst_183 = arith.constant 0.000000e+00 : f32
    %392 = vector.broadcast %cst_183 : f32 to vector<1x256xf32>
    %393 = arith.cmpf oge, %391, %392 : vector<1x256xf32>
    %cst_184 = arith.constant 0.000000e+00 : f32
    %394 = vector.broadcast %cst_184 : f32 to vector<1x256xf32>
    %395 = arith.addf %347, %394 : vector<1x256xf32>
    %cst_185 = arith.constant 1.500000e+01 : f32
    %396 = vector.broadcast %cst_185 : f32 to vector<1x256xf32>
    %397 = arith.cmpf ole, %395, %396 : vector<1x256xf32>
    %398 = arith.andi %393, %397 : vector<1x256xi1>
    %399 = arith.andi %389, %398 : vector<1x256xi1>
    %cst_186 = arith.constant 1.000000e+00 : f32
    %cst_187 = arith.constant 0.000000e+00 : f32
    %400 = vector.broadcast %cst_186 : f32 to vector<1x256xf32>
    %401 = vector.broadcast %cst_187 : f32 to vector<1x256xf32>
    %402 = arith.select %399, %400, %401 : vector<1x256xi1>, vector<1x256xf32>
    %c16_i32_188 = arith.constant 16 : i32
    %403 = tpu.dynamic_rotate %21 by %c16_i32_188 dim 1 : vector<3x256xf32>, i32 -> vector<3x256xf32>
    %404 = vector.broadcast %402 : vector<1x256xf32> to vector<3x256xf32>
    %405 = arith.mulf %403, %404 : vector<3x256xf32>
    %cst_189 = arith.constant dense<0.000000e+00> : vector<8x256xf32>
    %406 = tpu.matmul %380, %405, %cst_189 {dimension_numbers = #tpu.dot_dimension_numbers<[1], [0], [0], [1], [0, 0, 1, 1], [], []>} : vector<8x3xf32>, vector<3x256xf32>, vector<8x256xf32> -> vector<8x256xf32>
    %407 = arith.addf %379, %406 : vector<8x256xf32>
    %c16_190 = arith.constant 16 : index
    %c0_191 = arith.constant 0 : index
    %408 = vector.load %arg7[%c16_190, %c0_191] : memref<80x3xf32, #tpu.memory_space<vmem>>, vector<8x3xf32>
    %cst_192 = arith.constant -1.000000e+00 : f32
    %409 = vector.broadcast %cst_192 : f32 to vector<1x256xf32>
    %410 = arith.addf %344, %409 : vector<1x256xf32>
    %cst_193 = arith.constant 0.000000e+00 : f32
    %411 = vector.broadcast %cst_193 : f32 to vector<1x256xf32>
    %412 = arith.cmpf oge, %410, %411 : vector<1x256xf32>
    %cst_194 = arith.constant -1.000000e+00 : f32
    %413 = vector.broadcast %cst_194 : f32 to vector<1x256xf32>
    %414 = arith.addf %344, %413 : vector<1x256xf32>
    %cst_195 = arith.constant 1.500000e+01 : f32
    %415 = vector.broadcast %cst_195 : f32 to vector<1x256xf32>
    %416 = arith.cmpf ole, %414, %415 : vector<1x256xf32>
    %417 = arith.andi %412, %416 : vector<1x256xi1>
    %cst_196 = arith.constant 1.000000e+00 : f32
    %418 = vector.broadcast %cst_196 : f32 to vector<1x256xf32>
    %419 = arith.addf %347, %418 : vector<1x256xf32>
    %cst_197 = arith.constant 0.000000e+00 : f32
    %420 = vector.broadcast %cst_197 : f32 to vector<1x256xf32>
    %421 = arith.cmpf oge, %419, %420 : vector<1x256xf32>
    %cst_198 = arith.constant 1.000000e+00 : f32
    %422 = vector.broadcast %cst_198 : f32 to vector<1x256xf32>
    %423 = arith.addf %347, %422 : vector<1x256xf32>
    %cst_199 = arith.constant 1.500000e+01 : f32
    %424 = vector.broadcast %cst_199 : f32 to vector<1x256xf32>
    %425 = arith.cmpf ole, %423, %424 : vector<1x256xf32>
    %426 = arith.andi %421, %425 : vector<1x256xi1>
    %427 = arith.andi %417, %426 : vector<1x256xi1>
    %cst_200 = arith.constant 1.000000e+00 : f32
    %cst_201 = arith.constant 0.000000e+00 : f32
    %428 = vector.broadcast %cst_200 : f32 to vector<1x256xf32>
    %429 = vector.broadcast %cst_201 : f32 to vector<1x256xf32>
    %430 = arith.select %427, %428, %429 : vector<1x256xi1>, vector<1x256xf32>
    %c15_i32_202 = arith.constant 15 : i32
    %431 = tpu.dynamic_rotate %21 by %c15_i32_202 dim 1 : vector<3x256xf32>, i32 -> vector<3x256xf32>
    %432 = vector.broadcast %430 : vector<1x256xf32> to vector<3x256xf32>
    %433 = arith.mulf %431, %432 : vector<3x256xf32>
    %cst_203 = arith.constant dense<0.000000e+00> : vector<8x256xf32>
    %434 = tpu.matmul %408, %433, %cst_203 {dimension_numbers = #tpu.dot_dimension_numbers<[1], [0], [0], [1], [0, 0, 1, 1], [], []>} : vector<8x3xf32>, vector<3x256xf32>, vector<8x256xf32> -> vector<8x256xf32>
    %435 = arith.addf %407, %434 : vector<8x256xf32>
    %c24_204 = arith.constant 24 : index
    %c0_205 = arith.constant 0 : index
    %436 = vector.load %arg7[%c24_204, %c0_205] : memref<80x3xf32, #tpu.memory_space<vmem>>, vector<8x3xf32>
    %cst_206 = arith.constant 0.000000e+00 : f32
    %437 = vector.broadcast %cst_206 : f32 to vector<1x256xf32>
    %438 = arith.addf %344, %437 : vector<1x256xf32>
    %cst_207 = arith.constant 0.000000e+00 : f32
    %439 = vector.broadcast %cst_207 : f32 to vector<1x256xf32>
    %440 = arith.cmpf oge, %438, %439 : vector<1x256xf32>
    %cst_208 = arith.constant 0.000000e+00 : f32
    %441 = vector.broadcast %cst_208 : f32 to vector<1x256xf32>
    %442 = arith.addf %344, %441 : vector<1x256xf32>
    %cst_209 = arith.constant 1.500000e+01 : f32
    %443 = vector.broadcast %cst_209 : f32 to vector<1x256xf32>
    %444 = arith.cmpf ole, %442, %443 : vector<1x256xf32>
    %445 = arith.andi %440, %444 : vector<1x256xi1>
    %cst_210 = arith.constant -1.000000e+00 : f32
    %446 = vector.broadcast %cst_210 : f32 to vector<1x256xf32>
    %447 = arith.addf %347, %446 : vector<1x256xf32>
    %cst_211 = arith.constant 0.000000e+00 : f32
    %448 = vector.broadcast %cst_211 : f32 to vector<1x256xf32>
    %449 = arith.cmpf oge, %447, %448 : vector<1x256xf32>
    %cst_212 = arith.constant -1.000000e+00 : f32
    %450 = vector.broadcast %cst_212 : f32 to vector<1x256xf32>
    %451 = arith.addf %347, %450 : vector<1x256xf32>
    %cst_213 = arith.constant 1.500000e+01 : f32
    %452 = vector.broadcast %cst_213 : f32 to vector<1x256xf32>
    %453 = arith.cmpf ole, %451, %452 : vector<1x256xf32>
    %454 = arith.andi %449, %453 : vector<1x256xi1>
    %455 = arith.andi %445, %454 : vector<1x256xi1>
    %cst_214 = arith.constant 1.000000e+00 : f32
    %cst_215 = arith.constant 0.000000e+00 : f32
    %456 = vector.broadcast %cst_214 : f32 to vector<1x256xf32>
    %457 = vector.broadcast %cst_215 : f32 to vector<1x256xf32>
    %458 = arith.select %455, %456, %457 : vector<1x256xi1>, vector<1x256xf32>
    %c1_i32_216 = arith.constant 1 : i32
    %459 = tpu.dynamic_rotate %21 by %c1_i32_216 dim 1 : vector<3x256xf32>, i32 -> vector<3x256xf32>
    %460 = vector.broadcast %458 : vector<1x256xf32> to vector<3x256xf32>
    %461 = arith.mulf %459, %460 : vector<3x256xf32>
    %cst_217 = arith.constant dense<0.000000e+00> : vector<8x256xf32>
    %462 = tpu.matmul %436, %461, %cst_217 {dimension_numbers = #tpu.dot_dimension_numbers<[1], [0], [0], [1], [0, 0, 1, 1], [], []>} : vector<8x3xf32>, vector<3x256xf32>, vector<8x256xf32> -> vector<8x256xf32>
    %463 = arith.addf %435, %462 : vector<8x256xf32>
    %c32_218 = arith.constant 32 : index
    %c0_219 = arith.constant 0 : index
    %464 = vector.load %arg7[%c32_218, %c0_219] : memref<80x3xf32, #tpu.memory_space<vmem>>, vector<8x3xf32>
    %cst_220 = arith.constant 0.000000e+00 : f32
    %465 = vector.broadcast %cst_220 : f32 to vector<1x256xf32>
    %466 = arith.addf %344, %465 : vector<1x256xf32>
    %cst_221 = arith.constant 0.000000e+00 : f32
    %467 = vector.broadcast %cst_221 : f32 to vector<1x256xf32>
    %468 = arith.cmpf oge, %466, %467 : vector<1x256xf32>
    %cst_222 = arith.constant 0.000000e+00 : f32
    %469 = vector.broadcast %cst_222 : f32 to vector<1x256xf32>
    %470 = arith.addf %344, %469 : vector<1x256xf32>
    %cst_223 = arith.constant 1.500000e+01 : f32
    %471 = vector.broadcast %cst_223 : f32 to vector<1x256xf32>
    %472 = arith.cmpf ole, %470, %471 : vector<1x256xf32>
    %473 = arith.andi %468, %472 : vector<1x256xi1>
    %cst_224 = arith.constant 0.000000e+00 : f32
    %474 = vector.broadcast %cst_224 : f32 to vector<1x256xf32>
    %475 = arith.addf %347, %474 : vector<1x256xf32>
    %cst_225 = arith.constant 0.000000e+00 : f32
    %476 = vector.broadcast %cst_225 : f32 to vector<1x256xf32>
    %477 = arith.cmpf oge, %475, %476 : vector<1x256xf32>
    %cst_226 = arith.constant 0.000000e+00 : f32
    %478 = vector.broadcast %cst_226 : f32 to vector<1x256xf32>
    %479 = arith.addf %347, %478 : vector<1x256xf32>
    %cst_227 = arith.constant 1.500000e+01 : f32
    %480 = vector.broadcast %cst_227 : f32 to vector<1x256xf32>
    %481 = arith.cmpf ole, %479, %480 : vector<1x256xf32>
    %482 = arith.andi %477, %481 : vector<1x256xi1>
    %483 = arith.andi %473, %482 : vector<1x256xi1>
    %cst_228 = arith.constant 1.000000e+00 : f32
    %cst_229 = arith.constant 0.000000e+00 : f32
    %484 = vector.broadcast %cst_228 : f32 to vector<1x256xf32>
    %485 = vector.broadcast %cst_229 : f32 to vector<1x256xf32>
    %486 = arith.select %483, %484, %485 : vector<1x256xi1>, vector<1x256xf32>
    %487 = vector.broadcast %486 : vector<1x256xf32> to vector<3x256xf32>
    %488 = arith.mulf %21, %487 : vector<3x256xf32>
    %cst_230 = arith.constant dense<0.000000e+00> : vector<8x256xf32>
    %489 = tpu.matmul %464, %488, %cst_230 {dimension_numbers = #tpu.dot_dimension_numbers<[1], [0], [0], [1], [0, 0, 1, 1], [], []>} : vector<8x3xf32>, vector<3x256xf32>, vector<8x256xf32> -> vector<8x256xf32>
    %490 = arith.addf %463, %489 : vector<8x256xf32>
    %c40_231 = arith.constant 40 : index
    %c0_232 = arith.constant 0 : index
    %491 = vector.load %arg7[%c40_231, %c0_232] : memref<80x3xf32, #tpu.memory_space<vmem>>, vector<8x3xf32>
    %cst_233 = arith.constant 0.000000e+00 : f32
    %492 = vector.broadcast %cst_233 : f32 to vector<1x256xf32>
    %493 = arith.addf %344, %492 : vector<1x256xf32>
    %cst_234 = arith.constant 0.000000e+00 : f32
    %494 = vector.broadcast %cst_234 : f32 to vector<1x256xf32>
    %495 = arith.cmpf oge, %493, %494 : vector<1x256xf32>
    %cst_235 = arith.constant 0.000000e+00 : f32
    %496 = vector.broadcast %cst_235 : f32 to vector<1x256xf32>
    %497 = arith.addf %344, %496 : vector<1x256xf32>
    %cst_236 = arith.constant 1.500000e+01 : f32
    %498 = vector.broadcast %cst_236 : f32 to vector<1x256xf32>
    %499 = arith.cmpf ole, %497, %498 : vector<1x256xf32>
    %500 = arith.andi %495, %499 : vector<1x256xi1>
    %cst_237 = arith.constant 1.000000e+00 : f32
    %501 = vector.broadcast %cst_237 : f32 to vector<1x256xf32>
    %502 = arith.addf %347, %501 : vector<1x256xf32>
    %cst_238 = arith.constant 0.000000e+00 : f32
    %503 = vector.broadcast %cst_238 : f32 to vector<1x256xf32>
    %504 = arith.cmpf oge, %502, %503 : vector<1x256xf32>
    %cst_239 = arith.constant 1.000000e+00 : f32
    %505 = vector.broadcast %cst_239 : f32 to vector<1x256xf32>
    %506 = arith.addf %347, %505 : vector<1x256xf32>
    %cst_240 = arith.constant 1.500000e+01 : f32
    %507 = vector.broadcast %cst_240 : f32 to vector<1x256xf32>
    %508 = arith.cmpf ole, %506, %507 : vector<1x256xf32>
    %509 = arith.andi %504, %508 : vector<1x256xi1>
    %510 = arith.andi %500, %509 : vector<1x256xi1>
    %cst_241 = arith.constant 1.000000e+00 : f32
    %cst_242 = arith.constant 0.000000e+00 : f32
    %511 = vector.broadcast %cst_241 : f32 to vector<1x256xf32>
    %512 = vector.broadcast %cst_242 : f32 to vector<1x256xf32>
    %513 = arith.select %510, %511, %512 : vector<1x256xi1>, vector<1x256xf32>
    %c255_i32_243 = arith.constant 255 : i32
    %514 = tpu.dynamic_rotate %21 by %c255_i32_243 dim 1 : vector<3x256xf32>, i32 -> vector<3x256xf32>
    %515 = vector.broadcast %513 : vector<1x256xf32> to vector<3x256xf32>
    %516 = arith.mulf %514, %515 : vector<3x256xf32>
    %cst_244 = arith.constant dense<0.000000e+00> : vector<8x256xf32>
    %517 = tpu.matmul %491, %516, %cst_244 {dimension_numbers = #tpu.dot_dimension_numbers<[1], [0], [0], [1], [0, 0, 1, 1], [], []>} : vector<8x3xf32>, vector<3x256xf32>, vector<8x256xf32> -> vector<8x256xf32>
    %518 = arith.addf %490, %517 : vector<8x256xf32>
    %c48_245 = arith.constant 48 : index
    %c0_246 = arith.constant 0 : index
    %519 = vector.load %arg7[%c48_245, %c0_246] : memref<80x3xf32, #tpu.memory_space<vmem>>, vector<8x3xf32>
    %cst_247 = arith.constant 1.000000e+00 : f32
    %520 = vector.broadcast %cst_247 : f32 to vector<1x256xf32>
    %521 = arith.addf %344, %520 : vector<1x256xf32>
    %cst_248 = arith.constant 0.000000e+00 : f32
    %522 = vector.broadcast %cst_248 : f32 to vector<1x256xf32>
    %523 = arith.cmpf oge, %521, %522 : vector<1x256xf32>
    %cst_249 = arith.constant 1.000000e+00 : f32
    %524 = vector.broadcast %cst_249 : f32 to vector<1x256xf32>
    %525 = arith.addf %344, %524 : vector<1x256xf32>
    %cst_250 = arith.constant 1.500000e+01 : f32
    %526 = vector.broadcast %cst_250 : f32 to vector<1x256xf32>
    %527 = arith.cmpf ole, %525, %526 : vector<1x256xf32>
    %528 = arith.andi %523, %527 : vector<1x256xi1>
    %cst_251 = arith.constant -1.000000e+00 : f32
    %529 = vector.broadcast %cst_251 : f32 to vector<1x256xf32>
    %530 = arith.addf %347, %529 : vector<1x256xf32>
    %cst_252 = arith.constant 0.000000e+00 : f32
    %531 = vector.broadcast %cst_252 : f32 to vector<1x256xf32>
    %532 = arith.cmpf oge, %530, %531 : vector<1x256xf32>
    %cst_253 = arith.constant -1.000000e+00 : f32
    %533 = vector.broadcast %cst_253 : f32 to vector<1x256xf32>
    %534 = arith.addf %347, %533 : vector<1x256xf32>
    %cst_254 = arith.constant 1.500000e+01 : f32
    %535 = vector.broadcast %cst_254 : f32 to vector<1x256xf32>
    %536 = arith.cmpf ole, %534, %535 : vector<1x256xf32>
    %537 = arith.andi %532, %536 : vector<1x256xi1>
    %538 = arith.andi %528, %537 : vector<1x256xi1>
    %cst_255 = arith.constant 1.000000e+00 : f32
    %cst_256 = arith.constant 0.000000e+00 : f32
    %539 = vector.broadcast %cst_255 : f32 to vector<1x256xf32>
    %540 = vector.broadcast %cst_256 : f32 to vector<1x256xf32>
    %541 = arith.select %538, %539, %540 : vector<1x256xi1>, vector<1x256xf32>
    %c241_i32_257 = arith.constant 241 : i32
    %542 = tpu.dynamic_rotate %21 by %c241_i32_257 dim 1 : vector<3x256xf32>, i32 -> vector<3x256xf32>
    %543 = vector.broadcast %541 : vector<1x256xf32> to vector<3x256xf32>
    %544 = arith.mulf %542, %543 : vector<3x256xf32>
    %cst_258 = arith.constant dense<0.000000e+00> : vector<8x256xf32>
    %545 = tpu.matmul %519, %544, %cst_258 {dimension_numbers = #tpu.dot_dimension_numbers<[1], [0], [0], [1], [0, 0, 1, 1], [], []>} : vector<8x3xf32>, vector<3x256xf32>, vector<8x256xf32> -> vector<8x256xf32>
    %546 = arith.addf %518, %545 : vector<8x256xf32>
    %c56_259 = arith.constant 56 : index
    %c0_260 = arith.constant 0 : index
    %547 = vector.load %arg7[%c56_259, %c0_260] : memref<80x3xf32, #tpu.memory_space<vmem>>, vector<8x3xf32>
    %cst_261 = arith.constant 1.000000e+00 : f32
    %548 = vector.broadcast %cst_261 : f32 to vector<1x256xf32>
    %549 = arith.addf %344, %548 : vector<1x256xf32>
    %cst_262 = arith.constant 0.000000e+00 : f32
    %550 = vector.broadcast %cst_262 : f32 to vector<1x256xf32>
    %551 = arith.cmpf oge, %549, %550 : vector<1x256xf32>
    %cst_263 = arith.constant 1.000000e+00 : f32
    %552 = vector.broadcast %cst_263 : f32 to vector<1x256xf32>
    %553 = arith.addf %344, %552 : vector<1x256xf32>
    %cst_264 = arith.constant 1.500000e+01 : f32
    %554 = vector.broadcast %cst_264 : f32 to vector<1x256xf32>
    %555 = arith.cmpf ole, %553, %554 : vector<1x256xf32>
    %556 = arith.andi %551, %555 : vector<1x256xi1>
    %cst_265 = arith.constant 0.000000e+00 : f32
    %557 = vector.broadcast %cst_265 : f32 to vector<1x256xf32>
    %558 = arith.addf %347, %557 : vector<1x256xf32>
    %cst_266 = arith.constant 0.000000e+00 : f32
    %559 = vector.broadcast %cst_266 : f32 to vector<1x256xf32>
    %560 = arith.cmpf oge, %558, %559 : vector<1x256xf32>
    %cst_267 = arith.constant 0.000000e+00 : f32
    %561 = vector.broadcast %cst_267 : f32 to vector<1x256xf32>
    %562 = arith.addf %347, %561 : vector<1x256xf32>
    %cst_268 = arith.constant 1.500000e+01 : f32
    %563 = vector.broadcast %cst_268 : f32 to vector<1x256xf32>
    %564 = arith.cmpf ole, %562, %563 : vector<1x256xf32>
    %565 = arith.andi %560, %564 : vector<1x256xi1>
    %566 = arith.andi %556, %565 : vector<1x256xi1>
    %cst_269 = arith.constant 1.000000e+00 : f32
    %cst_270 = arith.constant 0.000000e+00 : f32
    %567 = vector.broadcast %cst_269 : f32 to vector<1x256xf32>
    %568 = vector.broadcast %cst_270 : f32 to vector<1x256xf32>
    %569 = arith.select %566, %567, %568 : vector<1x256xi1>, vector<1x256xf32>
    %c240_i32_271 = arith.constant 240 : i32
    %570 = tpu.dynamic_rotate %21 by %c240_i32_271 dim 1 : vector<3x256xf32>, i32 -> vector<3x256xf32>
    %571 = vector.broadcast %569 : vector<1x256xf32> to vector<3x256xf32>
    %572 = arith.mulf %570, %571 : vector<3x256xf32>
    %cst_272 = arith.constant dense<0.000000e+00> : vector<8x256xf32>
    %573 = tpu.matmul %547, %572, %cst_272 {dimension_numbers = #tpu.dot_dimension_numbers<[1], [0], [0], [1], [0, 0, 1, 1], [], []>} : vector<8x3xf32>, vector<3x256xf32>, vector<8x256xf32> -> vector<8x256xf32>
    %574 = arith.addf %546, %573 : vector<8x256xf32>
    %c64_273 = arith.constant 64 : index
    %c0_274 = arith.constant 0 : index
    %575 = vector.load %arg7[%c64_273, %c0_274] : memref<80x3xf32, #tpu.memory_space<vmem>>, vector<8x3xf32>
    %cst_275 = arith.constant 1.000000e+00 : f32
    %576 = vector.broadcast %cst_275 : f32 to vector<1x256xf32>
    %577 = arith.addf %344, %576 : vector<1x256xf32>
    %cst_276 = arith.constant 0.000000e+00 : f32
    %578 = vector.broadcast %cst_276 : f32 to vector<1x256xf32>
    %579 = arith.cmpf oge, %577, %578 : vector<1x256xf32>
    %cst_277 = arith.constant 1.000000e+00 : f32
    %580 = vector.broadcast %cst_277 : f32 to vector<1x256xf32>
    %581 = arith.addf %344, %580 : vector<1x256xf32>
    %cst_278 = arith.constant 1.500000e+01 : f32
    %582 = vector.broadcast %cst_278 : f32 to vector<1x256xf32>
    %583 = arith.cmpf ole, %581, %582 : vector<1x256xf32>
    %584 = arith.andi %579, %583 : vector<1x256xi1>
    %cst_279 = arith.constant 1.000000e+00 : f32
    %585 = vector.broadcast %cst_279 : f32 to vector<1x256xf32>
    %586 = arith.addf %347, %585 : vector<1x256xf32>
    %cst_280 = arith.constant 0.000000e+00 : f32
    %587 = vector.broadcast %cst_280 : f32 to vector<1x256xf32>
    %588 = arith.cmpf oge, %586, %587 : vector<1x256xf32>
    %cst_281 = arith.constant 1.000000e+00 : f32
    %589 = vector.broadcast %cst_281 : f32 to vector<1x256xf32>
    %590 = arith.addf %347, %589 : vector<1x256xf32>
    %cst_282 = arith.constant 1.500000e+01 : f32
    %591 = vector.broadcast %cst_282 : f32 to vector<1x256xf32>
    %592 = arith.cmpf ole, %590, %591 : vector<1x256xf32>
    %593 = arith.andi %588, %592 : vector<1x256xi1>
    %594 = arith.andi %584, %593 : vector<1x256xi1>
    %cst_283 = arith.constant 1.000000e+00 : f32
    %cst_284 = arith.constant 0.000000e+00 : f32
    %595 = vector.broadcast %cst_283 : f32 to vector<1x256xf32>
    %596 = vector.broadcast %cst_284 : f32 to vector<1x256xf32>
    %597 = arith.select %594, %595, %596 : vector<1x256xi1>, vector<1x256xf32>
    %c239_i32_285 = arith.constant 239 : i32
    %598 = tpu.dynamic_rotate %21 by %c239_i32_285 dim 1 : vector<3x256xf32>, i32 -> vector<3x256xf32>
    %599 = vector.broadcast %597 : vector<1x256xf32> to vector<3x256xf32>
    %600 = arith.mulf %598, %599 : vector<3x256xf32>
    %cst_286 = arith.constant dense<0.000000e+00> : vector<8x256xf32>
    %601 = tpu.matmul %575, %600, %cst_286 {dimension_numbers = #tpu.dot_dimension_numbers<[1], [0], [0], [1], [0, 0, 1, 1], [], []>} : vector<8x3xf32>, vector<3x256xf32>, vector<8x256xf32> -> vector<8x256xf32>
    %602 = arith.addf %574, %601 : vector<8x256xf32>
    %cst_287 = arith.constant 0.000000e+00 : f32
    %603 = vector.broadcast %cst_287 : f32 to vector<8x256xf32>
    %604 = arith.maximumf %602, %603 : vector<8x256xf32>
    %605 = math.absf %335 : vector<8x256xf32>
    %606 = math.absf %337 : vector<8x256xf32>
    %607 = arith.cmpf oge, %605, %606 : vector<8x256xf32>
    %608 = arith.select %607, %335, %337 : vector<8x256xi1>, vector<8x256xf32>
    %609 = tpu.iota {dimensions = array<i32: 1>} : vector<1x256xi32>
    %610 = arith.sitofp %609 : vector<1x256xi32> to vector<1x256xf32>
    %cst_288 = arith.constant 5.000000e-01 : f32
    %611 = vector.broadcast %cst_288 : f32 to vector<1x256xf32>
    %612 = arith.addf %610, %611 : vector<1x256xf32>
    %cst_289 = arith.constant 6.250000e-02 : f32
    %613 = vector.broadcast %cst_289 : f32 to vector<1x256xf32>
    %614 = arith.mulf %612, %613 : vector<1x256xf32>
    %615 = math.floor %614 : vector<1x256xf32>
    %cst_290 = arith.constant 1.600000e+01 : f32
    %616 = vector.broadcast %cst_290 : f32 to vector<1x256xf32>
    %617 = arith.mulf %615, %616 : vector<1x256xf32>
    %618 = arith.subf %610, %617 : vector<1x256xf32>
    %cst_291 = arith.constant 5.000000e-01 : f32
    %619 = vector.broadcast %cst_291 : f32 to vector<1x256xf32>
    %620 = arith.addf %618, %619 : vector<1x256xf32>
    %cst_292 = arith.constant 6.250000e-02 : f32
    %621 = vector.broadcast %cst_292 : f32 to vector<1x256xf32>
    %622 = arith.mulf %620, %621 : vector<1x256xf32>
    %cst_293 = arith.constant 5.000000e-01 : f32
    %623 = vector.broadcast %cst_293 : f32 to vector<1x256xf32>
    %624 = arith.addf %615, %623 : vector<1x256xf32>
    %cst_294 = arith.constant 6.250000e-02 : f32
    %625 = vector.broadcast %cst_294 : f32 to vector<1x256xf32>
    %626 = arith.mulf %624, %625 : vector<1x256xf32>
    %c0_295 = arith.constant 0 : index
    %c0_296 = arith.constant 0 : index
    %627 = vector.load %arg8[%c0_295, %c0_296] : memref<32x8xf32, #tpu.memory_space<vmem>>, vector<1x8xf32>
    %c16_297 = arith.constant 16 : index
    %c0_298 = arith.constant 0 : index
    %628 = vector.load %arg8[%c16_297, %c0_298] : memref<32x8xf32, #tpu.memory_space<vmem>>, vector<1x1xf32>
    %cst_299 = arith.constant dense<0.000000e+00> : vector<1x256xf32>
    %629 = tpu.matmul %627, %608, %cst_299 {dimension_numbers = #tpu.dot_dimension_numbers<[1], [0], [0], [1], [0, 0, 1, 1], [], []>} : vector<1x8xf32>, vector<8x256xf32>, vector<1x256xf32> -> vector<1x256xf32>
    %630 = vector.broadcast %628 : vector<1x1xf32> to vector<1x256xf32>
    %631 = arith.addf %629, %630 : vector<1x256xf32>
    %cst_300 = arith.constant dense<0xFF800000> : vector<1xf32>
    %632 = vector.multi_reduction <maximumf>, %631, %cst_300 [1] : vector<1x256xf32> to vector<1xf32>
    %633 = vector.shape_cast %632 : vector<1xf32> to vector<1x1xf32>
    %634 = vector.broadcast %633 : vector<1x1xf32> to vector<1x256xf32>
    %635 = arith.subf %631, %634 : vector<1x256xf32>
    %636 = math.exp %635 : vector<1x256xf32>
    %cst_301 = arith.constant dense<0.000000e+00> : vector<1xf32>
    %637 = vector.multi_reduction <add>, %636, %cst_301 [1] : vector<1x256xf32> to vector<1xf32>
    %638 = vector.shape_cast %637 : vector<1xf32> to vector<1x1xf32>
    %639 = tpu.reciprocal %638 {approx = true} : vector<1x1xf32> -> vector<1x1xf32>
    %640 = vector.broadcast %639 : vector<1x1xf32> to vector<1x256xf32>
    %641 = arith.mulf %636, %640 : vector<1x256xf32>
    %642 = arith.mulf %641, %622 : vector<1x256xf32>
    %cst_302 = arith.constant dense<0.000000e+00> : vector<1xf32>
    %643 = vector.multi_reduction <add>, %642, %cst_302 [1] : vector<1x256xf32> to vector<1xf32>
    %644 = vector.shape_cast %643 : vector<1xf32> to vector<1x1xf32>
    %645 = arith.mulf %641, %626 : vector<1x256xf32>
    %cst_303 = arith.constant dense<0.000000e+00> : vector<1xf32>
    %646 = vector.multi_reduction <add>, %645, %cst_303 [1] : vector<1x256xf32> to vector<1xf32>
    %647 = vector.shape_cast %646 : vector<1xf32> to vector<1x1xf32>
    %c8_304 = arith.constant 8 : index
    %c0_305 = arith.constant 0 : index
    %648 = vector.load %arg8[%c8_304, %c0_305] : memref<32x8xf32, #tpu.memory_space<vmem>>, vector<1x8xf32>
    %c24_306 = arith.constant 24 : index
    %c0_307 = arith.constant 0 : index
    %649 = vector.load %arg8[%c24_306, %c0_307] : memref<32x8xf32, #tpu.memory_space<vmem>>, vector<1x1xf32>
    %cst_308 = arith.constant dense<0.000000e+00> : vector<1x256xf32>
    %650 = tpu.matmul %648, %608, %cst_308 {dimension_numbers = #tpu.dot_dimension_numbers<[1], [0], [0], [1], [0, 0, 1, 1], [], []>} : vector<1x8xf32>, vector<8x256xf32>, vector<1x256xf32> -> vector<1x256xf32>
    %651 = vector.broadcast %649 : vector<1x1xf32> to vector<1x256xf32>
    %652 = arith.addf %650, %651 : vector<1x256xf32>
    %cst_309 = arith.constant dense<0xFF800000> : vector<1xf32>
    %653 = vector.multi_reduction <maximumf>, %652, %cst_309 [1] : vector<1x256xf32> to vector<1xf32>
    %654 = vector.shape_cast %653 : vector<1xf32> to vector<1x1xf32>
    %655 = vector.broadcast %654 : vector<1x1xf32> to vector<1x256xf32>
    %656 = arith.subf %652, %655 : vector<1x256xf32>
    %657 = math.exp %656 : vector<1x256xf32>
    %cst_310 = arith.constant dense<0.000000e+00> : vector<1xf32>
    %658 = vector.multi_reduction <add>, %657, %cst_310 [1] : vector<1x256xf32> to vector<1xf32>
    %659 = vector.shape_cast %658 : vector<1xf32> to vector<1x1xf32>
    %660 = tpu.reciprocal %659 {approx = true} : vector<1x1xf32> -> vector<1x1xf32>
    %661 = vector.broadcast %660 : vector<1x1xf32> to vector<1x256xf32>
    %662 = arith.mulf %657, %661 : vector<1x256xf32>
    %663 = arith.mulf %662, %622 : vector<1x256xf32>
    %cst_311 = arith.constant dense<0.000000e+00> : vector<1xf32>
    %664 = vector.multi_reduction <add>, %663, %cst_311 [1] : vector<1x256xf32> to vector<1xf32>
    %665 = vector.shape_cast %664 : vector<1xf32> to vector<1x1xf32>
    %666 = arith.mulf %662, %626 : vector<1x256xf32>
    %cst_312 = arith.constant dense<0.000000e+00> : vector<1xf32>
    %667 = vector.multi_reduction <add>, %666, %cst_312 [1] : vector<1x256xf32> to vector<1xf32>
    %668 = vector.shape_cast %667 : vector<1xf32> to vector<1x1xf32>
    %669 = arith.addf %644, %665 : vector<1x1xf32>
    %cst_313 = arith.constant 5.000000e-01 : f32
    %670 = vector.broadcast %cst_313 : f32 to vector<1x1xf32>
    %671 = arith.mulf %669, %670 : vector<1x1xf32>
    %672 = arith.addf %647, %668 : vector<1x1xf32>
    %cst_314 = arith.constant 5.000000e-01 : f32
    %673 = vector.broadcast %cst_314 : f32 to vector<1x1xf32>
    %674 = arith.mulf %672, %673 : vector<1x1xf32>
    %675 = arith.subf %665, %644 : vector<1x1xf32>
    %676 = arith.subf %668, %647 : vector<1x1xf32>
    %677 = tpu.iota {dimensions = array<i32: 1>} : vector<1x4xi32>
    %c0_i32 = arith.constant 0 : i32
    %678 = vector.broadcast %c0_i32 : i32 to vector<1x4xi32>
    %679 = arith.cmpi eq, %677, %678 : vector<1x4xi32>
    %c1_i32_315 = arith.constant 1 : i32
    %680 = vector.broadcast %c1_i32_315 : i32 to vector<1x4xi32>
    %681 = arith.cmpi eq, %677, %680 : vector<1x4xi32>
    %c2_i32 = arith.constant 2 : i32
    %682 = vector.broadcast %c2_i32 : i32 to vector<1x4xi32>
    %683 = arith.cmpi eq, %677, %682 : vector<1x4xi32>
    %684 = vector.shape_cast %675 : vector<1x1xf32> to vector<1x1xf32>
    %685 = vector.broadcast %684 : vector<1x1xf32> to vector<1x4xf32>
    %686 = vector.shape_cast %676 : vector<1x1xf32> to vector<1x1xf32>
    %687 = vector.broadcast %686 : vector<1x1xf32> to vector<1x4xf32>
    %688 = arith.select %683, %685, %687 : vector<1x4xi1>, vector<1x4xf32>
    %689 = vector.shape_cast %674 : vector<1x1xf32> to vector<1x1xf32>
    %690 = vector.broadcast %689 : vector<1x1xf32> to vector<1x4xf32>
    %691 = arith.select %681, %690, %688 : vector<1x4xi1>, vector<1x4xf32>
    %692 = vector.shape_cast %671 : vector<1x1xf32> to vector<1x1xf32>
    %693 = vector.broadcast %692 : vector<1x1xf32> to vector<1x4xf32>
    %694 = arith.select %679, %693, %691 : vector<1x4xi1>, vector<1x4xf32>
    %c0_316 = arith.constant 0 : index
    %c0_317 = arith.constant 0 : index
    %c0_318 = arith.constant 0 : index
    %695 = vector.load %arg11[%c0_316, %c0_317, %c0_318] : memref<1x1x4xf32, #tpu.memory_space<vmem>>, vector<1x1x4xf32>
    %696 = vector.shape_cast %695 : vector<1x1x4xf32> to vector<1x4xf32>
    %697 = vector.shape_cast %694 : vector<1x4xf32> to vector<1x1x4xf32>
    tpu.vector_store %arg11[%c0_316, %c0_317, %c0_318], %697 {strides = array<i32>} : memref<1x1x4xf32, #tpu.memory_space<vmem>>, vector<1x1x4xf32>,
    %cst_319 = arith.constant dense<0.000000e+00> : vector<8xf32>
    %698 = vector.multi_reduction <add>, %608, %cst_319 [1] : vector<8x256xf32> to vector<8xf32>
    %699 = vector.shape_cast %698 : vector<8xf32> to vector<8x1xf32>
    %cst_320 = arith.constant 3.906250e-03 : f32
    %700 = vector.broadcast %cst_320 : f32 to vector<8x1xf32>
    %701 = arith.mulf %699, %700 : vector<8x1xf32>
    %cst_321 = arith.constant dense<0.000000e+00> : vector<8xf32>
    %702 = vector.multi_reduction <add>, %604, %cst_321 [1] : vector<8x256xf32> to vector<8xf32>
    %703 = vector.shape_cast %702 : vector<8xf32> to vector<8x1xf32>
    %cst_322 = arith.constant 3.906250e-03 : f32
    %704 = vector.broadcast %cst_322 : f32 to vector<8x1xf32>
    %705 = arith.mulf %703, %704 : vector<8x1xf32>
    %706 = tpu.iota {dimensions = array<i32: 0>} : vector<4x1xi32>
    %c0_i32_323 = arith.constant 0 : i32
    %707 = vector.broadcast %c0_i32_323 : i32 to vector<4x1xi32>
    %708 = arith.cmpi eq, %706, %707 : vector<4x1xi32>
    %c1_i32_324 = arith.constant 1 : i32
    %709 = vector.broadcast %c1_i32_324 : i32 to vector<4x1xi32>
    %710 = arith.cmpi eq, %706, %709 : vector<4x1xi32>
    %c2_i32_325 = arith.constant 2 : i32
    %711 = vector.broadcast %c2_i32_325 : i32 to vector<4x1xi32>
    %712 = arith.cmpi eq, %706, %711 : vector<4x1xi32>
    %713 = vector.shape_cast %665 : vector<1x1xf32> to vector<1x1xf32>
    %714 = vector.broadcast %713 : vector<1x1xf32> to vector<4x1xf32>
    %715 = vector.shape_cast %668 : vector<1x1xf32> to vector<1x1xf32>
    %716 = vector.broadcast %715 : vector<1x1xf32> to vector<4x1xf32>
    %717 = arith.select %712, %714, %716 : vector<4x1xi1>, vector<4x1xf32>
    %718 = vector.shape_cast %647 : vector<1x1xf32> to vector<1x1xf32>
    %719 = vector.broadcast %718 : vector<1x1xf32> to vector<4x1xf32>
    %720 = arith.select %710, %719, %717 : vector<4x1xi1>, vector<4x1xf32>
    %721 = vector.shape_cast %644 : vector<1x1xf32> to vector<1x1xf32>
    %722 = vector.broadcast %721 : vector<1x1xf32> to vector<4x1xf32>
    %723 = arith.select %708, %722, %720 : vector<4x1xi1>, vector<4x1xf32>
    %c0_326 = arith.constant 0 : index
    %c0_327 = arith.constant 0 : index
    %724 = vector.load %arg9[%c0_326, %c0_327] : memref<32x1xf32, #tpu.memory_space<vmem>>, vector<8x1xf32>
    %725 = arith.mulf %701, %724 : vector<8x1xf32>
    %cst_328 = arith.constant dense<0.000000e+00> : vector<1xf32>
    %726 = vector.multi_reduction <add>, %725, %cst_328 [0] : vector<8x1xf32> to vector<1xf32>
    %727 = vector.shape_cast %726 : vector<1xf32> to vector<1x1xf32>
    %c8_329 = arith.constant 8 : index
    %c0_330 = arith.constant 0 : index
    %728 = vector.load %arg9[%c8_329, %c0_330] : memref<32x1xf32, #tpu.memory_space<vmem>>, vector<8x1xf32>
    %729 = arith.mulf %705, %728 : vector<8x1xf32>
    %cst_331 = arith.constant dense<0.000000e+00> : vector<1xf32>
    %730 = vector.multi_reduction <add>, %729, %cst_331 [0] : vector<8x1xf32> to vector<1xf32>
    %731 = vector.shape_cast %730 : vector<1xf32> to vector<1x1xf32>
    %732 = arith.addf %727, %731 : vector<1x1xf32>
    %c16_332 = arith.constant 16 : index
    %c0_333 = arith.constant 0 : index
    %733 = vector.load %arg9[%c16_332, %c0_333] : memref<32x1xf32, #tpu.memory_space<vmem>>, vector<4x1xf32>
    %734 = arith.mulf %723, %733 : vector<4x1xf32>
    %cst_334 = arith.constant dense<0.000000e+00> : vector<1xf32>
    %735 = vector.multi_reduction <add>, %734, %cst_334 [0] : vector<4x1xf32> to vector<1xf32>
    %736 = vector.shape_cast %735 : vector<1xf32> to vector<1x1xf32>
    %737 = arith.addf %732, %736 : vector<1x1xf32>
    %c24_335 = arith.constant 24 : index
    %c0_336 = arith.constant 0 : index
    %738 = vector.load %arg9[%c24_335, %c0_336] : memref<32x1xf32, #tpu.memory_space<vmem>>, vector<1x1xf32>
    %739 = arith.addf %737, %738 : vector<1x1xf32>
    %c0_337 = arith.constant 0 : index
    %c0_338 = arith.constant 0 : index
    %c0_339 = arith.constant 0 : index
    %740 = vector.load %arg12[%c0_337, %c0_338, %c0_339] : memref<1x1x1xf32, #tpu.memory_space<vmem>>, vector<1x1x1xf32>
    %741 = vector.shape_cast %740 : vector<1x1x1xf32> to vector<1x1xf32>
    %742 = vector.shape_cast %739 : vector<1x1xf32> to vector<1x1x1xf32>
    tpu.vector_store %arg12[%c0_337, %c0_338, %c0_339], %742 {strides = array<i32>} : memref<1x1x1xf32, #tpu.memory_space<vmem>>, vector<1x1x1xf32>,
    return
  }
  func.func @transform_0(%arg0: i32) -> (i32, i32, i32) {
    %c0_i32 = arith.constant 0 : i32
    %c0_i32_0 = arith.constant 0 : i32
    %c0_i32_1 = arith.constant 0 : i32
    return %arg0, %c0_i32, %c0_i32_0 : i32, i32, i32
  }
  func.func @transform_1(%arg0: i32) -> (i32, i32, i32) {
    %c0_i32 = arith.constant 0 : i32
    %c0_i32_0 = arith.constant 0 : i32
    %c0_i32_1 = arith.constant 0 : i32
    return %arg0, %c0_i32, %c0_i32_0 : i32, i32, i32
  }
  func.func @transform_2(%arg0: i32) -> (i32, i32, i32) {
    %c0_i32 = arith.constant 0 : i32
    %c0_i32_0 = arith.constant 0 : i32
    %c0_i32_1 = arith.constant 0 : i32
    return %arg0, %c0_i32, %c0_i32_0 : i32, i32, i32
  }
  func.func @transform_3(%arg0: i32) -> (i32, i32, i32) {
    %c0_i32 = arith.constant 0 : i32
    %c0_i32_0 = arith.constant 0 : i32
    %c0_i32_1 = arith.constant 0 : i32
    return %arg0, %c0_i32, %c0_i32_0 : i32, i32, i32
  }
  func.func @transform_4(%arg0: i32) -> (i32, i32) {
    %c0_i32 = arith.constant 0 : i32
    %c0_i32_0 = arith.constant 0 : i32
    %c0_i32_1 = arith.constant 0 : i32
    return %c0_i32, %c0_i32_0 : i32, i32
  }
  func.func @transform_5(%arg0: i32) -> (i32, i32) {
    %c0_i32 = arith.constant 0 : i32
    %c0_i32_0 = arith.constant 0 : i32
    %c0_i32_1 = arith.constant 0 : i32
    return %c0_i32, %c0_i32_0 : i32, i32
  }
  func.func @transform_6(%arg0: i32) -> (i32, i32) {
    %c0_i32 = arith.constant 0 : i32
    %c0_i32_0 = arith.constant 0 : i32
    %c0_i32_1 = arith.constant 0 : i32
    return %c0_i32, %c0_i32_0 : i32, i32
  }
  func.func @transform_7(%arg0: i32) -> (i32, i32) {
    %c0_i32 = arith.constant 0 : i32
    %c0_i32_0 = arith.constant 0 : i32
    %c0_i32_1 = arith.constant 0 : i32
    return %c0_i32, %c0_i32_0 : i32, i32
  }
  func.func @transform_8(%arg0: i32) -> (i32, i32) {
    %c0_i32 = arith.constant 0 : i32
    %c0_i32_0 = arith.constant 0 : i32
    %c0_i32_1 = arith.constant 0 : i32
    return %c0_i32, %c0_i32_0 : i32, i32
  }
  func.func @transform_9(%arg0: i32) -> (i32, i32, i32) {
    %c0_i32 = arith.constant 0 : i32
    %c0_i32_0 = arith.constant 0 : i32
    %c0_i32_1 = arith.constant 0 : i32
    return %arg0, %c0_i32, %c0_i32_0 : i32, i32, i32
  }
  func.func @transform_10(%arg0: i32) -> (i32, i32, i32) {
    %c0_i32 = arith.constant 0 : i32
    %c0_i32_0 = arith.constant 0 : i32
    %c0_i32_1 = arith.constant 0 : i32
    return %arg0, %c0_i32, %c0_i32_0 : i32, i32, i32
  }
  func.func @transform_11(%arg0: i32) -> (i32, i32, i32) {
    %c0_i32 = arith.constant 0 : i32
    %c0_i32_0 = arith.constant 0 : i32
    %c0_i32_1 = arith.constant 0 : i32
    return %arg0, %c0_i32, %c0_i32_0 : i32, i32, i32
  }
}

</mosaic_0001>

<llo_original>
// kernel: hypertrack_forward.1
$region0: #{hypertrack_forward.1}
  #allocation0 [shape = 'u32[]', space=smem, size = 0x4, offset = 0x4, fixed_abs, tag = 'smem constant byte address 0x4 - core index']
  #allocation1 [shape = 'u32[144,128]{1,0:T(1,128)}', space=vmem, size = 0x12000, scoped, tag = 'internal scratch']
  %s0 = inlined_call_operand.vmem [shape: f32[2,16,256], index: 0, kind: input, shape index: {}]
  %s1 = inlined_call_operand.vmem [shape: f32[2,16,256], index: 1, kind: input, shape index: {}]
  %s2 = inlined_call_operand.vmem [shape: f32[2,3,16], index: 2, kind: input, shape index: {}]
  %s3 = inlined_call_operand.vmem [shape: f32[2,3,16], index: 3, kind: input, shape index: {}]
  %s4 = inlined_call_operand.vmem [shape: f32[3,1], index: 4, kind: input, shape index: {}]
  %s5 = inlined_call_operand.vmem [shape: f32[3,1], index: 5, kind: input, shape index: {}]
  %s6 = inlined_call_operand.vmem [shape: f32[80,3], index: 6, kind: input, shape index: {}]
  %s7 = inlined_call_operand.vmem [shape: f32[32,8], index: 7, kind: input, shape index: {}]
  %s8 = inlined_call_operand.vmem [shape: f32[32,1], index: 8, kind: input, shape index: {}]
  %s9 = inlined_call_operand.vmem [shape: f32[2,4,1], index: 9, kind: input, shape index: {}]
  %s10 = inlined_call_operand.vmem [shape: f32[2,1,4], index: 10, kind: output, shape index: {0}]
  %s11 = inlined_call_operand.vmem [shape: f32[2,1,1], index: 11, kind: output, shape index: {1}]
  %12 = xla_tuple %s10, %s11
  %s13 = sld [smem:[#allocation0]]
  $region81: #{hypertrack_forward.1} parent=0
    _
  %s15 = ssub.s32 1, %s13
  %s16 = scalar_select 0, %s15, %s13
  loop: start=0, step=1, limit=4
  $region2: #{hypertrack_forward.1} parent=0 // loop_pre_header
    _
  $region3: #{hypertrack_forward.1} parent=0 // loop_header
    %s18 = sphi 0, %s22
    %p19 = scmp.ge.s32.totalorder %s18, 4
    %s28 = sphi 0, %s30
    %s31 = sphi 0, %s28
    %s32 = sphi 0, %s31
    %s48 = sphi 0, %s32
    %s54 = sphi 0, %s56
    %s57 = sphi 0, %s54
    %s58 = sphi 0, %s57
    %s74 = sphi 0, %s58
    %s80 = sphi 0, %s82
    %s83 = sphi 0, %s80
    %s84 = sphi 0, %s83
    %s100 = sphi 0, %s84
    %s106 = sphi 0, %s108
    %s109 = sphi 0, %s106
    %s110 = sphi 0, %s109
    %s126 = sphi 0, %s110
    %s130 = sphi 0, %s130
    %s132 = sphi 0, %s130
    %s133 = sphi 0, %s132
    %s147 = sphi 0, %s133
    %s151 = sphi 0, %s151
    %s153 = sphi 0, %s151
    %s154 = sphi 0, %s153
    %s168 = sphi 0, %s154
    %s172 = sphi 0, %s172
    %s174 = sphi 0, %s172
    %s175 = sphi 0, %s174
    %s189 = sphi 0, %s175
    %s193 = sphi 0, %s193
    %s195 = sphi 0, %s193
    %s196 = sphi 0, %s195
    %s210 = sphi 0, %s196
    %s214 = sphi 0, %s214
    %s216 = sphi 0, %s214
    %s217 = sphi 0, %s216
    %s231 = sphi 0, %s217
    %s237 = sphi 0, %s239
    %s240 = sphi 0, %s237
    %s241 = sphi 0, %s240
    %s257 = sphi 0, %s241
    %s263 = sphi 0, %s265
    %s266 = sphi 0, %s263
    %s267 = sphi 0, %s266
    %s283 = sphi 0, %s267
    %s289 = sphi 0, %s291
    %s292 = sphi 0, %s289
    %s293 = sphi 0, %s292
    %s309 = sphi 0, %s293
  $region4: #{hypertrack_forward.1} parent=0 // loop_header_branch
    %21 = sbr.rel (%p19) target = $region8
  $region5: #{hypertrack_forward.1} parent=0 // loop_body
    %s23 = ssub.s32 %s18, 1
    %s24 = ssub.s32 %s18, 2
    %s25 = sadd.s32 %s18, 1
    %s26 = ssub.s32 %s18, %s25
    %p27 = scmp.eq.s32.totalorder %s26, 0
    %s29 = sadd.s32 %s28, 1
    %s30 = scalar_select %p27, %s28, %s29
    %p33 = pneg %p27
    %p34 = scmp.eq.s32.totalorder %s18, 1
    %p35 = por %p33, %p34
    %p36 = scmp.ne.s32.totalorder %s28, %s31
    %p37 = scmp.eq.s32.totalorder %s18, 0
    %p38 = por %p36, %p37
    %p39 = scmp.ne.s32.totalorder %s28, %s31
    %p40 = scmp.eq.s32.totalorder %s23, 1
    %p41 = por %p39, %p40
    %p42 = scmp.ne.s32.totalorder %s31, %s32
    %p43 = scmp.eq.s32.totalorder %s23, 0
    %p44 = por %p42, %p43
    %p45 = scmp.ne.s32.totalorder %s31, %s32
    %p46 = scmp.eq.s32.totalorder %s24, 1
    %p47 = por %p45, %p46
    %p49 = scmp.ne.s32.totalorder %s32, %s48
    %p50 = scmp.eq.s32.totalorder %s24, 0
    %p51 = por %p49, %p50
    %s52 = ssub.s32 %s18, %s25
    %p53 = scmp.eq.s32.totalorder %s52, 0
    %s55 = sadd.s32 %s54, 1
    %s56 = scalar_select %p53, %s54, %s55
    %p59 = pneg %p53
    %p60 = scmp.eq.s32.totalorder %s18, 1
    %p61 = por %p59, %p60
    %p62 = scmp.ne.s32.totalorder %s54, %s57
    %p63 = scmp.eq.s32.totalorder %s18, 0
    %p64 = por %p62, %p63
    %p65 = scmp.ne.s32.totalorder %s54, %s57
    %p66 = scmp.eq.s32.totalorder %s23, 1
    %p67 = por %p65, %p66
    %p68 = scmp.ne.s32.totalorder %s57, %s58
    %p69 = scmp.eq.s32.totalorder %s23, 0
    %p70 = por %p68, %p69
    %p71 = scmp.ne.s32.totalorder %s57, %s58
    %p72 = scmp.eq.s32.totalorder %s24, 1
    %p73 = por %p71, %p72
    %p75 = scmp.ne.s32.totalorder %s58, %s74
    %p76 = scmp.eq.s32.totalorder %s24, 0
    %p77 = por %p75, %p76
    %s78 = ssub.s32 %s18, %s25
    %p79 = scmp.eq.s32.totalorder %s78, 0
    %s81 = sadd.s32 %s80, 1
    %s82 = scalar_select %p79, %s80, %s81
    %p85 = pneg %p79
    %p86 = scmp.eq.s32.totalorder %s18, 1
    %p87 = por %p85, %p86
    %p88 = scmp.ne.s32.totalorder %s80, %s83
    %p89 = scmp.eq.s32.totalorder %s18, 0
    %p90 = por %p88, %p89
    %p91 = scmp.ne.s32.totalorder %s80, %s83
    %p92 = scmp.eq.s32.totalorder %s23, 1
    %p93 = por %p91, %p92
    %p94 = scmp.ne.s32.totalorder %s83, %s84
    %p95 = scmp.eq.s32.totalorder %s23, 0
    %p96 = por %p94, %p95
    %p97 = scmp.ne.s32.totalorder %s83, %s84
    %p98 = scmp.eq.s32.totalorder %s24, 1
    %p99 = por %p97, %p98
    %p101 = scmp.ne.s32.totalorder %s84, %s100
    %p102 = scmp.eq.s32.totalorder %s24, 0
    %p103 = por %p101, %p102
    %s104 = ssub.s32 %s18, %s25
    %p105 = scmp.eq.s32.totalorder %s104, 0
    %s107 = sadd.s32 %s106, 1
    %s108 = scalar_select %p105, %s106, %s107
    %p111 = pneg %p105
    %p112 = scmp.eq.s32.totalorder %s18, 1
    %p113 = por %p111, %p112
    %p114 = scmp.ne.s32.totalorder %s106, %s109
    %p115 = scmp.eq.s32.totalorder %s18, 0
    %p116 = por %p114, %p115
    %p117 = scmp.ne.s32.totalorder %s106, %s109
    %p118 = scmp.eq.s32.totalorder %s23, 1
    %p119 = por %p117, %p118
    %p120 = scmp.ne.s32.totalorder %s109, %s110
    %p121 = scmp.eq.s32.totalorder %s23, 0
    %p122 = por %p120, %p121
    %p123 = scmp.ne.s32.totalorder %s109, %s110
    %p124 = scmp.eq.s32.totalorder %s24, 1
    %p125 = por %p123, %p124
    %p127 = scmp.ne.s32.totalorder %s110, %s126
    %p128 = scmp.eq.s32.totalorder %s24, 0
    %p129 = por %p127, %p128
    %s131 = sadd.s32 %s130, 1
    %p134 = scmp.eq.s32.totalorder %s18, 1
    %p135 = scmp.ne.s32.totalorder %s130, %s132
    %p136 = scmp.eq.s32.totalorder %s18, 0
    %p137 = por %p135, %p136
    %p138 = scmp.ne.s32.totalorder %s130, %s132
    %p139 = scmp.eq.s32.totalorder %s23, 1
    %p140 = por %p138, %p139
    %p141 = scmp.ne.s32.totalorder %s132, %s133
    %p142 = scmp.eq.s32.totalorder %s23, 0
    %p143 = por %p141, %p142
    %p144 = scmp.ne.s32.totalorder %s132, %s133
    %p145 = scmp.eq.s32.totalorder %s24, 1
    %p146 = por %p144, %p145
    %p148 = scmp.ne.s32.totalorder %s133, %s147
    %p149 = scmp.eq.s32.totalorder %s24, 0
    %p150 = por %p148, %p149
    %s152 = sadd.s32 %s151, 1
    %p155 = scmp.eq.s32.totalorder %s18, 1
    %p156 = scmp.ne.s32.totalorder %s151, %s153
    %p157 = scmp.eq.s32.totalorder %s18, 0
    %p158 = por %p156, %p157
    %p159 = scmp.ne.s32.totalorder %s151, %s153
    %p160 = scmp.eq.s32.totalorder %s23, 1
    %p161 = por %p159, %p160
    %p162 = scmp.ne.s32.totalorder %s153, %s154
    %p163 = scmp.eq.s32.totalorder %s23, 0
    %p164 = por %p162, %p163
    %p165 = scmp.ne.s32.totalorder %s153, %s154
    %p166 = scmp.eq.s32.totalorder %s24, 1
    %p167 = por %p165, %p166
    %p169 = scmp.ne.s32.totalorder %s154, %s168
    %p170 = scmp.eq.s32.totalorder %s24, 0
    %p171 = por %p169, %p170
    %s173 = sadd.s32 %s172, 1
    %p176 = scmp.eq.s32.totalorder %s18, 1
    %p177 = scmp.ne.s32.totalorder %s172, %s174
    %p178 = scmp.eq.s32.totalorder %s18, 0
    %p179 = por %p177, %p178
    %p180 = scmp.ne.s32.totalorder %s172, %s174
    %p181 = scmp.eq.s32.totalorder %s23, 1
    %p182 = por %p180, %p181
    %p183 = scmp.ne.s32.totalorder %s174, %s175
    %p184 = scmp.eq.s32.totalorder %s23, 0
    %p185 = por %p183, %p184
    %p186 = scmp.ne.s32.totalorder %s174, %s175
    %p187 = scmp.eq.s32.totalorder %s24, 1
    %p188 = por %p186, %p187
    %p190 = scmp.ne.s32.totalorder %s175, %s189
    %p191 = scmp.eq.s32.totalorder %s24, 0
    %p192 = por %p190, %p191
    %s194 = sadd.s32 %s193, 1
    %p197 = scmp.eq.s32.totalorder %s18, 1
    %p198 = scmp.ne.s32.totalorder %s193, %s195
    %p199 = scmp.eq.s32.totalorder %s18, 0
    %p200 = por %p198, %p199
    %p201 = scmp.ne.s32.totalorder %s193, %s195
    %p202 = scmp.eq.s32.totalorder %s23, 1
    %p203 = por %p201, %p202
    %p204 = scmp.ne.s32.totalorder %s195, %s196
    %p205 = scmp.eq.s32.totalorder %s23, 0
    %p206 = por %p204, %p205
    %p207 = scmp.ne.s32.totalorder %s195, %s196
    %p208 = scmp.eq.s32.totalorder %s24, 1
    %p209 = por %p207, %p208
    %p211 = scmp.ne.s32.totalorder %s196, %s210
    %p212 = scmp.eq.s32.totalorder %s24, 0
    %p213 = por %p211, %p212
    %s215 = sadd.s32 %s214, 1
    %p218 = scmp.eq.s32.totalorder %s18, 1
    %p219 = scmp.ne.s32.totalorder %s214, %s216
    %p220 = scmp.eq.s32.totalorder %s18, 0
    %p221 = por %p219, %p220
    %p222 = scmp.ne.s32.totalorder %s214, %s216
    %p223 = scmp.eq.s32.totalorder %s23, 1
    %p224 = por %p222, %p223
    %p225 = scmp.ne.s32.totalorder %s216, %s217
    %p226 = scmp.eq.s32.totalorder %s23, 0
    %p227 = por %p225, %p226
    %p228 = scmp.ne.s32.totalorder %s216, %s217
    %p229 = scmp.eq.s32.totalorder %s24, 1
    %p230 = por %p228, %p229
    %p232 = scmp.ne.s32.totalorder %s217, %s231
    %p233 = scmp.eq.s32.totalorder %s24, 0
    %p234 = por %p232, %p233
    %s235 = ssub.s32 %s18, %s25
    %p236 = scmp.eq.s32.totalorder %s235, 0
    %s238 = sadd.s32 %s237, 1
    %s239 = scalar_select %p236, %s237, %s238
    %p242 = pneg %p236
    %p243 = scmp.eq.s32.totalorder %s18, 1
    %p244 = por %p242, %p243
    %p245 = scmp.ne.s32.totalorder %s237, %s240
    %p246 = scmp.eq.s32.totalorder %s18, 0
    %p247 = por %p245, %p246
    %p248 = scmp.ne.s32.totalorder %s237, %s240
    %p249 = scmp.eq.s32.totalorder %s23, 1
    %p250 = por %p248, %p249
    %p251 = scmp.ne.s32.totalorder %s240, %s241
    %p252 = scmp.eq.s32.totalorder %s23, 0
    %p253 = por %p251, %p252
    %p254 = scmp.ne.s32.totalorder %s240, %s241
    %p255 = scmp.eq.s32.totalorder %s24, 1
    %p256 = por %p254, %p255
    %p258 = scmp.ne.s32.totalorder %s241, %s257
    %p259 = scmp.eq.s32.totalorder %s24, 0
    %p260 = por %p258, %p259
    %s261 = ssub.s32 %s18, %s25
    %p262 = scmp.eq.s32.totalorder %s261, 0
    %s264 = sadd.s32 %s263, 1
    %s265 = scalar_select %p262, %s263, %s264
    %p268 = pneg %p262
    %p269 = scmp.eq.s32.totalorder %s18, 1
    %p270 = por %p268, %p269
    %p271 = scmp.ne.s32.totalorder %s263, %s266
    %p272 = scmp.eq.s32.totalorder %s18, 0
    %p273 = por %p271, %p272
    %p274 = scmp.ne.s32.totalorder %s263, %s266
    %p275 = scmp.eq.s32.totalorder %s23, 1
    %p276 = por %p274, %p275
    %p277 = scmp.ne.s32.totalorder %s266, %s267
    %p278 = scmp.eq.s32.totalorder %s23, 0
    %p279 = por %p277, %p278
    %p280 = scmp.ne.s32.totalorder %s266, %s267
    %p281 = scmp.eq.s32.totalorder %s24, 1
    %p282 = por %p280, %p281
    %p284 = scmp.ne.s32.totalorder %s267, %s283
    %p285 = scmp.eq.s32.totalorder %s24, 0
    %p286 = por %p284, %p285
    %s287 = ssub.s32 %s18, %s25
    %p288 = scmp.eq.s32.totalorder %s287, 0
    %s290 = sadd.s32 %s289, 1
    %s291 = scalar_select %p288, %s289, %s290
    %p294 = pneg %p288
    %p295 = scmp.eq.s32.totalorder %s18, 1
    %p296 = por %p294, %p295
    %p297 = scmp.ne.s32.totalorder %s289, %s292
    %p298 = scmp.eq.s32.totalorder %s18, 0
    %p299 = por %p297, %p298
    %p300 = scmp.ne.s32.totalorder %s289, %s292
    %p301 = scmp.eq.s32.totalorder %s23, 1
    %p302 = por %p300, %p301
    %p303 = scmp.ne.s32.totalorder %s292, %s293
    %p304 = scmp.eq.s32.totalorder %s23, 0
    %p305 = por %p303, %p304
    %p306 = scmp.ne.s32.totalorder %s292, %s293
    %p307 = scmp.eq.s32.totalorder %s24, 1
    %p308 = por %p306, %p307
    %p310 = scmp.ne.s32.totalorder %s293, %s309
    %p311 = scmp.eq.s32.totalorder %s24, 0
    %p312 = por %p310, %p311
    %p313 = scmp.le.s32.totalorder 1, %s18
    %p314 = scmp.lt.s32.totalorder %s18, 3
    %p315 = pnand %p313, %p314
    %p316 = pneg %p315
    // Predicated region
    $region9: #{hypertrack_forward.1} parent=5 // pred_check
      _
    $region10: #{hypertrack_forward.1} parent=5 // pred_check_branch
      %318 = sbr.rel (%p315) target = $region12
    $region11: #{hypertrack_forward.1} parent=5 // pred_region
      %s319 = ssub.s32 %s18, 1
      // Predicated region
      $region13: #{hypertrack_forward.1} parent=11 // pred_check
        %p320 = pneg %p143
      $region14: #{hypertrack_forward.1} parent=11 // pred_check_branch
        %322 = sbr.rel (%p320) target = $region16
      $region15: #{hypertrack_forward.1} parent=11 // pred_region
        _
      $region16: #{hypertrack_forward.1} parent=11 // pred_fallthru
        _
      // Predicated region
      $region17: #{hypertrack_forward.1} parent=11 // pred_check
        %p323 = pneg %p164
      $region18: #{hypertrack_forward.1} parent=11 // pred_check_branch
        %325 = sbr.rel (%p323) target = $region20
      $region19: #{hypertrack_forward.1} parent=11 // pred_region
        _
      $region20: #{hypertrack_forward.1} parent=11 // pred_fallthru
        _
      // Predicated region
      $region21: #{hypertrack_forward.1} parent=11 // pred_check
        %p326 = pneg %p185
      $region22: #{hypertrack_forward.1} parent=11 // pred_check_branch
        %328 = sbr.rel (%p326) target = $region24
      $region23: #{hypertrack_forward.1} parent=11 // pred_region
        _
      $region24: #{hypertrack_forward.1} parent=11 // pred_fallthru
        _
      // Predicated region
      $region25: #{hypertrack_forward.1} parent=11 // pred_check
        %p329 = pneg %p206
      $region26: #{hypertrack_forward.1} parent=11 // pred_check_branch
        %331 = sbr.rel (%p329) target = $region28
      $region27: #{hypertrack_forward.1} parent=11 // pred_region
        _
      $region28: #{hypertrack_forward.1} parent=11 // pred_fallthru
        _
      // Predicated region
      $region29: #{hypertrack_forward.1} parent=11 // pred_check
        %p332 = pneg %p227
      $region30: #{hypertrack_forward.1} parent=11 // pred_check_branch
        %334 = sbr.rel (%p332) target = $region32
      $region31: #{hypertrack_forward.1} parent=11 // pred_region
        _
      $region32: #{hypertrack_forward.1} parent=11 // pred_fallthru
        _
    $region12: #{hypertrack_forward.1} parent=5 // pred_fallthru
      _
    %p335 = scmp.lt.s32.totalorder %s18, 2
    // Predicated region
    $region33: #{hypertrack_forward.1} parent=5 // pred_check
      %p336 = pneg %p335
    $region34: #{hypertrack_forward.1} parent=5 // pred_check_branch
      %338 = sbr.rel (%p336) target = $region36
    $region35: #{hypertrack_forward.1} parent=5 // pred_region
      // Predicated region
      $region37: #{hypertrack_forward.1} parent=35 // pred_check
        %p339 = pneg %p38
      $region38: #{hypertrack_forward.1} parent=35 // pred_check_branch
        %341 = sbr.rel (%p339) target = $region40
      $region39: #{hypertrack_forward.1} parent=35 // pred_region
        %p342 = scmp.lt.s32.totalorder %s18, 1
        %s343 = scalar_select %p342, %s18, 1
        %s344 = smul.addr %s343, 4
        %s345 = smul.addr %s344, 8
        %s346 = scalar_lea.vmem %s0, %s345
      $region40: #{hypertrack_forward.1} parent=35 // pred_fallthru
        _
      // Predicated region
      $region41: #{hypertrack_forward.1} parent=35 // pred_check
        %p347 = pneg %p64
      $region42: #{hypertrack_forward.1} parent=35 // pred_check_branch
        %349 = sbr.rel (%p347) target = $region44
      $region43: #{hypertrack_forward.1} parent=35 // pred_region
        %p350 = scmp.lt.s32.totalorder %s18, 1
        %s351 = scalar_select %p350, %s18, 1
        %s352 = smul.addr %s351, 4
        %s353 = smul.addr %s352, 8
        %s354 = scalar_lea.vmem %s1, %s353
      $region44: #{hypertrack_forward.1} parent=35 // pred_fallthru
        _
      // Predicated region
      $region45: #{hypertrack_forward.1} parent=35 // pred_check
        %p355 = pneg %p90
      $region46: #{hypertrack_forward.1} parent=35 // pred_check_branch
        %357 = sbr.rel (%p355) target = $region48
      $region47: #{hypertrack_forward.1} parent=35 // pred_region
        %p358 = scmp.lt.s32.totalorder %s18, 1
        %s359 = scalar_select %p358, %s18, 1
        %s360 = smul.addr %s359, 4
        %s361 = scalar_lea.vmem %s2, %s360
      $region48: #{hypertrack_forward.1} parent=35 // pred_fallthru
        _
      // Predicated region
      $region49: #{hypertrack_forward.1} parent=35 // pred_check
        %p362 = pneg %p116
      $region50: #{hypertrack_forward.1} parent=35 // pred_check_branch
        %364 = sbr.rel (%p362) target = $region52
      $region51: #{hypertrack_forward.1} parent=35 // pred_region
        %p365 = scmp.lt.s32.totalorder %s18, 1
        %s366 = scalar_select %p365, %s18, 1
        %s367 = smul.addr %s366, 4
        %s368 = scalar_lea.vmem %s3, %s367
      $region52: #{hypertrack_forward.1} parent=35 // pred_fallthru
        _
      // Predicated region
      $region53: #{hypertrack_forward.1} parent=35 // pred_check
        %p369 = pneg %p247
      $region54: #{hypertrack_forward.1} parent=35 // pred_check_branch
        %371 = sbr.rel (%p369) target = $region56
      $region55: #{hypertrack_forward.1} parent=35 // pred_region
        %p372 = scmp.lt.s32.totalorder %s18, 1
        %s373 = scalar_select %p372, %s18, 1
        %s374 = smul.addr %s373, 4
        %s375 = scalar_lea.vmem %s9, %s374
      $region56: #{hypertrack_forward.1} parent=35 // pred_fallthru
        _
    $region36: #{hypertrack_forward.1} parent=5 // pred_fallthru
      _
    %p376 = scmp.le.s32.totalorder 1, %s18
    %p377 = scmp.lt.s32.totalorder %s18, 3
    %p378 = pnand %p376, %p377
    %p379 = pneg %p378
    // Predicated region
    $region57: #{hypertrack_forward.1} parent=5 // pred_check
      _
    $region58: #{hypertrack_forward.1} parent=5 // pred_check_branch
      %381 = sbr.rel (%p378) target = $region60
    $region59: #{hypertrack_forward.1} parent=5 // pred_region
      %s382 = ssub.s32 %s18, 1
      %p383 = scmp.lt.s32.totalorder %s23, 1
      %s384 = scalar_select %p383, %s23, 1
      %s385 = smul.addr %s384, 4
      %s386 = smul.addr %s385, 8
      %s387 = scalar_lea.vmem %s0, %s386
      %p388 = pneg %p44
      %p389 = pneg %p41
      %p390 = scmp.lt.s32.totalorder %s23, 1
      %s391 = scalar_select %p390, %s23, 1
      %s392 = smul.addr %s391, 4
      %s393 = smul.addr %s392, 8
      %s394 = scalar_lea.vmem %s1, %s393
      %p395 = pneg %p70
      %p396 = pneg %p67
      %p397 = scmp.lt.s32.totalorder %s23, 1
      %s398 = scalar_select %p397, %s23, 1
      %s399 = smul.addr %s398, 4
      %s400 = scalar_lea.vmem %s2, %s399
      %p401 = pneg %p96
      %p402 = pneg %p93
      %p403 = scmp.lt.s32.totalorder %s23, 1
      %s404 = scalar_select %p403, %s23, 1
      %s405 = smul.addr %s404, 4
      %s406 = scalar_lea.vmem %s3, %s405
      %p407 = pneg %p122
      %p408 = pneg %p119
      %p409 = pneg %p143
      %p410 = pneg %p140
      %p411 = pneg %p164
      %p412 = pneg %p161
      %p413 = pneg %p185
      %p414 = pneg %p182
      %p415 = pneg %p206
      %p416 = pneg %p203
      %p417 = pneg %p227
      %p418 = pneg %p224
      %p419 = scmp.lt.s32.totalorder %s23, 1
      %s420 = scalar_select %p419, %s23, 1
      %s421 = smul.addr %s420, 4
      %s422 = scalar_lea.vmem %s9, %s421
      %p423 = pneg %p253
      %p424 = pneg %p250
      %p425 = pneg %p279
      %p426 = pneg %p276
      %p427 = scmp.lt.s32.totalorder %s23, 1
      %s428 = scalar_select %p427, %s23, 1
      %s429 = scalar_lea.vmem %s10, %s428
      %p430 = pneg %p305
      %p431 = pneg %p302
      %p432 = scmp.lt.s32.totalorder %s23, 1
      %s433 = scalar_select %p432, %s23, 1
      %s434 = scalar_lea.vmem %s11, %s433
      %p435 = scmp.lt.s32.totalorder %s23, 1
      %s436 = scalar_select %p435, %s23, 1
      %s437 = smul.addr %s436, 4
      %s438 = smul.addr %s437, 8
      %s439 = scalar_lea.vmem %s0, %s438
      %p440 = scmp.lt.s32.totalorder %s23, 1
      %s441 = scalar_select %p440, %s23, 1
      %s442 = smul.addr %s441, 4
      %s443 = smul.addr %s442, 8
      %s444 = scalar_lea.vmem %s1, %s443
      %p445 = scmp.lt.s32.totalorder %s23, 1
      %s446 = scalar_select %p445, %s23, 1
      %s447 = smul.addr %s446, 4
      %s448 = scalar_lea.vmem %s2, %s447
      %p449 = scmp.lt.s32.totalorder %s23, 1
      %s450 = scalar_select %p449, %s23, 1
      %s451 = smul.addr %s450, 4
      %s452 = scalar_lea.vmem %s3, %s451
      %p453 = scmp.lt.s32.totalorder %s23, 1
      %s454 = scalar_select %p453, %s23, 1
      %s455 = smul.addr %s454, 4
      %s456 = scalar_lea.vmem %s9, %s455
      %p457 = scmp.lt.s32.totalorder %s23, 1
      %s458 = scalar_select %p457, %s23, 1
      %s459 = scalar_lea.vmem %s10, %s458
      %p460 = scmp.lt.s32.totalorder %s23, 1
      %s461 = scalar_select %p460, %s23, 1
      %s462 = scalar_lea.vmem %s11, %s461
      %v463 = vld [vmem:[%s439] sm:$0xff]
      %v464 = vld [vmem:[%s439 + $0x8] sm:$0xff]
      %v465 = vld [vmem:[%s439 + $0x10] sm:$0xff]
      %v466 = vld [vmem:[%s439 + $0x18] sm:$0xff]
      %v467 = vld [vmem:[%s444] sm:$0xff]
      %v468 = vld [vmem:[%s444 + $0x8] sm:$0xff]
      %v469 = vld [vmem:[%s444 + $0x10] sm:$0xff]
      %v470 = vld [vmem:[%s444 + $0x18] sm:$0xff]
      %v471 = vld [vmem:[%s448] sm:$0x7]
      %v472 = vld [vmem:[%s4] sm:$0x7]
      %474 = vset.pattern.permute.xlu0 0
      %475 = vperm.xlu0 %474, %v472
      %v476 = vpop.permute.xlu0 %475
      %vm478 = vcmask 130048
      %v480 = vsel %vm478, %v471, 0
      %482 = vmatprep.subr.mxu0 %v464
      %483 = vmatpush1.msra.mxu0 %v463
      %484 = vmatprep.subr.mxu0 %v466
      %485 = vmatpush1.msra.mxu0 %v465
      %486 = vmatprep.subr.mxu0 0.0
      %487 = vmatpush1.msra.mxu0 0.0
      %488 = vmatprep.subr.mxu0 0.0
      %489 = vmatpush1.msra.mxu0 0.0
      %490 = vmatprep.subr.mxu0 0.0
      %491 = vmatpush1.msra.mxu0 0.0
      %492 = vmatprep.subr.mxu0 0.0
      %493 = vmatpush1.msra.mxu0 0.0
      %494 = vmatprep.subr.mxu0 0.0
      %495 = vmatpush1.msra.mxu0 0.0
      %496 = vmatprep.subr.mxu0 0.0
      %497 = vmatpush1.msra.mxu0 0.0
      %498 = vmatprep.subr.mxu0 0.0
      %499 = vmatpush1.msra.mxu0 0.0
      %500 = vmatprep.subr.mxu0 0.0
      %501 = vmatpush1.msra.mxu0 0.0
      %502 = vmatprep.subr.mxu0 0.0
      %503 = vmatpush1.msra.mxu0 0.0
      %504 = vmatprep.subr.mxu0 0.0
      %505 = vmatpush1.msra.mxu0 0.0
      %506 = vmatprep.subr.mxu0 0.0
      %507 = vmatpush1.msra.mxu0 0.0
      %508 = vmatprep.subr.mxu0 0.0
      %509 = vmatpush1.msra.mxu0 0.0
      %510 = vmatprep.subr.mxu0 0.0
      %511 = vmatpush1.msra.mxu0 0.0
      %512 = vmatprep.subr.mxu0 0.0
      %513 = vmatpush1.msra.mxu0 0.0
      %514 = vmatprep.subr.mxu0 0.0
      %515 = vmatpush1.msra.mxu0 0.0
      %516 = vmatprep.subr.mxu0 0.0
      %517 = vmatpush1.msra.mxu0 0.0
      %518 = vmatprep.subr.mxu0 0.0
      %519 = vmatpush1.msra.mxu0 0.0
      %520 = vmatprep.subr.mxu0 0.0
      %521 = vmatpush1.msra.mxu0 0.0
      %522 = vmatprep.subr.mxu0 0.0
      %523 = vmatpush1.msra.mxu0 0.0
      %524 = vmatprep.subr.mxu0 0.0
      %525 = vmatpush1.msra.mxu0 0.0
      %526 = vmatprep.subr.mxu0 0.0
      %527 = vmatpush1.msra.mxu0 0.0
      %528 = vmatprep.subr.mxu0 0.0
      %529 = vmatpush1.msra.mxu0 0.0
      %530 = vmatprep.subr.mxu0 0.0
      %531 = vmatpush1.msra.mxu0 0.0
      %532 = vmatprep.subr.mxu0 0.0
      %533 = vmatpush1.msra.mxu0 0.0
      %534 = vmatprep.subr.mxu0 0.0
      %535 = vmatpush1.msra.mxu0 0.0
      %536 = vmatprep.subr.mxu0 0.0
      %537 = vmatpush1.msra.mxu0 0.0
      %538 = vmatprep.subr.mxu0 0.0
      %539 = vmatpush1.msra.mxu0 0.0
      %540 = vmatprep.subr.mxu0 0.0
      %541 = vmatpush1.msra.mxu0 0.0
      %542 = vmatprep.subr.mxu0 0.0
      %543 = vmatpush1.msra.mxu0 0.0
      %544 = vmatprep.subr.mxu0 0.0
      %545 = vmatpush1.msra.mxu0 0.0
      %546 = vmatprep.mubr.f32.mxu0 0.0
      %547 = vmatmul.mubr.f32.gmra.mrb[0].mxu0 %v480
      %v548 = vpop.f32.mrb[0].mxu0
      %v549 = vadd.f32 %v476, %v548
      %v550 = vpop.f32.mrb[0].mxu0
      %v551 = vadd.f32 %v476, %v550
      %552 = vdwg.mxu0
      %v553 = vld [vmem:[%s452] sm:$0x7]
      %v554 = vld [vmem:[%s5] sm:$0x7]
      %556 = vset.pattern.permute.xlu0 0
      %557 = vperm.xlu0 %556, %v554
      %v558 = vpop.permute.xlu0 %557
      %v561 = vsel %vm478, %v553, 0
      %563 = vmatprep.subr.mxu0 %v464
      %564 = vmatpush1.msra.mxu0 %v463
      %565 = vmatprep.subr.mxu0 %v466
      %566 = vmatpush1.msra.mxu0 %v465
      %567 = vmatprep.subr.mxu0 0.0
      %568 = vmatpush1.msra.mxu0 0.0
      %569 = vmatprep.subr.mxu0 0.0
      %570 = vmatpush1.msra.mxu0 0.0
      %571 = vmatprep.subr.mxu0 0.0
      %572 = vmatpush1.msra.mxu0 0.0
      %573 = vmatprep.subr.mxu0 0.0
      %574 = vmatpush1.msra.mxu0 0.0
      %575 = vmatprep.subr.mxu0 0.0
      %576 = vmatpush1.msra.mxu0 0.0
      %577 = vmatprep.subr.mxu0 0.0
      %578 = vmatpush1.msra.mxu0 0.0
      %579 = vmatprep.subr.mxu0 0.0
      %580 = vmatpush1.msra.mxu0 0.0
      %581 = vmatprep.subr.mxu0 0.0
      %582 = vmatpush1.msra.mxu0 0.0
      %583 = vmatprep.subr.mxu0 0.0
      %584 = vmatpush1.msra.mxu0 0.0
      %585 = vmatprep.subr.mxu0 0.0
      %586 = vmatpush1.msra.mxu0 0.0
      %587 = vmatprep.subr.mxu0 0.0
      %588 = vmatpush1.msra.mxu0 0.0
      %589 = vmatprep.subr.mxu0 0.0
      %590 = vmatpush1.msra.mxu0 0.0
      %591 = vmatprep.subr.mxu0 0.0
      %592 = vmatpush1.msra.mxu0 0.0
      %593 = vmatprep.subr.mxu0 0.0
      %594 = vmatpush1.msra.mxu0 0.0
      %595 = vmatprep.subr.mxu0 0.0
      %596 = vmatpush1.msra.mxu0 0.0
      %597 = vmatprep.subr.mxu0 0.0
      %598 = vmatpush1.msra.mxu0 0.0
      %599 = vmatprep.subr.mxu0 0.0
      %600 = vmatpush1.msra.mxu0 0.0
      %601 = vmatprep.subr.mxu0 0.0
      %602 = vmatpush1.msra.mxu0 0.0
      %603 = vmatprep.subr.mxu0 0.0
      %604 = vmatpush1.msra.mxu0 0.0
      %605 = vmatprep.subr.mxu0 0.0
      %606 = vmatpush1.msra.mxu0 0.0
      %607 = vmatprep.subr.mxu0 0.0
      %608 = vmatpush1.msra.mxu0 0.0
      %609 = vmatprep.subr.mxu0 0.0
      %610 = vmatpush1.msra.mxu0 0.0
      %611 = vmatprep.subr.mxu0 0.0
      %612 = vmatpush1.msra.mxu0 0.0
      %613 = vmatprep.subr.mxu0 0.0
      %614 = vmatpush1.msra.mxu0 0.0
      %615 = vmatprep.subr.mxu0 0.0
      %616 = vmatpush1.msra.mxu0 0.0
      %617 = vmatprep.subr.mxu0 0.0
      %618 = vmatpush1.msra.mxu0 0.0
      %619 = vmatprep.subr.mxu0 0.0
      %620 = vmatpush1.msra.mxu0 0.0
      %621 = vmatprep.subr.mxu0 0.0
      %622 = vmatpush1.msra.mxu0 0.0
      %623 = vmatprep.subr.mxu0 0.0
      %624 = vmatpush1.msra.mxu0 0.0
      %625 = vmatprep.subr.mxu0 0.0
      %626 = vmatpush1.msra.mxu0 0.0
      %627 = vmatprep.mubr.f32.mxu0 0.0
      %628 = vmatmul.mubr.f32.gmra.mrb[0].mxu0 %v561
      %v629 = vpop.f32.mrb[0].mxu0
      %v630 = vadd.f32 %v558, %v629
      %v631 = vpop.f32.mrb[0].mxu0
      %v632 = vadd.f32 %v558, %v631
      %633 = vdwg.mxu0
      %634 = vmatprep.subr.mxu0 %v468
      %635 = vmatpush1.msra.mxu0 %v467
      %636 = vmatprep.subr.mxu0 %v470
      %637 = vmatpush1.msra.mxu0 %v469
      %638 = vmatprep.subr.mxu0 0.0
      %639 = vmatpush1.msra.mxu0 0.0
      %640 = vmatprep.subr.mxu0 0.0
      %641 = vmatpush1.msra.mxu0 0.0
      %642 = vmatprep.subr.mxu0 0.0
      %643 = vmatpush1.msra.mxu0 0.0
      %644 = vmatprep.subr.mxu0 0.0
      %645 = vmatpush1.msra.mxu0 0.0
      %646 = vmatprep.subr.mxu0 0.0
      %647 = vmatpush1.msra.mxu0 0.0
      %648 = vmatprep.subr.mxu0 0.0
      %649 = vmatpush1.msra.mxu0 0.0
      %650 = vmatprep.subr.mxu0 0.0
      %651 = vmatpush1.msra.mxu0 0.0
      %652 = vmatprep.subr.mxu0 0.0
      %653 = vmatpush1.msra.mxu0 0.0
      %654 = vmatprep.subr.mxu0 0.0
      %655 = vmatpush1.msra.mxu0 0.0
      %656 = vmatprep.subr.mxu0 0.0
      %657 = vmatpush1.msra.mxu0 0.0
      %658 = vmatprep.subr.mxu0 0.0
      %659 = vmatpush1.msra.mxu0 0.0
      %660 = vmatprep.subr.mxu0 0.0
      %661 = vmatpush1.msra.mxu0 0.0
      %662 = vmatprep.subr.mxu0 0.0
      %663 = vmatpush1.msra.mxu0 0.0
      %664 = vmatprep.subr.mxu0 0.0
      %665 = vmatpush1.msra.mxu0 0.0
      %666 = vmatprep.subr.mxu0 0.0
      %667 = vmatpush1.msra.mxu0 0.0
      %668 = vmatprep.subr.mxu0 0.0
      %669 = vmatpush1.msra.mxu0 0.0
      %670 = vmatprep.subr.mxu0 0.0
      %671 = vmatpush1.msra.mxu0 0.0
      %672 = vmatprep.subr.mxu0 0.0
      %673 = vmatpush1.msra.mxu0 0.0
      %674 = vmatprep.subr.mxu0 0.0
      %675 = vmatpush1.msra.mxu0 0.0
      %676 = vmatprep.subr.mxu0 0.0
      %677 = vmatpush1.msra.mxu0 0.0
      %678 = vmatprep.subr.mxu0 0.0
      %679 = vmatpush1.msra.mxu0 0.0
      %680 = vmatprep.subr.mxu0 0.0
      %681 = vmatpush1.msra.mxu0 0.0
      %682 = vmatprep.subr.mxu0 0.0
      %683 = vmatpush1.msra.mxu0 0.0
      %684 = vmatprep.subr.mxu0 0.0
      %685 = vmatpush1.msra.mxu0 0.0
      %686 = vmatprep.subr.mxu0 0.0
      %687 = vmatpush1.msra.mxu0 0.0
      %688 = vmatprep.subr.mxu0 0.0
      %689 = vmatpush1.msra.mxu0 0.0
      %690 = vmatprep.subr.mxu0 0.0
      %691 = vmatpush1.msra.mxu0 0.0
      %692 = vmatprep.subr.mxu0 0.0
      %693 = vmatpush1.msra.mxu0 0.0
      %694 = vmatprep.subr.mxu0 0.0
      %695 = vmatpush1.msra.mxu0 0.0
      %696 = vmatprep.subr.mxu0 0.0
      %697 = vmatpush1.msra.mxu0 0.0
      %698 = vmatprep.mubr.f32.mxu0 0.0
      %699 = vmatmul.mubr.f32.gmra.mrb[0].mxu0 %v480
      %v700 = vpop.f32.mrb[0].mxu0
      %v701 = vadd.f32 %v476, %v700
      %v702 = vpop.f32.mrb[0].mxu0
      %v703 = vadd.f32 %v476, %v702
      %704 = vdwg.mxu0
      %v705 = vlaneseq
      %v706 = vand.u32 %v705, 127
      %v707 = vadd.s32 %v706, 128
      %v708 = vcvt.s32.f32 %v706
      %v709 = vcvt.s32.f32 %v707
      %v710 = vadd.f32 %v708, 0.5
      %v711 = vadd.f32 %v709, 0.5
      %v712 = vmul.f32 %v710, 0.0625
      %v713 = vmul.f32 %v711, 0.0625
      %v714 = vfloor.f32 %v712
      %v715 = vfloor.f32 %v713
      %v716 = vmul.f32 %v714, 16.0
      %v717 = vmul.f32 %v715, 16.0
      %v718 = vsub.f32 %v708, %v716
      %v719 = vsub.f32 %v709, %v717
      %v720 = vld [vmem:[%s6 + $0x48] sm:$0xff]
      %722 = vset.pattern.permute.xlu0 0
      %723 = vperm.xlu0 %722, %v720
      %v724 = vpop.permute.xlu0 %723
      %v726 = vadd.f32 %v724, 0.0
      %v727 = vld [vmem:[%s6] sm:$0xff]
      %v728 = vadd.f32 %v714, -1.0
      %v729 = vadd.f32 %v715, -1.0
      %vm730 = vcmp.ge.f32.partialorder %v728, 0.0
      %vm731 = vcmp.ge.f32.partialorder %v729, 0.0
      %vm732 = vcmp.le.f32.partialorder %v728, 15.0
      %vm733 = vcmp.le.f32.partialorder %v729, 15.0
      %vm734 = vmand %vm730, %vm732
      %vm735 = vmand %vm731, %vm733
      %v736 = vadd.f32 %v718, -1.0
      %v737 = vadd.f32 %v719, -1.0
      %vm738 = vcmp.ge.f32.partialorder %v736, 0.0
      %vm739 = vcmp.ge.f32.partialorder %v737, 0.0
      %vm740 = vcmp.le.f32.partialorder %v736, 15.0
      %vm741 = vcmp.le.f32.partialorder %v737, 15.0
      %vm742 = vmand %vm738, %vm740
      %vm743 = vmand %vm739, %vm741
      %vm744 = vmand %vm734, %vm742
      %vm745 = vmand %vm735, %vm743
      %v746 = vsel %vm744, 1.0, 0.0
      %v747 = vsel %vm745, 1.0, 0.0
      %748 = vrot.lane.b32.xlu0 %v549, 17
      %v749 = vpop.permute.xlu0 %748
      %750 = vrot.lane.b32.xlu0 %v551, 17
      %v751 = vpop.permute.xlu0 %750
      %vm752 = vcmp.lt.s32.totalorder %v706, 17
      %v753 = vsel %vm752, %v749, %v751
      %v754 = vsel %vm752, %v751, %v749
      %v755 = vmul.f32 %v754, %v746
      %v756 = vmul.f32 %v753, %v747
      %vm757 = vcmask 23552
      %v759 = vsel %vm757, %v727, 0
      %vm761 = vcmask 1042432
      %v763 = vsel %vm761, %v755, 0
      %v766 = vsel %vm761, %v756, 0
      %768 = vmatprep.subr.mxu0 %v766
      %769 = vmatpush1.msra.mxu0 %v763
      %770 = vmatprep.subr.mxu0 0.0
      %771 = vmatpush1.msra.mxu0 0.0
      %772 = vmatprep.subr.mxu0 0.0
      %773 = vmatpush1.msra.mxu0 0.0
      %774 = vmatprep.subr.mxu0 0.0
      %775 = vmatpush1.msra.mxu0 0.0
      %776 = vmatprep.subr.mxu0 0.0
      %777 = vmatpush1.msra.mxu0 0.0
      %778 = vmatprep.subr.mxu0 0.0
      %779 = vmatpush1.msra.mxu0 0.0
      %780 = vmatprep.subr.mxu0 0.0
      %781 = vmatpush1.msra.mxu0 0.0
      %782 = vmatprep.subr.mxu0 0.0
      %783 = vmatpush1.msra.mxu0 0.0
      %784 = vmatprep.subr.mxu0 0.0
      %785 = vmatpush1.msra.mxu0 0.0
      %786 = vmatprep.subr.mxu0 0.0
      %787 = vmatpush1.msra.mxu0 0.0
      %788 = vmatprep.subr.mxu0 0.0
      %789 = vmatpush1.msra.mxu0 0.0
      %790 = vmatprep.subr.mxu0 0.0
      %791 = vmatpush1.msra.mxu0 0.0
      %792 = vmatprep.subr.mxu0 0.0
      %793 = vmatpush1.msra.mxu0 0.0
      %794 = vmatprep.subr.mxu0 0.0
      %795 = vmatpush1.msra.mxu0 0.0
      %796 = vmatprep.subr.mxu0 0.0
      %797 = vmatpush1.msra.mxu0 0.0
      %798 = vmatprep.subr.mxu0 0.0
      %799 = vmatpush1.msra.mxu0 0.0
      %800 = vmatprep.subr.mxu0 0.0
      %801 = vmatpush1.msra.mxu0 0.0
      %802 = vmatprep.subr.mxu0 0.0
      %803 = vmatpush1.msra.mxu0 0.0
      %804 = vmatprep.subr.mxu0 0.0
      %805 = vmatpush1.msra.mxu0 0.0
      %806 = vmatprep.subr.mxu0 0.0
      %807 = vmatpush1.msra.mxu0 0.0
      %808 = vmatprep.subr.mxu0 0.0
      %809 = vmatpush1.msra.mxu0 0.0
      %810 = vmatprep.subr.mxu0 0.0
      %811 = vmatpush1.msra.mxu0 0.0
      %812 = vmatprep.subr.mxu0 0.0
      %813 = vmatpush1.msra.mxu0 0.0
      %814 = vmatprep.subr.mxu0 0.0
      %815 = vmatpush1.msra.mxu0 0.0
      %816 = vmatprep.subr.mxu0 0.0
      %817 = vmatpush1.msra.mxu0 0.0
      %818 = vmatprep.subr.mxu0 0.0
      %819 = vmatpush1.msra.mxu0 0.0
      %820 = vmatprep.subr.mxu0 0.0
      %821 = vmatpush1.msra.mxu0 0.0
      %822 = vmatprep.subr.mxu0 0.0
      %823 = vmatpush1.msra.mxu0 0.0
      %824 = vmatprep.subr.mxu0 0.0
      %825 = vmatpush1.msra.mxu0 0.0
      %826 = vmatprep.subr.mxu0 0.0
      %827 = vmatpush1.msra.mxu0 0.0
      %828 = vmatprep.subr.mxu0 0.0
      %829 = vmatpush1.msra.mxu0 0.0
      %830 = vmatprep.subr.mxu0 0.0
      %831 = vmatpush1.msra.mxu0 0.0
      %832 = vmatprep.mubr.f32.mxu0 0.0
      %833 = vmatmul.mubr.f32.gmra.mrb[0].mxu0 %v759
      %v834 = vpop.f32.mrb[0].mxu0
      %v835 = vadd.f32 0.0, %v834
      %v836 = vpop.f32.mrb[0].mxu0
      %v837 = vadd.f32 0.0, %v836
      %838 = vdwg.mxu0
      %v839 = vadd.f32 %v726, %v835
      %v840 = vadd.f32 %v726, %v837
      %841 = vrot.lane.b32.xlu0 %v630, 17
      %v842 = vpop.permute.xlu0 %841
      %843 = vrot.lane.b32.xlu0 %v632, 17
      %v844 = vpop.permute.xlu0 %843
      %v845 = vsel %vm752, %v842, %v844
      %v846 = vsel %vm752, %v844, %v842
      %v847 = vmul.f32 %v846, %v746
      %v848 = vmul.f32 %v845, %v747
      %v850 = vsel %vm761, %v847, 0
      %v853 = vsel %vm761, %v848, 0
      %855 = vmatprep.subr.mxu0 %v853
      %856 = vmatpush1.msra.mxu0 %v850
      %857 = vmatprep.subr.mxu0 0.0
      %858 = vmatpush1.msra.mxu0 0.0
      %859 = vmatprep.subr.mxu0 0.0
      %860 = vmatpush1.msra.mxu0 0.0
      %861 = vmatprep.subr.mxu0 0.0
      %862 = vmatpush1.msra.mxu0 0.0
      %863 = vmatprep.subr.mxu0 0.0
      %864 = vmatpush1.msra.mxu0 0.0
      %865 = vmatprep.subr.mxu0 0.0
      %866 = vmatpush1.msra.mxu0 0.0
      %867 = vmatprep.subr.mxu0 0.0
      %868 = vmatpush1.msra.mxu0 0.0
      %869 = vmatprep.subr.mxu0 0.0
      %870 = vmatpush1.msra.mxu0 0.0
      %871 = vmatprep.subr.mxu0 0.0
      %872 = vmatpush1.msra.mxu0 0.0
      %873 = vmatprep.subr.mxu0 0.0
      %874 = vmatpush1.msra.mxu0 0.0
      %875 = vmatprep.subr.mxu0 0.0
      %876 = vmatpush1.msra.mxu0 0.0
      %877 = vmatprep.subr.mxu0 0.0
      %878 = vmatpush1.msra.mxu0 0.0
      %879 = vmatprep.subr.mxu0 0.0
      %880 = vmatpush1.msra.mxu0 0.0
      %881 = vmatprep.subr.mxu0 0.0
      %882 = vmatpush1.msra.mxu0 0.0
      %883 = vmatprep.subr.mxu0 0.0
      %884 = vmatpush1.msra.mxu0 0.0
      %885 = vmatprep.subr.mxu0 0.0
      %886 = vmatpush1.msra.mxu0 0.0
      %887 = vmatprep.subr.mxu0 0.0
      %888 = vmatpush1.msra.mxu0 0.0
      %889 = vmatprep.subr.mxu0 0.0
      %890 = vmatpush1.msra.mxu0 0.0
      %891 = vmatprep.subr.mxu0 0.0
      %892 = vmatpush1.msra.mxu0 0.0
      %893 = vmatprep.subr.mxu0 0.0
      %894 = vmatpush1.msra.mxu0 0.0
      %895 = vmatprep.subr.mxu0 0.0
      %896 = vmatpush1.msra.mxu0 0.0
      %897 = vmatprep.subr.mxu0 0.0
      %898 = vmatpush1.msra.mxu0 0.0
      %899 = vmatprep.subr.mxu0 0.0
      %900 = vmatpush1.msra.mxu0 0.0
      %901 = vmatprep.subr.mxu0 0.0
      %902 = vmatpush1.msra.mxu0 0.0
      %903 = vmatprep.subr.mxu0 0.0
      %904 = vmatpush1.msra.mxu0 0.0
      %905 = vmatprep.subr.mxu0 0.0
      %906 = vmatpush1.msra.mxu0 0.0
      %907 = vmatprep.subr.mxu0 0.0
      %908 = vmatpush1.msra.mxu0 0.0
      %909 = vmatprep.subr.mxu0 0.0
      %910 = vmatpush1.msra.mxu0 0.0
      %911 = vmatprep.subr.mxu0 0.0
      %912 = vmatpush1.msra.mxu0 0.0
      %913 = vmatprep.subr.mxu0 0.0
      %914 = vmatpush1.msra.mxu0 0.0
      %915 = vmatprep.subr.mxu0 0.0
      %916 = vmatpush1.msra.mxu0 0.0
      %917 = vmatprep.subr.mxu0 0.0
      %918 = vmatpush1.msra.mxu0 0.0
      %919 = vmatprep.mubr.f32.mxu0 0.0
      %920 = vmatmul.mubr.f32.gmra.mrb[0].mxu0 %v759
      %v921 = vpop.f32.mrb[0].mxu0
      %v922 = vadd.f32 0.0, %v921
      %v923 = vpop.f32.mrb[0].mxu0
      %v924 = vadd.f32 0.0, %v923
      %925 = vdwg.mxu0
      %v926 = vadd.f32 %v726, %v922
      %v927 = vadd.f32 %v726, %v924
      %v928 = vld [vmem:[%s6 + $0x8] sm:$0xff]
      %v929 = vadd.f32 %v718, 0.0
      %v930 = vadd.f32 %v719, 0.0
      %vm931 = vcmp.ge.f32.partialorder %v929, 0.0
      %vm932 = vcmp.ge.f32.partialorder %v930, 0.0
      %vm933 = vcmp.le.f32.partialorder %v929, 15.0
      %vm934 = vcmp.le.f32.partialorder %v930, 15.0
      %vm935 = vmand %vm931, %vm933
      %vm936 = vmand %vm932, %vm934
      %vm937 = vmand %vm734, %vm935
      %vm938 = vmand %vm735, %vm936
      %v939 = vsel %vm937, 1.0, 0.0
      %v940 = vsel %vm938, 1.0, 0.0
      %941 = vrot.lane.b32.xlu0 %v549, 16
      %v942 = vpop.permute.xlu0 %941
      %943 = vrot.lane.b32.xlu0 %v551, 16
      %v944 = vpop.permute.xlu0 %943
      %vm945 = vcmp.lt.s32.totalorder %v706, 16
      %v946 = vsel %vm945, %v942, %v944
      %v947 = vsel %vm945, %v944, %v942
      %v948 = vmul.f32 %v947, %v939
      %v949 = vmul.f32 %v946, %v940
      %v951 = vsel %vm757, %v928, 0
      %v954 = vsel %vm761, %v948, 0
      %v957 = vsel %vm761, %v949, 0
      %959 = vmatprep.subr.mxu0 %v957
      %960 = vmatpush1.msra.mxu0 %v954
      %961 = vmatprep.subr.mxu0 0.0
      %962 = vmatpush1.msra.mxu0 0.0
      %963 = vmatprep.subr.mxu0 0.0
      %964 = vmatpush1.msra.mxu0 0.0
      %965 = vmatprep.subr.mxu0 0.0
      %966 = vmatpush1.msra.mxu0 0.0
      %967 = vmatprep.subr.mxu0 0.0
      %968 = vmatpush1.msra.mxu0 0.0
      %969 = vmatprep.subr.mxu0 0.0
      %970 = vmatpush1.msra.mxu0 0.0
      %971 = vmatprep.subr.mxu0 0.0
      %972 = vmatpush1.msra.mxu0 0.0
      %973 = vmatprep.subr.mxu0 0.0
      %974 = vmatpush1.msra.mxu0 0.0
      %975 = vmatprep.subr.mxu0 0.0
      %976 = vmatpush1.msra.mxu0 0.0
      %977 = vmatprep.subr.mxu0 0.0
      %978 = vmatpush1.msra.mxu0 0.0
      %979 = vmatprep.subr.mxu0 0.0
      %980 = vmatpush1.msra.mxu0 0.0
      %981 = vmatprep.subr.mxu0 0.0
      %982 = vmatpush1.msra.mxu0 0.0
      %983 = vmatprep.subr.mxu0 0.0
      %984 = vmatpush1.msra.mxu0 0.0
      %985 = vmatprep.subr.mxu0 0.0
      %986 = vmatpush1.msra.mxu0 0.0
      %987 = vmatprep.subr.mxu0 0.0
      %988 = vmatpush1.msra.mxu0 0.0
      %989 = vmatprep.subr.mxu0 0.0
      %990 = vmatpush1.msra.mxu0 0.0
      %991 = vmatprep.subr.mxu0 0.0
      %992 = vmatpush1.msra.mxu0 0.0
      %993 = vmatprep.subr.mxu0 0.0
      %994 = vmatpush1.msra.mxu0 0.0
      %995 = vmatprep.subr.mxu0 0.0
      %996 = vmatpush1.msra.mxu0 0.0
      %997 = vmatprep.subr.mxu0 0.0
      %998 = vmatpush1.msra.mxu0 0.0
      %999 = vmatprep.subr.mxu0 0.0
      %1000 = vmatpush1.msra.mxu0 0.0
      %1001 = vmatprep.subr.mxu0 0.0
      %1002 = vmatpush1.msra.mxu0 0.0
      %1003 = vmatprep.subr.mxu0 0.0
      %1004 = vmatpush1.msra.mxu0 0.0
      %1005 = vmatprep.subr.mxu0 0.0
      %1006 = vmatpush1.msra.mxu0 0.0
      %1007 = vmatprep.subr.mxu0 0.0
      %1008 = vmatpush1.msra.mxu0 0.0
      %1009 = vmatprep.subr.mxu0 0.0
      %1010 = vmatpush1.msra.mxu0 0.0
      %1011 = vmatprep.subr.mxu0 0.0
      %1012 = vmatpush1.msra.mxu0 0.0
      %1013 = vmatprep.subr.mxu0 0.0
      %1014 = vmatpush1.msra.mxu0 0.0
      %1015 = vmatprep.subr.mxu0 0.0
      %1016 = vmatpush1.msra.mxu0 0.0
      %1017 = vmatprep.subr.mxu0 0.0
      %1018 = vmatpush1.msra.mxu0 0.0
      %1019 = vmatprep.subr.mxu0 0.0
      %1020 = vmatpush1.msra.mxu0 0.0
      %1021 = vmatprep.subr.mxu0 0.0
      %1022 = vmatpush1.msra.mxu0 0.0
      %1023 = vmatprep.mubr.f32.mxu0 0.0
      %1024 = vmatmul.mubr.f32.gmra.mrb[0].mxu0 %v951
      %v1025 = vpop.f32.mrb[0].mxu0
      %v1026 = vadd.f32 0.0, %v1025
      %v1027 = vpop.f32.mrb[0].mxu0
      %v1028 = vadd.f32 0.0, %v1027
      %1029 = vdwg.mxu0
      %v1030 = vadd.f32 %v839, %v1026
      %v1031 = vadd.f32 %v840, %v1028
      %1032 = vrot.lane.b32.xlu0 %v630, 16
      %v1033 = vpop.permute.xlu0 %1032
      %1034 = vrot.lane.b32.xlu0 %v632, 16
      %v1035 = vpop.permute.xlu0 %1034
      %v1036 = vsel %vm945, %v1033, %v1035
      %v1037 = vsel %vm945, %v1035, %v1033
      %v1038 = vmul.f32 %v1037, %v939
      %v1039 = vmul.f32 %v1036, %v940
      %v1041 = vsel %vm761, %v1038, 0
      %v1044 = vsel %vm761, %v1039, 0
      %1046 = vmatprep.subr.mxu0 %v1044
      %1047 = vmatpush1.msra.mxu0 %v1041
      %1048 = vmatprep.subr.mxu0 0.0
      %1049 = vmatpush1.msra.mxu0 0.0
      %1050 = vmatprep.subr.mxu0 0.0
      %1051 = vmatpush1.msra.mxu0 0.0
      %1052 = vmatprep.subr.mxu0 0.0
      %1053 = vmatpush1.msra.mxu0 0.0
      %1054 = vmatprep.subr.mxu0 0.0
      %1055 = vmatpush1.msra.mxu0 0.0
      %1056 = vmatprep.subr.mxu0 0.0
      %1057 = vmatpush1.msra.mxu0 0.0
      %1058 = vmatprep.subr.mxu0 0.0
      %1059 = vmatpush1.msra.mxu0 0.0
      %1060 = vmatprep.subr.mxu0 0.0
      %1061 = vmatpush1.msra.mxu0 0.0
      %1062 = vmatprep.subr.mxu0 0.0
      %1063 = vmatpush1.msra.mxu0 0.0
      %1064 = vmatprep.subr.mxu0 0.0
      %1065 = vmatpush1.msra.mxu0 0.0
      %1066 = vmatprep.subr.mxu0 0.0
      %1067 = vmatpush1.msra.mxu0 0.0
      %1068 = vmatprep.subr.mxu0 0.0
      %1069 = vmatpush1.msra.mxu0 0.0
      %1070 = vmatprep.subr.mxu0 0.0
      %1071 = vmatpush1.msra.mxu0 0.0
      %1072 = vmatprep.subr.mxu0 0.0
      %1073 = vmatpush1.msra.mxu0 0.0
      %1074 = vmatprep.subr.mxu0 0.0
      %1075 = vmatpush1.msra.mxu0 0.0
      %1076 = vmatprep.subr.mxu0 0.0
      %1077 = vmatpush1.msra.mxu0 0.0
      %1078 = vmatprep.subr.mxu0 0.0
      %1079 = vmatpush1.msra.mxu0 0.0
      %1080 = vmatprep.subr.mxu0 0.0
      %1081 = vmatpush1.msra.mxu0 0.0
      %1082 = vmatprep.subr.mxu0 0.0
      %1083 = vmatpush1.msra.mxu0 0.0
      %1084 = vmatprep.subr.mxu0 0.0
      %1085 = vmatpush1.msra.mxu0 0.0
      %1086 = vmatprep.subr.mxu0 0.0
      %1087 = vmatpush1.msra.mxu0 0.0
      %1088 = vmatprep.subr.mxu0 0.0
      %1089 = vmatpush1.msra.mxu0 0.0
      %1090 = vmatprep.subr.mxu0 0.0
      %1091 = vmatpush1.msra.mxu0 0.0
      %1092 = vmatprep.subr.mxu0 0.0
      %1093 = vmatpush1.msra.mxu0 0.0
      %1094 = vmatprep.subr.mxu0 0.0
      %1095 = vmatpush1.msra.mxu0 0.0
      %1096 = vmatprep.subr.mxu0 0.0
      %1097 = vmatpush1.msra.mxu0 0.0
      %1098 = vmatprep.subr.mxu0 0.0
      %1099 = vmatpush1.msra.mxu0 0.0
      %1100 = vmatprep.subr.mxu0 0.0
      %1101 = vmatpush1.msra.mxu0 0.0
      %1102 = vmatprep.subr.mxu0 0.0
      %1103 = vmatpush1.msra.mxu0 0.0
      %1104 = vmatprep.subr.mxu0 0.0
      %1105 = vmatpush1.msra.mxu0 0.0
      %1106 = vmatprep.subr.mxu0 0.0
      %1107 = vmatpush1.msra.mxu0 0.0
      %1108 = vmatprep.subr.mxu0 0.0
      %1109 = vmatpush1.msra.mxu0 0.0
      %1110 = vmatprep.mubr.f32.mxu0 0.0
      %1111 = vmatmul.mubr.f32.gmra.mrb[0].mxu0 %v951
      %v1112 = vpop.f32.mrb[0].mxu0
      %v1113 = vadd.f32 0.0, %v1112
      %v1114 = vpop.f32.mrb[0].mxu0
      %v1115 = vadd.f32 0.0, %v1114
      %1116 = vdwg.mxu0
      %v1117 = vadd.f32 %v926, %v1113
      %v1118 = vadd.f32 %v927, %v1115
      %v1119 = vld [vmem:[%s6 + $0x10] sm:$0xff]
      %v1120 = vadd.f32 %v718, 1.0
      %v1121 = vadd.f32 %v719, 1.0
      %vm1122 = vcmp.ge.f32.partialorder %v1120, 0.0
      %vm1123 = vcmp.ge.f32.partialorder %v1121, 0.0
      %vm1124 = vcmp.le.f32.partialorder %v1120, 15.0
      %vm1125 = vcmp.le.f32.partialorder %v1121, 15.0
      %vm1126 = vmand %vm1122, %vm1124
      %vm1127 = vmand %vm1123, %vm1125
      %vm1128 = vmand %vm734, %vm1126
      %vm1129 = vmand %vm735, %vm1127
      %v1130 = vsel %vm1128, 1.0, 0.0
      %v1131 = vsel %vm1129, 1.0, 0.0
      %1132 = vrot.lane.b32.xlu0 %v549, 15
      %v1133 = vpop.permute.xlu0 %1132
      %1134 = vrot.lane.b32.xlu0 %v551, 15
      %v1135 = vpop.permute.xlu0 %1134
      %vm1136 = vcmp.lt.s32.totalorder %v706, 15
      %v1137 = vsel %vm1136, %v1133, %v1135
      %v1138 = vsel %vm1136, %v1135, %v1133
      %v1139 = vmul.f32 %v1138, %v1130
      %v1140 = vmul.f32 %v1137, %v1131
      %v1142 = vsel %vm757, %v1119, 0
      %v1145 = vsel %vm761, %v1139, 0
      %v1148 = vsel %vm761, %v1140, 0
      %1150 = vmatprep.subr.mxu0 %v1148
      %1151 = vmatpush1.msra.mxu0 %v1145
      %1152 = vmatprep.subr.mxu0 0.0
      %1153 = vmatpush1.msra.mxu0 0.0
      %1154 = vmatprep.subr.mxu0 0.0
      %1155 = vmatpush1.msra.mxu0 0.0
      %1156 = vmatprep.subr.mxu0 0.0
      %1157 = vmatpush1.msra.mxu0 0.0
      %1158 = vmatprep.subr.mxu0 0.0
      %1159 = vmatpush1.msra.mxu0 0.0
      %1160 = vmatprep.subr.mxu0 0.0
      %1161 = vmatpush1.msra.mxu0 0.0
      %1162 = vmatprep.subr.mxu0 0.0
      %1163 = vmatpush1.msra.mxu0 0.0
      %1164 = vmatprep.subr.mxu0 0.0
      %1165 = vmatpush1.msra.mxu0 0.0
      %1166 = vmatprep.subr.mxu0 0.0
      %1167 = vmatpush1.msra.mxu0 0.0
      %1168 = vmatprep.subr.mxu0 0.0
      %1169 = vmatpush1.msra.mxu0 0.0
      %1170 = vmatprep.subr.mxu0 0.0
      %1171 = vmatpush1.msra.mxu0 0.0
      %1172 = vmatprep.subr.mxu0 0.0
      %1173 = vmatpush1.msra.mxu0 0.0
      %1174 = vmatprep.subr.mxu0 0.0
      %1175 = vmatpush1.msra.mxu0 0.0
      %1176 = vmatprep.subr.mxu0 0.0
      %1177 = vmatpush1.msra.mxu0 0.0
      %1178 = vmatprep.subr.mxu0 0.0
      %1179 = vmatpush1.msra.mxu0 0.0
      %1180 = vmatprep.subr.mxu0 0.0
      %1181 = vmatpush1.msra.mxu0 0.0
      %1182 = vmatprep.subr.mxu0 0.0
      %1183 = vmatpush1.msra.mxu0 0.0
      %1184 = vmatprep.subr.mxu0 0.0
      %1185 = vmatpush1.msra.mxu0 0.0
      %1186 = vmatprep.subr.mxu0 0.0
      %1187 = vmatpush1.msra.mxu0 0.0
      %1188 = vmatprep.subr.mxu0 0.0
      %1189 = vmatpush1.msra.mxu0 0.0
      %1190 = vmatprep.subr.mxu0 0.0
      %1191 = vmatpush1.msra.mxu0 0.0
      %1192 = vmatprep.subr.mxu0 0.0
      %1193 = vmatpush1.msra.mxu0 0.0
      %1194 = vmatprep.subr.mxu0 0.0
      %1195 = vmatpush1.msra.mxu0 0.0
      %1196 = vmatprep.subr.mxu0 0.0
      %1197 = vmatpush1.msra.mxu0 0.0
      %1198 = vmatprep.subr.mxu0 0.0
      %1199 = vmatpush1.msra.mxu0 0.0
      %1200 = vmatprep.subr.mxu0 0.0
      %1201 = vmatpush1.msra.mxu0 0.0
      %1202 = vmatprep.subr.mxu0 0.0
      %1203 = vmatpush1.msra.mxu0 0.0
      %1204 = vmatprep.subr.mxu0 0.0
      %1205 = vmatpush1.msra.mxu0 0.0
      %1206 = vmatprep.subr.mxu0 0.0
      %1207 = vmatpush1.msra.mxu0 0.0
      %1208 = vmatprep.subr.mxu0 0.0
      %1209 = vmatpush1.msra.mxu0 0.0
      %1210 = vmatprep.subr.mxu0 0.0
      %1211 = vmatpush1.msra.mxu0 0.0
      %1212 = vmatprep.subr.mxu0 0.0
      %1213 = vmatpush1.msra.mxu0 0.0
      %1214 = vmatprep.mubr.f32.mxu0 0.0
      %1215 = vmatmul.mubr.f32.gmra.mrb[0].mxu0 %v1142
      %v1216 = vpop.f32.mrb[0].mxu0
      %v1217 = vadd.f32 0.0, %v1216
      %v1218 = vpop.f32.mrb[0].mxu0
      %v1219 = vadd.f32 0.0, %v1218
      %1220 = vdwg.mxu0
      %v1221 = vadd.f32 %v1030, %v1217
      %v1222 = vadd.f32 %v1031, %v1219
      %1223 = vrot.lane.b32.xlu0 %v630, 15
      %v1224 = vpop.permute.xlu0 %1223
      %1225 = vrot.lane.b32.xlu0 %v632, 15
      %v1226 = vpop.permute.xlu0 %1225
      %v1227 = vsel %vm1136, %v1224, %v1226
      %v1228 = vsel %vm1136, %v1226, %v1224
      %v1229 = vmul.f32 %v1228, %v1130
      %v1230 = vmul.f32 %v1227, %v1131
      %v1232 = vsel %vm761, %v1229, 0
      %v1235 = vsel %vm761, %v1230, 0
      %1237 = vmatprep.subr.mxu0 %v1235
      %1238 = vmatpush1.msra.mxu0 %v1232
      %1239 = vmatprep.subr.mxu0 0.0
      %1240 = vmatpush1.msra.mxu0 0.0
      %1241 = vmatprep.subr.mxu0 0.0
      %1242 = vmatpush1.msra.mxu0 0.0
      %1243 = vmatprep.subr.mxu0 0.0
      %1244 = vmatpush1.msra.mxu0 0.0
      %1245 = vmatprep.subr.mxu0 0.0
      %1246 = vmatpush1.msra.mxu0 0.0
      %1247 = vmatprep.subr.mxu0 0.0
      %1248 = vmatpush1.msra.mxu0 0.0
      %1249 = vmatprep.subr.mxu0 0.0
      %1250 = vmatpush1.msra.mxu0 0.0
      %1251 = vmatprep.subr.mxu0 0.0
      %1252 = vmatpush1.msra.mxu0 0.0
      %1253 = vmatprep.subr.mxu0 0.0
      %1254 = vmatpush1.msra.mxu0 0.0
      %1255 = vmatprep.subr.mxu0 0.0
      %1256 = vmatpush1.msra.mxu0 0.0
      %1257 = vmatprep.subr.mxu0 0.0
      %1258 = vmatpush1.msra.mxu0 0.0
      %1259 = vmatprep.subr.mxu0 0.0
      %1260 = vmatpush1.msra.mxu0 0.0
      %1261 = vmatprep.subr.mxu0 0.0
      %1262 = vmatpush1.msra.mxu0 0.0
      %1263 = vmatprep.subr.mxu0 0.0
      %1264 = vmatpush1.msra.mxu0 0.0
      %1265 = vmatprep.subr.mxu0 0.0
      %1266 = vmatpush1.msra.mxu0 0.0
      %1267 = vmatprep.subr.mxu0 0.0
      %1268 = vmatpush1.msra.mxu0 0.0
      %1269 = vmatprep.subr.mxu0 0.0
      %1270 = vmatpush1.msra.mxu0 0.0
      %1271 = vmatprep.subr.mxu0 0.0
      %1272 = vmatpush1.msra.mxu0 0.0
      %1273 = vmatprep.subr.mxu0 0.0
      %1274 = vmatpush1.msra.mxu0 0.0
      %1275 = vmatprep.subr.mxu0 0.0
      %1276 = vmatpush1.msra.mxu0 0.0
      %1277 = vmatprep.subr.mxu0 0.0
      %1278 = vmatpush1.msra.mxu0 0.0
      %1279 = vmatprep.subr.mxu0 0.0
      %1280 = vmatpush1.msra.mxu0 0.0
      %1281 = vmatprep.subr.mxu0 0.0
      %1282 = vmatpush1.msra.mxu0 0.0
      %1283 = vmatprep.subr.mxu0 0.0
      %1284 = vmatpush1.msra.mxu0 0.0
      %1285 = vmatprep.subr.mxu0 0.0
      %1286 = vmatpush1.msra.mxu0 0.0
      %1287 = vmatprep.subr.mxu0 0.0
      %1288 = vmatpush1.msra.mxu0 0.0
      %1289 = vmatprep.subr.mxu0 0.0
      %1290 = vmatpush1.msra.mxu0 0.0
      %1291 = vmatprep.subr.mxu0 0.0
      %1292 = vmatpush1.msra.mxu0 0.0
      %1293 = vmatprep.subr.mxu0 0.0
      %1294 = vmatpush1.msra.mxu0 0.0
      %1295 = vmatprep.subr.mxu0 0.0
      %1296 = vmatpush1.msra.mxu0 0.0
      %1297 = vmatprep.subr.mxu0 0.0
      %1298 = vmatpush1.msra.mxu0 0.0
      %1299 = vmatprep.subr.mxu0 0.0
      %1300 = vmatpush1.msra.mxu0 0.0
      %1301 = vmatprep.mubr.f32.mxu0 0.0
      %1302 = vmatmul.mubr.f32.gmra.mrb[0].mxu0 %v1142
      %v1303 = vpop.f32.mrb[0].mxu0
      %v1304 = vadd.f32 0.0, %v1303
      %v1305 = vpop.f32.mrb[0].mxu0
      %v1306 = vadd.f32 0.0, %v1305
      %1307 = vdwg.mxu0
      %v1308 = vadd.f32 %v1117, %v1304
      %v1309 = vadd.f32 %v1118, %v1306
      %v1310 = vld [vmem:[%s6 + $0x18] sm:$0xff]
      %v1311 = vadd.f32 %v714, 0.0
      %v1312 = vadd.f32 %v715, 0.0
      %vm1313 = vcmp.ge.f32.partialorder %v1311, 0.0
      %vm1314 = vcmp.ge.f32.partialorder %v1312, 0.0
      %vm1315 = vcmp.le.f32.partialorder %v1311, 15.0
      %vm1316 = vcmp.le.f32.partialorder %v1312, 15.0
      %vm1317 = vmand %vm1313, %vm1315
      %vm1318 = vmand %vm1314, %vm1316
      %vm1319 = vmand %vm1317, %vm742
      %vm1320 = vmand %vm1318, %vm743
      %v1321 = vsel %vm1319, 1.0, 0.0
      %v1322 = vsel %vm1320, 1.0, 0.0
      %1323 = vrot.lane.b32.xlu0 %v549, 1
      %v1324 = vpop.permute.xlu0 %1323
      %1325 = vrot.lane.b32.xlu0 %v551, 1
      %v1326 = vpop.permute.xlu0 %1325
      %vm1327 = vcmp.lt.s32.totalorder %v706, 1
      %v1328 = vsel %vm1327, %v1324, %v1326
      %v1329 = vsel %vm1327, %v1326, %v1324
      %v1330 = vmul.f32 %v1329, %v1321
      %v1331 = vmul.f32 %v1328, %v1322
      %v1333 = vsel %vm757, %v1310, 0
      %v1336 = vsel %vm761, %v1330, 0
      %v1339 = vsel %vm761, %v1331, 0
      %1341 = vmatprep.subr.mxu0 %v1339
      %1342 = vmatpush1.msra.mxu0 %v1336
      %1343 = vmatprep.subr.mxu0 0.0
      %1344 = vmatpush1.msra.mxu0 0.0
      %1345 = vmatprep.subr.mxu0 0.0
      %1346 = vmatpush1.msra.mxu0 0.0
      %1347 = vmatprep.subr.mxu0 0.0
      %1348 = vmatpush1.msra.mxu0 0.0
      %1349 = vmatprep.subr.mxu0 0.0
      %1350 = vmatpush1.msra.mxu0 0.0
      %1351 = vmatprep.subr.mxu0 0.0
      %1352 = vmatpush1.msra.mxu0 0.0
      %1353 = vmatprep.subr.mxu0 0.0
      %1354 = vmatpush1.msra.mxu0 0.0
      %1355 = vmatprep.subr.mxu0 0.0
      %1356 = vmatpush1.msra.mxu0 0.0
      %1357 = vmatprep.subr.mxu0 0.0
      %1358 = vmatpush1.msra.mxu0 0.0
      %1359 = vmatprep.subr.mxu0 0.0
      %1360 = vmatpush1.msra.mxu0 0.0
      %1361 = vmatprep.subr.mxu0 0.0
      %1362 = vmatpush1.msra.mxu0 0.0
      %1363 = vmatprep.subr.mxu0 0.0
      %1364 = vmatpush1.msra.mxu0 0.0
      %1365 = vmatprep.subr.mxu0 0.0
      %1366 = vmatpush1.msra.mxu0 0.0
      %1367 = vmatprep.subr.mxu0 0.0
      %1368 = vmatpush1.msra.mxu0 0.0
      %1369 = vmatprep.subr.mxu0 0.0
      %1370 = vmatpush1.msra.mxu0 0.0
      %1371 = vmatprep.subr.mxu0 0.0
      %1372 = vmatpush1.msra.mxu0 0.0
      %1373 = vmatprep.subr.mxu0 0.0
      %1374 = vmatpush1.msra.mxu0 0.0
      %1375 = vmatprep.subr.mxu0 0.0
      %1376 = vmatpush1.msra.mxu0 0.0
      %1377 = vmatprep.subr.mxu0 0.0
      %1378 = vmatpush1.msra.mxu0 0.0
      %1379 = vmatprep.subr.mxu0 0.0
      %1380 = vmatpush1.msra.mxu0 0.0
      %1381 = vmatprep.subr.mxu0 0.0
      %1382 = vmatpush1.msra.mxu0 0.0
      %1383 = vmatprep.subr.mxu0 0.0
      %1384 = vmatpush1.msra.mxu0 0.0
      %1385 = vmatprep.subr.mxu0 0.0
      %1386 = vmatpush1.msra.mxu0 0.0
      %1387 = vmatprep.subr.mxu0 0.0
      %1388 = vmatpush1.msra.mxu0 0.0
      %1389 = vmatprep.subr.mxu0 0.0
      %1390 = vmatpush1.msra.mxu0 0.0
      %1391 = vmatprep.subr.mxu0 0.0
      %1392 = vmatpush1.msra.mxu0 0.0
      %1393 = vmatprep.subr.mxu0 0.0
      %1394 = vmatpush1.msra.mxu0 0.0
      %1395 = vmatprep.subr.mxu0 0.0
      %1396 = vmatpush1.msra.mxu0 0.0
      %1397 = vmatprep.subr.mxu0 0.0
      %1398 = vmatpush1.msra.mxu0 0.0
      %1399 = vmatprep.subr.mxu0 0.0
      %1400 = vmatpush1.msra.mxu0 0.0
      %1401 = vmatprep.subr.mxu0 0.0
      %1402 = vmatpush1.msra.mxu0 0.0
      %1403 = vmatprep.subr.mxu0 0.0
      %1404 = vmatpush1.msra.mxu0 0.0
      %1405 = vmatprep.mubr.f32.mxu0 0.0
      %1406 = vmatmul.mubr.f32.gmra.mrb[0].mxu0 %v1333
      %v1407 = vpop.f32.mrb[0].mxu0
      %v1408 = vadd.f32 0.0, %v1407
      %v1409 = vpop.f32.mrb[0].mxu0
      %v1410 = vadd.f32 0.0, %v1409
      %1411 = vdwg.mxu0
      %v1412 = vadd.f32 %v1221, %v1408
      %v1413 = vadd.f32 %v1222, %v1410
      %1414 = vrot.lane.b32.xlu0 %v630, 1
      %v1415 = vpop.permute.xlu0 %1414
      %1416 = vrot.lane.b32.xlu0 %v632, 1
      %v1417 = vpop.permute.xlu0 %1416
      %v1418 = vsel %vm1327, %v1415, %v1417
      %v1419 = vsel %vm1327, %v1417, %v1415
      %v1420 = vmul.f32 %v1419, %v1321
      %v1421 = vmul.f32 %v1418, %v1322
      %v1423 = vsel %vm761, %v1420, 0
      %v1426 = vsel %vm761, %v1421, 0
      %1428 = vmatprep.subr.mxu0 %v1426
      %1429 = vmatpush1.msra.mxu0 %v1423
      %1430 = vmatprep.subr.mxu0 0.0
      %1431 = vmatpush1.msra.mxu0 0.0
      %1432 = vmatprep.subr.mxu0 0.0
      %1433 = vmatpush1.msra.mxu0 0.0
      %1434 = vmatprep.subr.mxu0 0.0
      %1435 = vmatpush1.msra.mxu0 0.0
      %1436 = vmatprep.subr.mxu0 0.0
      %1437 = vmatpush1.msra.mxu0 0.0
      %1438 = vmatprep.subr.mxu0 0.0
      %1439 = vmatpush1.msra.mxu0 0.0
      %1440 = vmatprep.subr.mxu0 0.0
      %1441 = vmatpush1.msra.mxu0 0.0
      %1442 = vmatprep.subr.mxu0 0.0
      %1443 = vmatpush1.msra.mxu0 0.0
      %1444 = vmatprep.subr.mxu0 0.0
      %1445 = vmatpush1.msra.mxu0 0.0
      %1446 = vmatprep.subr.mxu0 0.0
      %1447 = vmatpush1.msra.mxu0 0.0
      %1448 = vmatprep.subr.mxu0 0.0
      %1449 = vmatpush1.msra.mxu0 0.0
      %1450 = vmatprep.subr.mxu0 0.0
      %1451 = vmatpush1.msra.mxu0 0.0
      %1452 = vmatprep.subr.mxu0 0.0
      %1453 = vmatpush1.msra.mxu0 0.0
      %1454 = vmatprep.subr.mxu0 0.0
      %1455 = vmatpush1.msra.mxu0 0.0
      %1456 = vmatprep.subr.mxu0 0.0
      %1457 = vmatpush1.msra.mxu0 0.0
      %1458 = vmatprep.subr.mxu0 0.0
      %1459 = vmatpush1.msra.mxu0 0.0
      %1460 = vmatprep.subr.mxu0 0.0
      %1461 = vmatpush1.msra.mxu0 0.0
      %1462 = vmatprep.subr.mxu0 0.0
      %1463 = vmatpush1.msra.mxu0 0.0
      %1464 = vmatprep.subr.mxu0 0.0
      %1465 = vmatpush1.msra.mxu0 0.0
      %1466 = vmatprep.subr.mxu0 0.0
      %1467 = vmatpush1.msra.mxu0 0.0
      %1468 = vmatprep.subr.mxu0 0.0
      %1469 = vmatpush1.msra.mxu0 0.0
      %1470 = vmatprep.subr.mxu0 0.0
      %1471 = vmatpush1.msra.mxu0 0.0
      %1472 = vmatprep.subr.mxu0 0.0
      %1473 = vmatpush1.msra.mxu0 0.0
      %1474 = vmatprep.subr.mxu0 0.0
      %1475 = vmatpush1.msra.mxu0 0.0
      %1476 = vmatprep.subr.mxu0 0.0
      %1477 = vmatpush1.msra.mxu0 0.0
      %1478 = vmatprep.subr.mxu0 0.0
      %1479 = vmatpush1.msra.mxu0 0.0
      %1480 = vmatprep.subr.mxu0 0.0
      %1481 = vmatpush1.msra.mxu0 0.0
      %1482 = vmatprep.subr.mxu0 0.0
      %1483 = vmatpush1.msra.mxu0 0.0
      %1484 = vmatprep.subr.mxu0 0.0
      %1485 = vmatpush1.msra.mxu0 0.0
      %1486 = vmatprep.subr.mxu0 0.0
      %1487 = vmatpush1.msra.mxu0 0.0
      %1488 = vmatprep.subr.mxu0 0.0
      %1489 = vmatpush1.msra.mxu0 0.0
      %1490 = vmatprep.subr.mxu0 0.0
      %1491 = vmatpush1.msra.mxu0 0.0
      %1492 = vmatprep.mubr.f32.mxu0 0.0
      %1493 = vmatmul.mubr.f32.gmra.mrb[0].mxu0 %v1333
      %v1494 = vpop.f32.mrb[0].mxu0
      %v1495 = vadd.f32 0.0, %v1494
      %v1496 = vpop.f32.mrb[0].mxu0
      %v1497 = vadd.f32 0.0, %v1496
      %1498 = vdwg.mxu0
      %v1499 = vadd.f32 %v1308, %v1495
      %v1500 = vadd.f32 %v1309, %v1497
      %v1501 = vld [vmem:[%s6 + $0x20] sm:$0xff]
      %vm1502 = vmand %vm1317, %vm935
      %vm1503 = vmand %vm1318, %vm936
      %v1504 = vsel %vm1502, 1.0, 0.0
      %v1505 = vsel %vm1503, 1.0, 0.0
      %v1506 = vmul.f32 %v549, %v1504
      %v1507 = vmul.f32 %v551, %v1505
      %v1509 = vsel %vm757, %v1501, 0
      %v1512 = vsel %vm761, %v1506, 0
      %v1515 = vsel %vm761, %v1507, 0
      %1517 = vmatprep.subr.mxu0 %v1515
      %1518 = vmatpush1.msra.mxu0 %v1512
      %1519 = vmatprep.subr.mxu0 0.0
      %1520 = vmatpush1.msra.mxu0 0.0
      %1521 = vmatprep.subr.mxu0 0.0
      %1522 = vmatpush1.msra.mxu0 0.0
      %1523 = vmatprep.subr.mxu0 0.0
      %1524 = vmatpush1.msra.mxu0 0.0
      %1525 = vmatprep.subr.mxu0 0.0
      %1526 = vmatpush1.msra.mxu0 0.0
      %1527 = vmatprep.subr.mxu0 0.0
      %1528 = vmatpush1.msra.mxu0 0.0
      %1529 = vmatprep.subr.mxu0 0.0
      %1530 = vmatpush1.msra.mxu0 0.0
      %1531 = vmatprep.subr.mxu0 0.0
      %1532 = vmatpush1.msra.mxu0 0.0
      %1533 = vmatprep.subr.mxu0 0.0
      %1534 = vmatpush1.msra.mxu0 0.0
      %1535 = vmatprep.subr.mxu0 0.0
      %1536 = vmatpush1.msra.mxu0 0.0
      %1537 = vmatprep.subr.mxu0 0.0
      %1538 = vmatpush1.msra.mxu0 0.0
      %1539 = vmatprep.subr.mxu0 0.0
      %1540 = vmatpush1.msra.mxu0 0.0
      %1541 = vmatprep.subr.mxu0 0.0
      %1542 = vmatpush1.msra.mxu0 0.0
      %1543 = vmatprep.subr.mxu0 0.0
      %1544 = vmatpush1.msra.mxu0 0.0
      %1545 = vmatprep.subr.mxu0 0.0
      %1546 = vmatpush1.msra.mxu0 0.0
      %1547 = vmatprep.subr.mxu0 0.0
      %1548 = vmatpush1.msra.mxu0 0.0
      %1549 = vmatprep.subr.mxu0 0.0
      %1550 = vmatpush1.msra.mxu0 0.0
      %1551 = vmatprep.subr.mxu0 0.0
      %1552 = vmatpush1.msra.mxu0 0.0
      %1553 = vmatprep.subr.mxu0 0.0
      %1554 = vmatpush1.msra.mxu0 0.0
      %1555 = vmatprep.subr.mxu0 0.0
      %1556 = vmatpush1.msra.mxu0 0.0
      %1557 = vmatprep.subr.mxu0 0.0
      %1558 = vmatpush1.msra.mxu0 0.0
      %1559 = vmatprep.subr.mxu0 0.0
      %1560 = vmatpush1.msra.mxu0 0.0
      %1561 = vmatprep.subr.mxu0 0.0
      %1562 = vmatpush1.msra.mxu0 0.0
      %1563 = vmatprep.subr.mxu0 0.0
      %1564 = vmatpush1.msra.mxu0 0.0
      %1565 = vmatprep.subr.mxu0 0.0
      %1566 = vmatpush1.msra.mxu0 0.0
      %1567 = vmatprep.subr.mxu0 0.0
      %1568 = vmatpush1.msra.mxu0 0.0
      %1569 = vmatprep.subr.mxu0 0.0
      %1570 = vmatpush1.msra.mxu0 0.0
      %1571 = vmatprep.subr.mxu0 0.0
      %1572 = vmatpush1.msra.mxu0 0.0
      %1573 = vmatprep.subr.mxu0 0.0
      %1574 = vmatpush1.msra.mxu0 0.0
      %1575 = vmatprep.subr.mxu0 0.0
      %1576 = vmatpush1.msra.mxu0 0.0
      %1577 = vmatprep.subr.mxu0 0.0
      %1578 = vmatpush1.msra.mxu0 0.0
      %1579 = vmatprep.subr.mxu0 0.0
      %1580 = vmatpush1.msra.mxu0 0.0
      %1581 = vmatprep.mubr.f32.mxu0 0.0
      %1582 = vmatmul.mubr.f32.gmra.mrb[0].mxu0 %v1509
      %v1583 = vpop.f32.mrb[0].mxu0
      %v1584 = vadd.f32 0.0, %v1583
      %v1585 = vpop.f32.mrb[0].mxu0
      %v1586 = vadd.f32 0.0, %v1585
      %1587 = vdwg.mxu0
      %v1588 = vadd.f32 %v1412, %v1584
      %v1589 = vadd.f32 %v1413, %v1586
      %v1590 = vmul.f32 %v630, %v1504
      %v1591 = vmul.f32 %v632, %v1505
      %v1593 = vsel %vm761, %v1590, 0
      %v1596 = vsel %vm761, %v1591, 0
      %1598 = vmatprep.subr.mxu0 %v1596
      %1599 = vmatpush1.msra.mxu0 %v1593
      %1600 = vmatprep.subr.mxu0 0.0
      %1601 = vmatpush1.msra.mxu0 0.0
      %1602 = vmatprep.subr.mxu0 0.0
      %1603 = vmatpush1.msra.mxu0 0.0
      %1604 = vmatprep.subr.mxu0 0.0
      %1605 = vmatpush1.msra.mxu0 0.0
      %1606 = vmatprep.subr.mxu0 0.0
      %1607 = vmatpush1.msra.mxu0 0.0
      %1608 = vmatprep.subr.mxu0 0.0
      %1609 = vmatpush1.msra.mxu0 0.0
      %1610 = vmatprep.subr.mxu0 0.0
      %1611 = vmatpush1.msra.mxu0 0.0
      %1612 = vmatprep.subr.mxu0 0.0
      %1613 = vmatpush1.msra.mxu0 0.0
      %1614 = vmatprep.subr.mxu0 0.0
      %1615 = vmatpush1.msra.mxu0 0.0
      %1616 = vmatprep.subr.mxu0 0.0
      %1617 = vmatpush1.msra.mxu0 0.0
      %1618 = vmatprep.subr.mxu0 0.0
      %1619 = vmatpush1.msra.mxu0 0.0
      %1620 = vmatprep.subr.mxu0 0.0
      %1621 = vmatpush1.msra.mxu0 0.0
      %1622 = vmatprep.subr.mxu0 0.0
      %1623 = vmatpush1.msra.mxu0 0.0
      %1624 = vmatprep.subr.mxu0 0.0
      %1625 = vmatpush1.msra.mxu0 0.0
      %1626 = vmatprep.subr.mxu0 0.0
      %1627 = vmatpush1.msra.mxu0 0.0
      %1628 = vmatprep.subr.mxu0 0.0
      %1629 = vmatpush1.msra.mxu0 0.0
      %1630 = vmatprep.subr.mxu0 0.0
      %1631 = vmatpush1.msra.mxu0 0.0
      %1632 = vmatprep.subr.mxu0 0.0
      %1633 = vmatpush1.msra.mxu0 0.0
      %1634 = vmatprep.subr.mxu0 0.0
      %1635 = vmatpush1.msra.mxu0 0.0
      %1636 = vmatprep.subr.mxu0 0.0
      %1637 = vmatpush1.msra.mxu0 0.0
      %1638 = vmatprep.subr.mxu0 0.0
      %1639 = vmatpush1.msra.mxu0 0.0
      %1640 = vmatprep.subr.mxu0 0.0
      %1641 = vmatpush1.msra.mxu0 0.0
      %1642 = vmatprep.subr.mxu0 0.0
      %1643 = vmatpush1.msra.mxu0 0.0
      %1644 = vmatprep.subr.mxu0 0.0
      %1645 = vmatpush1.msra.mxu0 0.0
      %1646 = vmatprep.subr.mxu0 0.0
      %1647 = vmatpush1.msra.mxu0 0.0
      %1648 = vmatprep.subr.mxu0 0.0
      %1649 = vmatpush1.msra.mxu0 0.0
      %1650 = vmatprep.subr.mxu0 0.0
      %1651 = vmatpush1.msra.mxu0 0.0
      %1652 = vmatprep.subr.mxu0 0.0
      %1653 = vmatpush1.msra.mxu0 0.0
      %1654 = vmatprep.subr.mxu0 0.0
      %1655 = vmatpush1.msra.mxu0 0.0
      %1656 = vmatprep.subr.mxu0 0.0
      %1657 = vmatpush1.msra.mxu0 0.0
      %1658 = vmatprep.subr.mxu0 0.0
      %1659 = vmatpush1.msra.mxu0 0.0
      %1660 = vmatprep.subr.mxu0 0.0
      %1661 = vmatpush1.msra.mxu0 0.0
      %1662 = vmatprep.mubr.f32.mxu0 0.0
      %1663 = vmatmul.mubr.f32.gmra.mrb[0].mxu0 %v1509
      %v1664 = vpop.f32.mrb[0].mxu0
      %v1665 = vadd.f32 0.0, %v1664
      %v1666 = vpop.f32.mrb[0].mxu0
      %v1667 = vadd.f32 0.0, %v1666
      %1668 = vdwg.mxu0
      %v1669 = vadd.f32 %v1499, %v1665
      %v1670 = vadd.f32 %v1500, %v1667
      %v1671 = vld [vmem:[%s6 + $0x28] sm:$0xff]
      %vm1672 = vmand %vm1317, %vm1126
      %vm1673 = vmand %vm1318, %vm1127
      %v1674 = vsel %vm1672, 1.0, 0.0
      %v1675 = vsel %vm1673, 1.0, 0.0
      %1676 = vrot.lane.b32.xlu0 %v549, 127
      %v1677 = vpop.permute.xlu0 %1676
      %1678 = vrot.lane.b32.xlu0 %v551, 127
      %v1679 = vpop.permute.xlu0 %1678
      %vm1680 = vcmp.lt.s32.totalorder %v706, 127
      %v1681 = vsel %vm1680, %v1677, %v1679
      %v1682 = vsel %vm1680, %v1679, %v1677
      %v1683 = vmul.f32 %v1681, %v1674
      %v1684 = vmul.f32 %v1682, %v1675
      %v1686 = vsel %vm757, %v1671, 0
      %v1689 = vsel %vm761, %v1683, 0
      %v1692 = vsel %vm761, %v1684, 0
      %1694 = vmatprep.subr.mxu0 %v1692
      %1695 = vmatpush1.msra.mxu0 %v1689
      %1696 = vmatprep.subr.mxu0 0.0
      %1697 = vmatpush1.msra.mxu0 0.0
      %1698 = vmatprep.subr.mxu0 0.0
      %1699 = vmatpush1.msra.mxu0 0.0
      %1700 = vmatprep.subr.mxu0 0.0
      %1701 = vmatpush1.msra.mxu0 0.0
      %1702 = vmatprep.subr.mxu0 0.0
      %1703 = vmatpush1.msra.mxu0 0.0
      %1704 = vmatprep.subr.mxu0 0.0
      %1705 = vmatpush1.msra.mxu0 0.0
      %1706 = vmatprep.subr.mxu0 0.0
      %1707 = vmatpush1.msra.mxu0 0.0
      %1708 = vmatprep.subr.mxu0 0.0
      %1709 = vmatpush1.msra.mxu0 0.0
      %1710 = vmatprep.subr.mxu0 0.0
      %1711 = vmatpush1.msra.mxu0 0.0
      %1712 = vmatprep.subr.mxu0 0.0
      %1713 = vmatpush1.msra.mxu0 0.0
      %1714 = vmatprep.subr.mxu0 0.0
      %1715 = vmatpush1.msra.mxu0 0.0
      %1716 = vmatprep.subr.mxu0 0.0
      %1717 = vmatpush1.msra.mxu0 0.0
      %1718 = vmatprep.subr.mxu0 0.0
      %1719 = vmatpush1.msra.mxu0 0.0
      %1720 = vmatprep.subr.mxu0 0.0
      %1721 = vmatpush1.msra.mxu0 0.0
      %1722 = vmatprep.subr.mxu0 0.0
      %1723 = vmatpush1.msra.mxu0 0.0
      %1724 = vmatprep.subr.mxu0 0.0
      %1725 = vmatpush1.msra.mxu0 0.0
      %1726 = vmatprep.subr.mxu0 0.0
      %1727 = vmatpush1.msra.mxu0 0.0
      %1728 = vmatprep.subr.mxu0 0.0
      %1729 = vmatpush1.msra.mxu0 0.0
      %1730 = vmatprep.subr.mxu0 0.0
      %1731 = vmatpush1.msra.mxu0 0.0
      %1732 = vmatprep.subr.mxu0 0.0
      %1733 = vmatpush1.msra.mxu0 0.0
      %1734 = vmatprep.subr.mxu0 0.0
      %1735 = vmatpush1.msra.mxu0 0.0
      %1736 = vmatprep.subr.mxu0 0.0
      %1737 = vmatpush1.msra.mxu0 0.0
      %1738 = vmatprep.subr.mxu0 0.0
      %1739 = vmatpush1.msra.mxu0 0.0
      %1740 = vmatprep.subr.mxu0 0.0
      %1741 = vmatpush1.msra.mxu0 0.0
      %1742 = vmatprep.subr.mxu0 0.0
      %1743 = vmatpush1.msra.mxu0 0.0
      %1744 = vmatprep.subr.mxu0 0.0
      %1745 = vmatpush1.msra.mxu0 0.0
      %1746 = vmatprep.subr.mxu0 0.0
      %1747 = vmatpush1.msra.mxu0 0.0
      %1748 = vmatprep.subr.mxu0 0.0
      %1749 = vmatpush1.msra.mxu0 0.0
      %1750 = vmatprep.subr.mxu0 0.0
      %1751 = vmatpush1.msra.mxu0 0.0
      %1752 = vmatprep.subr.mxu0 0.0
      %1753 = vmatpush1.msra.mxu0 0.0
      %1754 = vmatprep.subr.mxu0 0.0
      %1755 = vmatpush1.msra.mxu0 0.0
      %1756 = vmatprep.subr.mxu0 0.0
      %1757 = vmatpush1.msra.mxu0 0.0
      %1758 = vmatprep.mubr.f32.mxu0 0.0
      %1759 = vmatmul.mubr.f32.gmra.mrb[0].mxu0 %v1686
      %v1760 = vpop.f32.mrb[0].mxu0
      %v1761 = vadd.f32 0.0, %v1760
      %v1762 = vpop.f32.mrb[0].mxu0
      %v1763 = vadd.f32 0.0, %v1762
      %1764 = vdwg.mxu0
      %v1765 = vadd.f32 %v1588, %v1761
      %v1766 = vadd.f32 %v1589, %v1763
      %1767 = vrot.lane.b32.xlu0 %v630, 127
      %v1768 = vpop.permute.xlu0 %1767
      %1769 = vrot.lane.b32.xlu0 %v632, 127
      %v1770 = vpop.permute.xlu0 %1769
      %v1771 = vsel %vm1680, %v1768, %v1770
      %v1772 = vsel %vm1680, %v1770, %v1768
      %v1773 = vmul.f32 %v1771, %v1674
      %v1774 = vmul.f32 %v1772, %v1675
      %v1776 = vsel %vm761, %v1773, 0
      %v1779 = vsel %vm761, %v1774, 0
      %1781 = vmatprep.subr.mxu0 %v1779
      %1782 = vmatpush1.msra.mxu0 %v1776
      %1783 = vmatprep.subr.mxu0 0.0
      %1784 = vmatpush1.msra.mxu0 0.0
      %1785 = vmatprep.subr.mxu0 0.0
      %1786 = vmatpush1.msra.mxu0 0.0
      %1787 = vmatprep.subr.mxu0 0.0
      %1788 = vmatpush1.msra.mxu0 0.0
      %1789 = vmatprep.subr.mxu0 0.0
      %1790 = vmatpush1.msra.mxu0 0.0
      %1791 = vmatprep.subr.mxu0 0.0
      %1792 = vmatpush1.msra.mxu0 0.0
      %1793 = vmatprep.subr.mxu0 0.0
      %1794 = vmatpush1.msra.mxu0 0.0
      %1795 = vmatprep.subr.mxu0 0.0
      %1796 = vmatpush1.msra.mxu0 0.0
      %1797 = vmatprep.subr.mxu0 0.0
      %1798 = vmatpush1.msra.mxu0 0.0
      %1799 = vmatprep.subr.mxu0 0.0
      %1800 = vmatpush1.msra.mxu0 0.0
      %1801 = vmatprep.subr.mxu0 0.0
      %1802 = vmatpush1.msra.mxu0 0.0
      %1803 = vmatprep.subr.mxu0 0.0
      %1804 = vmatpush1.msra.mxu0 0.0
      %1805 = vmatprep.subr.mxu0 0.0
      %1806 = vmatpush1.msra.mxu0 0.0
      %1807 = vmatprep.subr.mxu0 0.0
      %1808 = vmatpush1.msra.mxu0 0.0
      %1809 = vmatprep.subr.mxu0 0.0
      %1810 = vmatpush1.msra.mxu0 0.0
      %1811 = vmatprep.subr.mxu0 0.0
      %1812 = vmatpush1.msra.mxu0 0.0
      %1813 = vmatprep.subr.mxu0 0.0
      %1814 = vmatpush1.msra.mxu0 0.0
      %1815 = vmatprep.subr.mxu0 0.0
      %1816 = vmatpush1.msra.mxu0 0.0
      %1817 = vmatprep.subr.mxu0 0.0
      %1818 = vmatpush1.msra.mxu0 0.0
      %1819 = vmatprep.subr.mxu0 0.0
      %1820 = vmatpush1.msra.mxu0 0.0
      %1821 = vmatprep.subr.mxu0 0.0
      %1822 = vmatpush1.msra.mxu0 0.0
      %1823 = vmatprep.subr.mxu0 0.0
      %1824 = vmatpush1.msra.mxu0 0.0
      %1825 = vmatprep.subr.mxu0 0.0
      %1826 = vmatpush1.msra.mxu0 0.0
      %1827 = vmatprep.subr.mxu0 0.0
      %1828 = vmatpush1.msra.mxu0 0.0
      %1829 = vmatprep.subr.mxu0 0.0
      %1830 = vmatpush1.msra.mxu0 0.0
      %1831 = vmatprep.subr.mxu0 0.0
      %1832 = vmatpush1.msra.mxu0 0.0
      %1833 = vmatprep.subr.mxu0 0.0
      %1834 = vmatpush1.msra.mxu0 0.0
      %1835 = vmatprep.subr.mxu0 0.0
      %1836 = vmatpush1.msra.mxu0 0.0
      %1837 = vmatprep.subr.mxu0 0.0
      %1838 = vmatpush1.msra.mxu0 0.0
      %1839 = vmatprep.subr.mxu0 0.0
      %1840 = vmatpush1.msra.mxu0 0.0
      %1841 = vmatprep.subr.mxu0 0.0
      %1842 = vmatpush1.msra.mxu0 0.0
      %1843 = vmatprep.subr.mxu0 0.0
      %1844 = vmatpush1.msra.mxu0 0.0
      %1845 = vmatprep.mubr.f32.mxu0 0.0
      %1846 = vmatmul.mubr.f32.gmra.mrb[0].mxu0 %v1686
      %v1847 = vpop.f32.mrb[0].mxu0
      %v1848 = vadd.f32 0.0, %v1847
      %v1849 = vpop.f32.mrb[0].mxu0
      %v1850 = vadd.f32 0.0, %v1849
      %1851 = vdwg.mxu0
      %v1852 = vadd.f32 %v1669, %v1848
      %v1853 = vadd.f32 %v1670, %v1850
      %v1854 = vld [vmem:[%s6 + $0x30] sm:$0xff]
      %v1855 = vadd.f32 %v714, 1.0
      %v1856 = vadd.f32 %v715, 1.0
      %vm1857 = vcmp.ge.f32.partialorder %v1855, 0.0
      %vm1858 = vcmp.ge.f32.partialorder %v1856, 0.0
      %vm1859 = vcmp.le.f32.partialorder %v1855, 15.0
      %vm1860 = vcmp.le.f32.partialorder %v1856, 15.0
      %vm1861 = vmand %vm1857, %vm1859
      %vm1862 = vmand %vm1858, %vm1860
      %vm1863 = vmand %vm1861, %vm742
      %vm1864 = vmand %vm1862, %vm743
      %v1865 = vsel %vm1863, 1.0, 0.0
      %v1866 = vsel %vm1864, 1.0, 0.0
      %1867 = vrot.lane.b32.xlu0 %v549, 113
      %v1868 = vpop.permute.xlu0 %1867
      %1869 = vrot.lane.b32.xlu0 %v551, 113
      %v1870 = vpop.permute.xlu0 %1869
      %vm1871 = vcmp.lt.s32.totalorder %v706, 113
      %v1872 = vsel %vm1871, %v1868, %v1870
      %v1873 = vsel %vm1871, %v1870, %v1868
      %v1874 = vmul.f32 %v1872, %v1865
      %v1875 = vmul.f32 %v1873, %v1866
      %v1877 = vsel %vm757, %v1854, 0
      %v1880 = vsel %vm761, %v1874, 0
      %v1883 = vsel %vm761, %v1875, 0
      %1885 = vmatprep.subr.mxu0 %v1883
      %1886 = vmatpush1.msra.mxu0 %v1880
      %1887 = vmatprep.subr.mxu0 0.0
      %1888 = vmatpush1.msra.mxu0 0.0
      %1889 = vmatprep.subr.mxu0 0.0
      %1890 = vmatpush1.msra.mxu0 0.0
      %1891 = vmatprep.subr.mxu0 0.0
      %1892 = vmatpush1.msra.mxu0 0.0
      %1893 = vmatprep.subr.mxu0 0.0
      %1894 = vmatpush1.msra.mxu0 0.0
      %1895 = vmatprep.subr.mxu0 0.0
      %1896 = vmatpush1.msra.mxu0 0.0
      %1897 = vmatprep.subr.mxu0 0.0
      %1898 = vmatpush1.msra.mxu0 0.0
      %1899 = vmatprep.subr.mxu0 0.0
      %1900 = vmatpush1.msra.mxu0 0.0
      %1901 = vmatprep.subr.mxu0 0.0
      %1902 = vmatpush1.msra.mxu0 0.0
      %1903 = vmatprep.subr.mxu0 0.0
      %1904 = vmatpush1.msra.mxu0 0.0
      %1905 = vmatprep.subr.mxu0 0.0
      %1906 = vmatpush1.msra.mxu0 0.0
      %1907 = vmatprep.subr.mxu0 0.0
      %1908 = vmatpush1.msra.mxu0 0.0
      %1909 = vmatprep.subr.mxu0 0.0
      %1910 = vmatpush1.msra.mxu0 0.0
      %1911 = vmatprep.subr.mxu0 0.0
      %1912 = vmatpush1.msra.mxu0 0.0
      %1913 = vmatprep.subr.mxu0 0.0
      %1914 = vmatpush1.msra.mxu0 0.0
      %1915 = vmatprep.subr.mxu0 0.0
      %1916 = vmatpush1.msra.mxu0 0.0
      %1917 = vmatprep.subr.mxu0 0.0
      %1918 = vmatpush1.msra.mxu0 0.0
      %1919 = vmatprep.subr.mxu0 0.0
      %1920 = vmatpush1.msra.mxu0 0.0
      %1921 = vmatprep.subr.mxu0 0.0
      %1922 = vmatpush1.msra.mxu0 0.0
      %1923 = vmatprep.subr.mxu0 0.0
      %1924 = vmatpush1.msra.mxu0 0.0
      %1925 = vmatprep.subr.mxu0 0.0
      %1926 = vmatpush1.msra.mxu0 0.0
      %1927 = vmatprep.subr.mxu0 0.0
      %1928 = vmatpush1.msra.mxu0 0.0
      %1929 = vmatprep.subr.mxu0 0.0
      %1930 = vmatpush1.msra.mxu0 0.0
      %1931 = vmatprep.subr.mxu0 0.0
      %1932 = vmatpush1.msra.mxu0 0.0
      %1933 = vmatprep.subr.mxu0 0.0
      %1934 = vmatpush1.msra.mxu0 0.0
      %1935 = vmatprep.subr.mxu0 0.0
      %1936 = vmatpush1.msra.mxu0 0.0
      %1937 = vmatprep.subr.mxu0 0.0
      %1938 = vmatpush1.msra.mxu0 0.0
      %1939 = vmatprep.subr.mxu0 0.0
      %1940 = vmatpush1.msra.mxu0 0.0
      %1941 = vmatprep.subr.mxu0 0.0
      %1942 = vmatpush1.msra.mxu0 0.0
      %1943 = vmatprep.subr.mxu0 0.0
      %1944 = vmatpush1.msra.mxu0 0.0
      %1945 = vmatprep.subr.mxu0 0.0
      %1946 = vmatpush1.msra.mxu0 0.0
      %1947 = vmatprep.subr.mxu0 0.0
      %1948 = vmatpush1.msra.mxu0 0.0
      %1949 = vmatprep.mubr.f32.mxu0 0.0
      %1950 = vmatmul.mubr.f32.gmra.mrb[0].mxu0 %v1877
      %v1951 = vpop.f32.mrb[0].mxu0
      %v1952 = vadd.f32 0.0, %v1951
      %v1953 = vpop.f32.mrb[0].mxu0
      %v1954 = vadd.f32 0.0, %v1953
      %1955 = vdwg.mxu0
      %v1956 = vadd.f32 %v1765, %v1952
      %v1957 = vadd.f32 %v1766, %v1954
      %1958 = vrot.lane.b32.xlu0 %v630, 113
      %v1959 = vpop.permute.xlu0 %1958
      %1960 = vrot.lane.b32.xlu0 %v632, 113
      %v1961 = vpop.permute.xlu0 %1960
      %v1962 = vsel %vm1871, %v1959, %v1961
      %v1963 = vsel %vm1871, %v1961, %v1959
      %v1964 = vmul.f32 %v1962, %v1865
      %v1965 = vmul.f32 %v1963, %v1866
      %v1967 = vsel %vm761, %v1964, 0
      %v1970 = vsel %vm761, %v1965, 0
      %1972 = vmatprep.subr.mxu0 %v1970
      %1973 = vmatpush1.msra.mxu0 %v1967
      %1974 = vmatprep.subr.mxu0 0.0
      %1975 = vmatpush1.msra.mxu0 0.0
      %1976 = vmatprep.subr.mxu0 0.0
      %1977 = vmatpush1.msra.mxu0 0.0
      %1978 = vmatprep.subr.mxu0 0.0
      %1979 = vmatpush1.msra.mxu0 0.0
      %1980 = vmatprep.subr.mxu0 0.0
      %1981 = vmatpush1.msra.mxu0 0.0
      %1982 = vmatprep.subr.mxu0 0.0
      %1983 = vmatpush1.msra.mxu0 0.0
      %1984 = vmatprep.subr.mxu0 0.0
      %1985 = vmatpush1.msra.mxu0 0.0
      %1986 = vmatprep.subr.mxu0 0.0
      %1987 = vmatpush1.msra.mxu0 0.0
      %1988 = vmatprep.subr.mxu0 0.0
      %1989 = vmatpush1.msra.mxu0 0.0
      %1990 = vmatprep.subr.mxu0 0.0
      %1991 = vmatpush1.msra.mxu0 0.0
      %1992 = vmatprep.subr.mxu0 0.0
      %1993 = vmatpush1.msra.mxu0 0.0
      %1994 = vmatprep.subr.mxu0 0.0
      %1995 = vmatpush1.msra.mxu0 0.0
      %1996 = vmatprep.subr.mxu0 0.0
      %1997 = vmatpush1.msra.mxu0 0.0
      %1998 = vmatprep.subr.mxu0 0.0
      %1999 = vmatpush1.msra.mxu0 0.0
      %2000 = vmatprep.subr.mxu0 0.0
      %2001 = vmatpush1.msra.mxu0 0.0
      %2002 = vmatprep.subr.mxu0 0.0
      %2003 = vmatpush1.msra.mxu0 0.0
      %2004 = vmatprep.subr.mxu0 0.0
      %2005 = vmatpush1.msra.mxu0 0.0
      %2006 = vmatprep.subr.mxu0 0.0
      %2007 = vmatpush1.msra.mxu0 0.0
      %2008 = vmatprep.subr.mxu0 0.0
      %2009 = vmatpush1.msra.mxu0 0.0
      %2010 = vmatprep.subr.mxu0 0.0
      %2011 = vmatpush1.msra.mxu0 0.0
      %2012 = vmatprep.subr.mxu0 0.0
      %2013 = vmatpush1.msra.mxu0 0.0
      %2014 = vmatprep.subr.mxu0 0.0
      %2015 = vmatpush1.msra.mxu0 0.0
      %2016 = vmatprep.subr.mxu0 0.0
      %2017 = vmatpush1.msra.mxu0 0.0
      %2018 = vmatprep.subr.mxu0 0.0
      %2019 = vmatpush1.msra.mxu0 0.0
      %2020 = vmatprep.subr.mxu0 0.0
      %2021 = vmatpush1.msra.mxu0 0.0
      %2022 = vmatprep.subr.mxu0 0.0
      %2023 = vmatpush1.msra.mxu0 0.0
      %2024 = vmatprep.subr.mxu0 0.0
      %2025 = vmatpush1.msra.mxu0 0.0
      %2026 = vmatprep.subr.mxu0 0.0
      %2027 = vmatpush1.msra.mxu0 0.0
      %2028 = vmatprep.subr.mxu0 0.0
      %2029 = vmatpush1.msra.mxu0 0.0
      %2030 = vmatprep.subr.mxu0 0.0
      %2031 = vmatpush1.msra.mxu0 0.0
      %2032 = vmatprep.subr.mxu0 0.0
      %2033 = vmatpush1.msra.mxu0 0.0
      %2034 = vmatprep.subr.mxu0 0.0
      %2035 = vmatpush1.msra.mxu0 0.0
      %2036 = vmatprep.mubr.f32.mxu0 0.0
      %2037 = vmatmul.mubr.f32.gmra.mrb[0].mxu0 %v1877
      %v2038 = vpop.f32.mrb[0].mxu0
      %v2039 = vadd.f32 0.0, %v2038
      %v2040 = vpop.f32.mrb[0].mxu0
      %v2041 = vadd.f32 0.0, %v2040
      %2042 = vdwg.mxu0
      %v2043 = vadd.f32 %v1852, %v2039
      %v2044 = vadd.f32 %v1853, %v2041
      %v2045 = vld [vmem:[%s6 + $0x38] sm:$0xff]
      %vm2046 = vmand %vm1861, %vm935
      %vm2047 = vmand %vm1862, %vm936
      %v2048 = vsel %vm2046, 1.0, 0.0
      %v2049 = vsel %vm2047, 1.0, 0.0
      %2050 = vrot.lane.b32.xlu0 %v549, 112
      %v2051 = vpop.permute.xlu0 %2050
      %2052 = vrot.lane.b32.xlu0 %v551, 112
      %v2053 = vpop.permute.xlu0 %2052
      %vm2054 = vcmp.lt.s32.totalorder %v706, 112
      %v2055 = vsel %vm2054, %v2051, %v2053
      %v2056 = vsel %vm2054, %v2053, %v2051
      %v2057 = vmul.f32 %v2055, %v2048
      %v2058 = vmul.f32 %v2056, %v2049
      %v2060 = vsel %vm757, %v2045, 0
      %v2063 = vsel %vm761, %v2057, 0
      %v2066 = vsel %vm761, %v2058, 0
      %2068 = vmatprep.subr.mxu0 %v2066
      %2069 = vmatpush1.msra.mxu0 %v2063
      %2070 = vmatprep.subr.mxu0 0.0
      %2071 = vmatpush1.msra.mxu0 0.0
      %2072 = vmatprep.subr.mxu0 0.0
      %2073 = vmatpush1.msra.mxu0 0.0
      %2074 = vmatprep.subr.mxu0 0.0
      %2075 = vmatpush1.msra.mxu0 0.0
      %2076 = vmatprep.subr.mxu0 0.0
      %2077 = vmatpush1.msra.mxu0 0.0
      %2078 = vmatprep.subr.mxu0 0.0
      %2079 = vmatpush1.msra.mxu0 0.0
      %2080 = vmatprep.subr.mxu0 0.0
      %2081 = vmatpush1.msra.mxu0 0.0
      %2082 = vmatprep.subr.mxu0 0.0
      %2083 = vmatpush1.msra.mxu0 0.0
      %2084 = vmatprep.subr.mxu0 0.0
      %2085 = vmatpush1.msra.mxu0 0.0
      %2086 = vmatprep.subr.mxu0 0.0
      %2087 = vmatpush1.msra.mxu0 0.0
      %2088 = vmatprep.subr.mxu0 0.0
      %2089 = vmatpush1.msra.mxu0 0.0
      %2090 = vmatprep.subr.mxu0 0.0
      %2091 = vmatpush1.msra.mxu0 0.0
      %2092 = vmatprep.subr.mxu0 0.0
      %2093 = vmatpush1.msra.mxu0 0.0
      %2094 = vmatprep.subr.mxu0 0.0
      %2095 = vmatpush1.msra.mxu0 0.0
      %2096 = vmatprep.subr.mxu0 0.0
      %2097 = vmatpush1.msra.mxu0 0.0
      %2098 = vmatprep.subr.mxu0 0.0
      %2099 = vmatpush1.msra.mxu0 0.0
      %2100 = vmatprep.subr.mxu0 0.0
      %2101 = vmatpush1.msra.mxu0 0.0
      %2102 = vmatprep.subr.mxu0 0.0
      %2103 = vmatpush1.msra.mxu0 0.0
      %2104 = vmatprep.subr.mxu0 0.0
      %2105 = vmatpush1.msra.mxu0 0.0
      %2106 = vmatprep.subr.mxu0 0.0
      %2107 = vmatpush1.msra.mxu0 0.0
      %2108 = vmatprep.subr.mxu0 0.0
      %2109 = vmatpush1.msra.mxu0 0.0
      %2110 = vmatprep.subr.mxu0 0.0
      %2111 = vmatpush1.msra.mxu0 0.0
      %2112 = vmatprep.subr.mxu0 0.0
      %2113 = vmatpush1.msra.mxu0 0.0
      %2114 = vmatprep.subr.mxu0 0.0
      %2115 = vmatpush1.msra.mxu0 0.0
      %2116 = vmatprep.subr.mxu0 0.0
      %2117 = vmatpush1.msra.mxu0 0.0
      %2118 = vmatprep.subr.mxu0 0.0
      %2119 = vmatpush1.msra.mxu0 0.0
      %2120 = vmatprep.subr.mxu0 0.0
      %2121 = vmatpush1.msra.mxu0 0.0
      %2122 = vmatprep.subr.mxu0 0.0
      %2123 = vmatpush1.msra.mxu0 0.0
      %2124 = vmatprep.subr.mxu0 0.0
      %2125 = vmatpush1.msra.mxu0 0.0
      %2126 = vmatprep.subr.mxu0 0.0
      %2127 = vmatpush1.msra.mxu0 0.0
      %2128 = vmatprep.subr.mxu0 0.0
      %2129 = vmatpush1.msra.mxu0 0.0
      %2130 = vmatprep.subr.mxu0 0.0
      %2131 = vmatpush1.msra.mxu0 0.0
      %2132 = vmatprep.mubr.f32.mxu0 0.0
      %2133 = vmatmul.mubr.f32.gmra.mrb[0].mxu0 %v2060
      %v2134 = vpop.f32.mrb[0].mxu0
      %v2135 = vadd.f32 0.0, %v2134
      %v2136 = vpop.f32.mrb[0].mxu0
      %v2137 = vadd.f32 0.0, %v2136
      %2138 = vdwg.mxu0
      %v2139 = vadd.f32 %v1956, %v2135
      %v2140 = vadd.f32 %v1957, %v2137
      %2141 = vrot.lane.b32.xlu0 %v630, 112
      %v2142 = vpop.permute.xlu0 %2141
      %2143 = vrot.lane.b32.xlu0 %v632, 112
      %v2144 = vpop.permute.xlu0 %2143
      %v2145 = vsel %vm2054, %v2142, %v2144
      %v2146 = vsel %vm2054, %v2144, %v2142
      %v2147 = vmul.f32 %v2145, %v2048
      %v2148 = vmul.f32 %v2146, %v2049
      %v2150 = vsel %vm761, %v2147, 0
      %v2153 = vsel %vm761, %v2148, 0
      %2155 = vmatprep.subr.mxu0 %v2153
      %2156 = vmatpush1.msra.mxu0 %v2150
      %2157 = vmatprep.subr.mxu0 0.0
      %2158 = vmatpush1.msra.mxu0 0.0
      %2159 = vmatprep.subr.mxu0 0.0
      %2160 = vmatpush1.msra.mxu0 0.0
      %2161 = vmatprep.subr.mxu0 0.0
      %2162 = vmatpush1.msra.mxu0 0.0
      %2163 = vmatprep.subr.mxu0 0.0
      %2164 = vmatpush1.msra.mxu0 0.0
      %2165 = vmatprep.subr.mxu0 0.0
      %2166 = vmatpush1.msra.mxu0 0.0
      %2167 = vmatprep.subr.mxu0 0.0
      %2168 = vmatpush1.msra.mxu0 0.0
      %2169 = vmatprep.subr.mxu0 0.0
      %2170 = vmatpush1.msra.mxu0 0.0
      %2171 = vmatprep.subr.mxu0 0.0
      %2172 = vmatpush1.msra.mxu0 0.0
      %2173 = vmatprep.subr.mxu0 0.0
      %2174 = vmatpush1.msra.mxu0 0.0
      %2175 = vmatprep.subr.mxu0 0.0
      %2176 = vmatpush1.msra.mxu0 0.0
      %2177 = vmatprep.subr.mxu0 0.0
      %2178 = vmatpush1.msra.mxu0 0.0
      %2179 = vmatprep.subr.mxu0 0.0
      %2180 = vmatpush1.msra.mxu0 0.0
      %2181 = vmatprep.subr.mxu0 0.0
      %2182 = vmatpush1.msra.mxu0 0.0
      %2183 = vmatprep.subr.mxu0 0.0
      %2184 = vmatpush1.msra.mxu0 0.0
      %2185 = vmatprep.subr.mxu0 0.0
      %2186 = vmatpush1.msra.mxu0 0.0
      %2187 = vmatprep.subr.mxu0 0.0
      %2188 = vmatpush1.msra.mxu0 0.0
      %2189 = vmatprep.subr.mxu0 0.0
      %2190 = vmatpush1.msra.mxu0 0.0
      %2191 = vmatprep.subr.mxu0 0.0
      %2192 = vmatpush1.msra.mxu0 0.0
      %2193 = vmatprep.subr.mxu0 0.0
      %2194 = vmatpush1.msra.mxu0 0.0
      %2195 = vmatprep.subr.mxu0 0.0
      %2196 = vmatpush1.msra.mxu0 0.0
      %2197 = vmatprep.subr.mxu0 0.0
      %2198 = vmatpush1.msra.mxu0 0.0
      %2199 = vmatprep.subr.mxu0 0.0
      %2200 = vmatpush1.msra.mxu0 0.0
      %2201 = vmatprep.subr.mxu0 0.0
      %2202 = vmatpush1.msra.mxu0 0.0
      %2203 = vmatprep.subr.mxu0 0.0
      %2204 = vmatpush1.msra.mxu0 0.0
      %2205 = vmatprep.subr.mxu0 0.0
      %2206 = vmatpush1.msra.mxu0 0.0
      %2207 = vmatprep.subr.mxu0 0.0
      %2208 = vmatpush1.msra.mxu0 0.0
      %2209 = vmatprep.subr.mxu0 0.0
      %2210 = vmatpush1.msra.mxu0 0.0
      %2211 = vmatprep.subr.mxu0 0.0
      %2212 = vmatpush1.msra.mxu0 0.0
      %2213 = vmatprep.subr.mxu0 0.0
      %2214 = vmatpush1.msra.mxu0 0.0
      %2215 = vmatprep.subr.mxu0 0.0
      %2216 = vmatpush1.msra.mxu0 0.0
      %2217 = vmatprep.subr.mxu0 0.0
      %2218 = vmatpush1.msra.mxu0 0.0
      %2219 = vmatprep.mubr.f32.mxu0 0.0
      %2220 = vmatmul.mubr.f32.gmra.mrb[0].mxu0 %v2060
      %v2221 = vpop.f32.mrb[0].mxu0
      %v2222 = vadd.f32 0.0, %v2221
      %v2223 = vpop.f32.mrb[0].mxu0
      %v2224 = vadd.f32 0.0, %v2223
      %2225 = vdwg.mxu0
      %v2226 = vadd.f32 %v2043, %v2222
      %v2227 = vadd.f32 %v2044, %v2224
      %v2228 = vld [vmem:[%s6 + $0x40] sm:$0xff]
      %vm2229 = vmand %vm1861, %vm1126
      %vm2230 = vmand %vm1862, %vm1127
      %v2231 = vsel %vm2229, 1.0, 0.0
      %v2232 = vsel %vm2230, 1.0, 0.0
      %2233 = vrot.lane.b32.xlu0 %v549, 111
      %v2234 = vpop.permute.xlu0 %2233
      %2235 = vrot.lane.b32.xlu0 %v551, 111
      %v2236 = vpop.permute.xlu0 %2235
      %vm2237 = vcmp.lt.s32.totalorder %v706, 111
      %v2238 = vsel %vm2237, %v2234, %v2236
      %v2239 = vsel %vm2237, %v2236, %v2234
      %v2240 = vmul.f32 %v2238, %v2231
      %v2241 = vmul.f32 %v2239, %v2232
      %v2243 = vsel %vm757, %v2228, 0
      %v2246 = vsel %vm761, %v2240, 0
      %v2249 = vsel %vm761, %v2241, 0
      %2251 = vmatprep.subr.mxu0 %v2249
      %2252 = vmatpush1.msra.mxu0 %v2246
      %2253 = vmatprep.subr.mxu0 0.0
      %2254 = vmatpush1.msra.mxu0 0.0
      %2255 = vmatprep.subr.mxu0 0.0
      %2256 = vmatpush1.msra.mxu0 0.0
      %2257 = vmatprep.subr.mxu0 0.0
      %2258 = vmatpush1.msra.mxu0 0.0
      %2259 = vmatprep.subr.mxu0 0.0
      %2260 = vmatpush1.msra.mxu0 0.0
      %2261 = vmatprep.subr.mxu0 0.0
      %2262 = vmatpush1.msra.mxu0 0.0
      %2263 = vmatprep.subr.mxu0 0.0
      %2264 = vmatpush1.msra.mxu0 0.0
      %2265 = vmatprep.subr.mxu0 0.0
      %2266 = vmatpush1.msra.mxu0 0.0
      %2267 = vmatprep.subr.mxu0 0.0
      %2268 = vmatpush1.msra.mxu0 0.0
      %2269 = vmatprep.subr.mxu0 0.0
      %2270 = vmatpush1.msra.mxu0 0.0
      %2271 = vmatprep.subr.mxu0 0.0
      %2272 = vmatpush1.msra.mxu0 0.0
      %2273 = vmatprep.subr.mxu0 0.0
      %2274 = vmatpush1.msra.mxu0 0.0
      %2275 = vmatprep.subr.mxu0 0.0
      %2276 = vmatpush1.msra.mxu0 0.0
      %2277 = vmatprep.subr.mxu0 0.0
      %2278 = vmatpush1.msra.mxu0 0.0
      %2279 = vmatprep.subr.mxu0 0.0
      %2280 = vmatpush1.msra.mxu0 0.0
      %2281 = vmatprep.subr.mxu0 0.0
      %2282 = vmatpush1.msra.mxu0 0.0
      %2283 = vmatprep.subr.mxu0 0.0
      %2284 = vmatpush1.msra.mxu0 0.0
      %2285 = vmatprep.subr.mxu0 0.0
      %2286 = vmatpush1.msra.mxu0 0.0
      %2287 = vmatprep.subr.mxu0 0.0
      %2288 = vmatpush1.msra.mxu0 0.0
      %2289 = vmatprep.subr.mxu0 0.0
      %2290 = vmatpush1.msra.mxu0 0.0
      %2291 = vmatprep.subr.mxu0 0.0
      %2292 = vmatpush1.msra.mxu0 0.0
      %2293 = vmatprep.subr.mxu0 0.0
      %2294 = vmatpush1.msra.mxu0 0.0
      %2295 = vmatprep.subr.mxu0 0.0
      %2296 = vmatpush1.msra.mxu0 0.0
      %2297 = vmatprep.subr.mxu0 0.0
      %2298 = vmatpush1.msra.mxu0 0.0
      %2299 = vmatprep.subr.mxu0 0.0
      %2300 = vmatpush1.msra.mxu0 0.0
      %2301 = vmatprep.subr.mxu0 0.0
      %2302 = vmatpush1.msra.mxu0 0.0
      %2303 = vmatprep.subr.mxu0 0.0
      %2304 = vmatpush1.msra.mxu0 0.0
      %2305 = vmatprep.subr.mxu0 0.0
      %2306 = vmatpush1.msra.mxu0 0.0
      %2307 = vmatprep.subr.mxu0 0.0
      %2308 = vmatpush1.msra.mxu0 0.0
      %2309 = vmatprep.subr.mxu0 0.0
      %2310 = vmatpush1.msra.mxu0 0.0
      %2311 = vmatprep.subr.mxu0 0.0
      %2312 = vmatpush1.msra.mxu0 0.0
      %2313 = vmatprep.subr.mxu0 0.0
      %2314 = vmatpush1.msra.mxu0 0.0
      %2315 = vmatprep.mubr.f32.mxu0 0.0
      %2316 = vmatmul.mubr.f32.gmra.mrb[0].mxu0 %v2243
      %v2317 = vpop.f32.mrb[0].mxu0
      %v2318 = vadd.f32 0.0, %v2317
      %v2319 = vpop.f32.mrb[0].mxu0
      %v2320 = vadd.f32 0.0, %v2319
      %2321 = vdwg.mxu0
      %v2322 = vadd.f32 %v2139, %v2318
      %v2323 = vadd.f32 %v2140, %v2320
      %2324 = vrot.lane.b32.xlu0 %v630, 111
      %v2325 = vpop.permute.xlu0 %2324
      %2326 = vrot.lane.b32.xlu0 %v632, 111
      %v2327 = vpop.permute.xlu0 %2326
      %v2328 = vsel %vm2237, %v2325, %v2327
      %v2329 = vsel %vm2237, %v2327, %v2325
      %v2330 = vmul.f32 %v2328, %v2231
      %v2331 = vmul.f32 %v2329, %v2232
      %v2333 = vsel %vm761, %v2330, 0
      %v2336 = vsel %vm761, %v2331, 0
      %2338 = vmatprep.subr.mxu0 %v2336
      %2339 = vmatpush1.msra.mxu0 %v2333
      %2340 = vmatprep.subr.mxu0 0.0
      %2341 = vmatpush1.msra.mxu0 0.0
      %2342 = vmatprep.subr.mxu0 0.0
      %2343 = vmatpush1.msra.mxu0 0.0
      %2344 = vmatprep.subr.mxu0 0.0
      %2345 = vmatpush1.msra.mxu0 0.0
      %2346 = vmatprep.subr.mxu0 0.0
      %2347 = vmatpush1.msra.mxu0 0.0
      %2348 = vmatprep.subr.mxu0 0.0
      %2349 = vmatpush1.msra.mxu0 0.0
      %2350 = vmatprep.subr.mxu0 0.0
      %2351 = vmatpush1.msra.mxu0 0.0
      %2352 = vmatprep.subr.mxu0 0.0
      %2353 = vmatpush1.msra.mxu0 0.0
      %2354 = vmatprep.subr.mxu0 0.0
      %2355 = vmatpush1.msra.mxu0 0.0
      %2356 = vmatprep.subr.mxu0 0.0
      %2357 = vmatpush1.msra.mxu0 0.0
      %2358 = vmatprep.subr.mxu0 0.0
      %2359 = vmatpush1.msra.mxu0 0.0
      %2360 = vmatprep.subr.mxu0 0.0
      %2361 = vmatpush1.msra.mxu0 0.0
      %2362 = vmatprep.subr.mxu0 0.0
      %2363 = vmatpush1.msra.mxu0 0.0
      %2364 = vmatprep.subr.mxu0 0.0
      %2365 = vmatpush1.msra.mxu0 0.0
      %2366 = vmatprep.subr.mxu0 0.0
      %2367 = vmatpush1.msra.mxu0 0.0
      %2368 = vmatprep.subr.mxu0 0.0
      %2369 = vmatpush1.msra.mxu0 0.0
      %2370 = vmatprep.subr.mxu0 0.0
      %2371 = vmatpush1.msra.mxu0 0.0
      %2372 = vmatprep.subr.mxu0 0.0
      %2373 = vmatpush1.msra.mxu0 0.0
      %2374 = vmatprep.subr.mxu0 0.0
      %2375 = vmatpush1.msra.mxu0 0.0
      %2376 = vmatprep.subr.mxu0 0.0
      %2377 = vmatpush1.msra.mxu0 0.0
      %2378 = vmatprep.subr.mxu0 0.0
      %2379 = vmatpush1.msra.mxu0 0.0
      %2380 = vmatprep.subr.mxu0 0.0
      %2381 = vmatpush1.msra.mxu0 0.0
      %2382 = vmatprep.subr.mxu0 0.0
      %2383 = vmatpush1.msra.mxu0 0.0
      %2384 = vmatprep.subr.mxu0 0.0
      %2385 = vmatpush1.msra.mxu0 0.0
      %2386 = vmatprep.subr.mxu0 0.0
      %2387 = vmatpush1.msra.mxu0 0.0
      %2388 = vmatprep.subr.mxu0 0.0
      %2389 = vmatpush1.msra.mxu0 0.0
      %2390 = vmatprep.subr.mxu0 0.0
      %2391 = vmatpush1.msra.mxu0 0.0
      %2392 = vmatprep.subr.mxu0 0.0
      %2393 = vmatpush1.msra.mxu0 0.0
      %2394 = vmatprep.subr.mxu0 0.0
      %2395 = vmatpush1.msra.mxu0 0.0
      %2396 = vmatprep.subr.mxu0 0.0
      %2397 = vmatpush1.msra.mxu0 0.0
      %2398 = vmatprep.subr.mxu0 0.0
      %2399 = vmatpush1.msra.mxu0 0.0
      %2400 = vmatprep.subr.mxu0 0.0
      %2401 = vmatpush1.msra.mxu0 0.0
      %2402 = vmatprep.mubr.f32.mxu0 0.0
      %2403 = vmatmul.mubr.f32.gmra.mrb[0].mxu0 %v2243
      %v2404 = vpop.f32.mrb[0].mxu0
      %v2405 = vadd.f32 0.0, %v2404
      %v2406 = vpop.f32.mrb[0].mxu0
      %v2407 = vadd.f32 0.0, %v2406
      %2408 = vdwg.mxu0
      %v2409 = vadd.f32 %v2226, %v2405
      %v2410 = vadd.f32 %v2227, %v2407
      %v2411 = vmax.f32 %v2322, 0.0
      %v2412 = vmax.f32 %v2323, 0.0
      %v2413 = vmax.f32 %v2409, 0.0
      %v2414 = vmax.f32 %v2410, 0.0
      %2415 = vrot.lane.b32.xlu0 %v701, 17
      %v2416 = vpop.permute.xlu0 %2415
      %2417 = vrot.lane.b32.xlu0 %v703, 17
      %v2418 = vpop.permute.xlu0 %2417
      %v2419 = vsel %vm752, %v2416, %v2418
      %v2420 = vsel %vm752, %v2418, %v2416
      %v2421 = vmul.f32 %v2420, %v746
      %v2422 = vmul.f32 %v2419, %v747
      %v2424 = vsel %vm761, %v2421, 0
      %v2427 = vsel %vm761, %v2422, 0
      %2429 = vmatprep.subr.mxu0 %v2427
      %2430 = vmatpush1.msra.mxu0 %v2424
      %2431 = vmatprep.subr.mxu0 0.0
      %2432 = vmatpush1.msra.mxu0 0.0
      %2433 = vmatprep.subr.mxu0 0.0
      %2434 = vmatpush1.msra.mxu0 0.0
      %2435 = vmatprep.subr.mxu0 0.0
      %2436 = vmatpush1.msra.mxu0 0.0
      %2437 = vmatprep.subr.mxu0 0.0
      %2438 = vmatpush1.msra.mxu0 0.0
      %2439 = vmatprep.subr.mxu0 0.0
      %2440 = vmatpush1.msra.mxu0 0.0
      %2441 = vmatprep.subr.mxu0 0.0
      %2442 = vmatpush1.msra.mxu0 0.0
      %2443 = vmatprep.subr.mxu0 0.0
      %2444 = vmatpush1.msra.mxu0 0.0
      %2445 = vmatprep.subr.mxu0 0.0
      %2446 = vmatpush1.msra.mxu0 0.0
      %2447 = vmatprep.subr.mxu0 0.0
      %2448 = vmatpush1.msra.mxu0 0.0
      %2449 = vmatprep.subr.mxu0 0.0
      %2450 = vmatpush1.msra.mxu0 0.0
      %2451 = vmatprep.subr.mxu0 0.0
      %2452 = vmatpush1.msra.mxu0 0.0
      %2453 = vmatprep.subr.mxu0 0.0
      %2454 = vmatpush1.msra.mxu0 0.0
      %2455 = vmatprep.subr.mxu0 0.0
      %2456 = vmatpush1.msra.mxu0 0.0
      %2457 = vmatprep.subr.mxu0 0.0
      %2458 = vmatpush1.msra.mxu0 0.0
      %2459 = vmatprep.subr.mxu0 0.0
      %2460 = vmatpush1.msra.mxu0 0.0
      %2461 = vmatprep.subr.mxu0 0.0
      %2462 = vmatpush1.msra.mxu0 0.0
      %2463 = vmatprep.subr.mxu0 0.0
      %2464 = vmatpush1.msra.mxu0 0.0
      %2465 = vmatprep.subr.mxu0 0.0
      %2466 = vmatpush1.msra.mxu0 0.0
      %2467 = vmatprep.subr.mxu0 0.0
      %2468 = vmatpush1.msra.mxu0 0.0
      %2469 = vmatprep.subr.mxu0 0.0
      %2470 = vmatpush1.msra.mxu0 0.0
      %2471 = vmatprep.subr.mxu0 0.0
      %2472 = vmatpush1.msra.mxu0 0.0
      %2473 = vmatprep.subr.mxu0 0.0
      %2474 = vmatpush1.msra.mxu0 0.0
      %2475 = vmatprep.subr.mxu0 0.0
      %2476 = vmatpush1.msra.mxu0 0.0
      %2477 = vmatprep.subr.mxu0 0.0
      %2478 = vmatpush1.msra.mxu0 0.0
      %2479 = vmatprep.subr.mxu0 0.0
      %2480 = vmatpush1.msra.mxu0 0.0
      %2481 = vmatprep.subr.mxu0 0.0
      %2482 = vmatpush1.msra.mxu0 0.0
      %2483 = vmatprep.subr.mxu0 0.0
      %2484 = vmatpush1.msra.mxu0 0.0
      %2485 = vmatprep.subr.mxu0 0.0
      %2486 = vmatpush1.msra.mxu0 0.0
      %2487 = vmatprep.subr.mxu0 0.0
      %2488 = vmatpush1.msra.mxu0 0.0
      %2489 = vmatprep.subr.mxu0 0.0
      %2490 = vmatpush1.msra.mxu0 0.0
      %2491 = vmatprep.subr.mxu0 0.0
      %2492 = vmatpush1.msra.mxu0 0.0
      %2493 = vmatprep.mubr.f32.mxu0 0.0
      %2494 = vmatmul.mubr.f32.gmra.mrb[0].mxu0 %v759
      %v2495 = vpop.f32.mrb[0].mxu0
      %v2496 = vadd.f32 0.0, %v2495
      %v2497 = vpop.f32.mrb[0].mxu0
      %v2498 = vadd.f32 0.0, %v2497
      %2499 = vdwg.mxu0
      %v2500 = vadd.f32 %v726, %v2496
      %v2501 = vadd.f32 %v726, %v2498
      %2502 = vrot.lane.b32.xlu0 %v701, 16
      %v2503 = vpop.permute.xlu0 %2502
      %2504 = vrot.lane.b32.xlu0 %v703, 16
      %v2505 = vpop.permute.xlu0 %2504
      %v2506 = vsel %vm945, %v2503, %v2505
      %v2507 = vsel %vm945, %v2505, %v2503
      %v2508 = vmul.f32 %v2507, %v939
      %v2509 = vmul.f32 %v2506, %v940
      %v2511 = vsel %vm761, %v2508, 0
      %v2514 = vsel %vm761, %v2509, 0
      %2516 = vmatprep.subr.mxu0 %v2514
      %2517 = vmatpush1.msra.mxu0 %v2511
      %2518 = vmatprep.subr.mxu0 0.0
      %2519 = vmatpush1.msra.mxu0 0.0
      %2520 = vmatprep.subr.mxu0 0.0
      %2521 = vmatpush1.msra.mxu0 0.0
      %2522 = vmatprep.subr.mxu0 0.0
      %2523 = vmatpush1.msra.mxu0 0.0
      %2524 = vmatprep.subr.mxu0 0.0
      %2525 = vmatpush1.msra.mxu0 0.0
      %2526 = vmatprep.subr.mxu0 0.0
      %2527 = vmatpush1.msra.mxu0 0.0
      %2528 = vmatprep.subr.mxu0 0.0
      %2529 = vmatpush1.msra.mxu0 0.0
      %2530 = vmatprep.subr.mxu0 0.0
      %2531 = vmatpush1.msra.mxu0 0.0
      %2532 = vmatprep.subr.mxu0 0.0
      %2533 = vmatpush1.msra.mxu0 0.0
      %2534 = vmatprep.subr.mxu0 0.0
      %2535 = vmatpush1.msra.mxu0 0.0
      %2536 = vmatprep.subr.mxu0 0.0
      %2537 = vmatpush1.msra.mxu0 0.0
      %2538 = vmatprep.subr.mxu0 0.0
      %2539 = vmatpush1.msra.mxu0 0.0
      %2540 = vmatprep.subr.mxu0 0.0
      %2541 = vmatpush1.msra.mxu0 0.0
      %2542 = vmatprep.subr.mxu0 0.0
      %2543 = vmatpush1.msra.mxu0 0.0
      %2544 = vmatprep.subr.mxu0 0.0
      %2545 = vmatpush1.msra.mxu0 0.0
      %2546 = vmatprep.subr.mxu0 0.0
      %2547 = vmatpush1.msra.mxu0 0.0
      %2548 = vmatprep.subr.mxu0 0.0
      %2549 = vmatpush1.msra.mxu0 0.0
      %2550 = vmatprep.subr.mxu0 0.0
      %2551 = vmatpush1.msra.mxu0 0.0
      %2552 = vmatprep.subr.mxu0 0.0
      %2553 = vmatpush1.msra.mxu0 0.0
      %2554 = vmatprep.subr.mxu0 0.0
      %2555 = vmatpush1.msra.mxu0 0.0
      %2556 = vmatprep.subr.mxu0 0.0
      %2557 = vmatpush1.msra.mxu0 0.0
      %2558 = vmatprep.subr.mxu0 0.0
      %2559 = vmatpush1.msra.mxu0 0.0
      %2560 = vmatprep.subr.mxu0 0.0
      %2561 = vmatpush1.msra.mxu0 0.0
      %2562 = vmatprep.subr.mxu0 0.0
      %2563 = vmatpush1.msra.mxu0 0.0
      %2564 = vmatprep.subr.mxu0 0.0
      %2565 = vmatpush1.msra.mxu0 0.0
      %2566 = vmatprep.subr.mxu0 0.0
      %2567 = vmatpush1.msra.mxu0 0.0
      %2568 = vmatprep.subr.mxu0 0.0
      %2569 = vmatpush1.msra.mxu0 0.0
      %2570 = vmatprep.subr.mxu0 0.0
      %2571 = vmatpush1.msra.mxu0 0.0
      %2572 = vmatprep.subr.mxu0 0.0
      %2573 = vmatpush1.msra.mxu0 0.0
      %2574 = vmatprep.subr.mxu0 0.0
      %2575 = vmatpush1.msra.mxu0 0.0
      %2576 = vmatprep.subr.mxu0 0.0
      %2577 = vmatpush1.msra.mxu0 0.0
      %2578 = vmatprep.subr.mxu0 0.0
      %2579 = vmatpush1.msra.mxu0 0.0
      %2580 = vmatprep.mubr.f32.mxu0 0.0
      %2581 = vmatmul.mubr.f32.gmra.mrb[0].mxu0 %v951
      %v2582 = vpop.f32.mrb[0].mxu0
      %v2583 = vadd.f32 0.0, %v2582
      %v2584 = vpop.f32.mrb[0].mxu0
      %v2585 = vadd.f32 0.0, %v2584
      %2586 = vdwg.mxu0
      %v2587 = vadd.f32 %v2500, %v2583
      %v2588 = vadd.f32 %v2501, %v2585
      %2589 = vrot.lane.b32.xlu0 %v701, 15
      %v2590 = vpop.permute.xlu0 %2589
      %2591 = vrot.lane.b32.xlu0 %v703, 15
      %v2592 = vpop.permute.xlu0 %2591
      %v2593 = vsel %vm1136, %v2590, %v2592
      %v2594 = vsel %vm1136, %v2592, %v2590
      %v2595 = vmul.f32 %v2594, %v1130
      %v2596 = vmul.f32 %v2593, %v1131
      %v2598 = vsel %vm761, %v2595, 0
      %v2601 = vsel %vm761, %v2596, 0
      %2603 = vmatprep.subr.mxu0 %v2601
      %2604 = vmatpush1.msra.mxu0 %v2598
      %2605 = vmatprep.subr.mxu0 0.0
      %2606 = vmatpush1.msra.mxu0 0.0
      %2607 = vmatprep.subr.mxu0 0.0
      %2608 = vmatpush1.msra.mxu0 0.0
      %2609 = vmatprep.subr.mxu0 0.0
      %2610 = vmatpush1.msra.mxu0 0.0
      %2611 = vmatprep.subr.mxu0 0.0
      %2612 = vmatpush1.msra.mxu0 0.0
      %2613 = vmatprep.subr.mxu0 0.0
      %2614 = vmatpush1.msra.mxu0 0.0
      %2615 = vmatprep.subr.mxu0 0.0
      %2616 = vmatpush1.msra.mxu0 0.0
      %2617 = vmatprep.subr.mxu0 0.0
      %2618 = vmatpush1.msra.mxu0 0.0
      %2619 = vmatprep.subr.mxu0 0.0
      %2620 = vmatpush1.msra.mxu0 0.0
      %2621 = vmatprep.subr.mxu0 0.0
      %2622 = vmatpush1.msra.mxu0 0.0
      %2623 = vmatprep.subr.mxu0 0.0
      %2624 = vmatpush1.msra.mxu0 0.0
      %2625 = vmatprep.subr.mxu0 0.0
      %2626 = vmatpush1.msra.mxu0 0.0
      %2627 = vmatprep.subr.mxu0 0.0
      %2628 = vmatpush1.msra.mxu0 0.0
      %2629 = vmatprep.subr.mxu0 0.0
      %2630 = vmatpush1.msra.mxu0 0.0
      %2631 = vmatprep.subr.mxu0 0.0
      %2632 = vmatpush1.msra.mxu0 0.0
      %2633 = vmatprep.subr.mxu0 0.0
      %2634 = vmatpush1.msra.mxu0 0.0
      %2635 = vmatprep.subr.mxu0 0.0
      %2636 = vmatpush1.msra.mxu0 0.0
      %2637 = vmatprep.subr.mxu0 0.0
      %2638 = vmatpush1.msra.mxu0 0.0
      %2639 = vmatprep.subr.mxu0 0.0
      %2640 = vmatpush1.msra.mxu0 0.0
      %2641 = vmatprep.subr.mxu0 0.0
      %2642 = vmatpush1.msra.mxu0 0.0
      %2643 = vmatprep.subr.mxu0 0.0
      %2644 = vmatpush1.msra.mxu0 0.0
      %2645 = vmatprep.subr.mxu0 0.0
      %2646 = vmatpush1.msra.mxu0 0.0
      %2647 = vmatprep.subr.mxu0 0.0
      %2648 = vmatpush1.msra.mxu0 0.0
      %2649 = vmatprep.subr.mxu0 0.0
      %2650 = vmatpush1.msra.mxu0 0.0
      %2651 = vmatprep.subr.mxu0 0.0
      %2652 = vmatpush1.msra.mxu0 0.0
      %2653 = vmatprep.subr.mxu0 0.0
      %2654 = vmatpush1.msra.mxu0 0.0
      %2655 = vmatprep.subr.mxu0 0.0
      %2656 = vmatpush1.msra.mxu0 0.0
      %2657 = vmatprep.subr.mxu0 0.0
      %2658 = vmatpush1.msra.mxu0 0.0
      %2659 = vmatprep.subr.mxu0 0.0
      %2660 = vmatpush1.msra.mxu0 0.0
      %2661 = vmatprep.subr.mxu0 0.0
      %2662 = vmatpush1.msra.mxu0 0.0
      %2663 = vmatprep.subr.mxu0 0.0
      %2664 = vmatpush1.msra.mxu0 0.0
      %2665 = vmatprep.subr.mxu0 0.0
      %2666 = vmatpush1.msra.mxu0 0.0
      %2667 = vmatprep.mubr.f32.mxu0 0.0
      %2668 = vmatmul.mubr.f32.gmra.mrb[0].mxu0 %v1142
      %v2669 = vpop.f32.mrb[0].mxu0
      %v2670 = vadd.f32 0.0, %v2669
      %v2671 = vpop.f32.mrb[0].mxu0
      %v2672 = vadd.f32 0.0, %v2671
      %2673 = vdwg.mxu0
      %v2674 = vadd.f32 %v2587, %v2670
      %v2675 = vadd.f32 %v2588, %v2672
      %2676 = vrot.lane.b32.xlu0 %v701, 1
      %v2677 = vpop.permute.xlu0 %2676
      %2678 = vrot.lane.b32.xlu0 %v703, 1
      %v2679 = vpop.permute.xlu0 %2678
      %v2680 = vsel %vm1327, %v2677, %v2679
      %v2681 = vsel %vm1327, %v2679, %v2677
      %v2682 = vmul.f32 %v2681, %v1321
      %v2683 = vmul.f32 %v2680, %v1322
      %v2685 = vsel %vm761, %v2682, 0
      %v2688 = vsel %vm761, %v2683, 0
      %2690 = vmatprep.subr.mxu0 %v2688
      %2691 = vmatpush1.msra.mxu0 %v2685
      %2692 = vmatprep.subr.mxu0 0.0
      %2693 = vmatpush1.msra.mxu0 0.0
      %2694 = vmatprep.subr.mxu0 0.0
      %2695 = vmatpush1.msra.mxu0 0.0
      %2696 = vmatprep.subr.mxu0 0.0
      %2697 = vmatpush1.msra.mxu0 0.0
      %2698 = vmatprep.subr.mxu0 0.0
      %2699 = vmatpush1.msra.mxu0 0.0
      %2700 = vmatprep.subr.mxu0 0.0
      %2701 = vmatpush1.msra.mxu0 0.0
      %2702 = vmatprep.subr.mxu0 0.0
      %2703 = vmatpush1.msra.mxu0 0.0
      %2704 = vmatprep.subr.mxu0 0.0
      %2705 = vmatpush1.msra.mxu0 0.0
      %2706 = vmatprep.subr.mxu0 0.0
      %2707 = vmatpush1.msra.mxu0 0.0
      %2708 = vmatprep.subr.mxu0 0.0
      %2709 = vmatpush1.msra.mxu0 0.0
      %2710 = vmatprep.subr.mxu0 0.0
      %2711 = vmatpush1.msra.mxu0 0.0
      %2712 = vmatprep.subr.mxu0 0.0
      %2713 = vmatpush1.msra.mxu0 0.0
      %2714 = vmatprep.subr.mxu0 0.0
      %2715 = vmatpush1.msra.mxu0 0.0
      %2716 = vmatprep.subr.mxu0 0.0
      %2717 = vmatpush1.msra.mxu0 0.0
      %2718 = vmatprep.subr.mxu0 0.0
      %2719 = vmatpush1.msra.mxu0 0.0
      %2720 = vmatprep.subr.mxu0 0.0
      %2721 = vmatpush1.msra.mxu0 0.0
      %2722 = vmatprep.subr.mxu0 0.0
      %2723 = vmatpush1.msra.mxu0 0.0
      %2724 = vmatprep.subr.mxu0 0.0
      %2725 = vmatpush1.msra.mxu0 0.0
      %2726 = vmatprep.subr.mxu0 0.0
      %2727 = vmatpush1.msra.mxu0 0.0
      %2728 = vmatprep.subr.mxu0 0.0
      %2729 = vmatpush1.msra.mxu0 0.0
      %2730 = vmatprep.subr.mxu0 0.0
      %2731 = vmatpush1.msra.mxu0 0.0
      %2732 = vmatprep.subr.mxu0 0.0
      %2733 = vmatpush1.msra.mxu0 0.0
      %2734 = vmatprep.subr.mxu0 0.0
      %2735 = vmatpush1.msra.mxu0 0.0
      %2736 = vmatprep.subr.mxu0 0.0
      %2737 = vmatpush1.msra.mxu0 0.0
      %2738 = vmatprep.subr.mxu0 0.0
      %2739 = vmatpush1.msra.mxu0 0.0
      %2740 = vmatprep.subr.mxu0 0.0
      %2741 = vmatpush1.msra.mxu0 0.0
      %2742 = vmatprep.subr.mxu0 0.0
      %2743 = vmatpush1.msra.mxu0 0.0
      %2744 = vmatprep.subr.mxu0 0.0
      %2745 = vmatpush1.msra.mxu0 0.0
      %2746 = vmatprep.subr.mxu0 0.0
      %2747 = vmatpush1.msra.mxu0 0.0
      %2748 = vmatprep.subr.mxu0 0.0
      %2749 = vmatpush1.msra.mxu0 0.0
      %2750 = vmatprep.subr.mxu0 0.0
      %2751 = vmatpush1.msra.mxu0 0.0
      %2752 = vmatprep.subr.mxu0 0.0
      %2753 = vmatpush1.msra.mxu0 0.0
      %2754 = vmatprep.mubr.f32.mxu0 0.0
      %2755 = vmatmul.mubr.f32.gmra.mrb[0].mxu0 %v1333
      %v2756 = vpop.f32.mrb[0].mxu0
      %v2757 = vadd.f32 0.0, %v2756
      %v2758 = vpop.f32.mrb[0].mxu0
      %v2759 = vadd.f32 0.0, %v2758
      %2760 = vdwg.mxu0
      %v2761 = vadd.f32 %v2674, %v2757
      %v2762 = vadd.f32 %v2675, %v2759
      %v2763 = vmul.f32 %v701, %v1504
      %v2764 = vmul.f32 %v703, %v1505
      %v2766 = vsel %vm761, %v2763, 0
      %v2769 = vsel %vm761, %v2764, 0
      %2771 = vmatprep.subr.mxu0 %v2769
      %2772 = vmatpush1.msra.mxu0 %v2766
      %2773 = vmatprep.subr.mxu0 0.0
      %2774 = vmatpush1.msra.mxu0 0.0
      %2775 = vmatprep.subr.mxu0 0.0
      %2776 = vmatpush1.msra.mxu0 0.0
      %2777 = vmatprep.subr.mxu0 0.0
      %2778 = vmatpush1.msra.mxu0 0.0
      %2779 = vmatprep.subr.mxu0 0.0
      %2780 = vmatpush1.msra.mxu0 0.0
      %2781 = vmatprep.subr.mxu0 0.0
      %2782 = vmatpush1.msra.mxu0 0.0
      %2783 = vmatprep.subr.mxu0 0.0
      %2784 = vmatpush1.msra.mxu0 0.0
      %2785 = vmatprep.subr.mxu0 0.0
      %2786 = vmatpush1.msra.mxu0 0.0
      %2787 = vmatprep.subr.mxu0 0.0
      %2788 = vmatpush1.msra.mxu0 0.0
      %2789 = vmatprep.subr.mxu0 0.0
      %2790 = vmatpush1.msra.mxu0 0.0
      %2791 = vmatprep.subr.mxu0 0.0
      %2792 = vmatpush1.msra.mxu0 0.0
      %2793 = vmatprep.subr.mxu0 0.0
      %2794 = vmatpush1.msra.mxu0 0.0
      %2795 = vmatprep.subr.mxu0 0.0
      %2796 = vmatpush1.msra.mxu0 0.0
      %2797 = vmatprep.subr.mxu0 0.0
      %2798 = vmatpush1.msra.mxu0 0.0
      %2799 = vmatprep.subr.mxu0 0.0
      %2800 = vmatpush1.msra.mxu0 0.0
      %2801 = vmatprep.subr.mxu0 0.0
      %2802 = vmatpush1.msra.mxu0 0.0
      %2803 = vmatprep.subr.mxu0 0.0
      %2804 = vmatpush1.msra.mxu0 0.0
      %2805 = vmatprep.subr.mxu0 0.0
      %2806 = vmatpush1.msra.mxu0 0.0
      %2807 = vmatprep.subr.mxu0 0.0
      %2808 = vmatpush1.msra.mxu0 0.0
      %2809 = vmatprep.subr.mxu0 0.0
      %2810 = vmatpush1.msra.mxu0 0.0
      %2811 = vmatprep.subr.mxu0 0.0
      %2812 = vmatpush1.msra.mxu0 0.0
      %2813 = vmatprep.subr.mxu0 0.0
      %2814 = vmatpush1.msra.mxu0 0.0
      %2815 = vmatprep.subr.mxu0 0.0
      %2816 = vmatpush1.msra.mxu0 0.0
      %2817 = vmatprep.subr.mxu0 0.0
      %2818 = vmatpush1.msra.mxu0 0.0
      %2819 = vmatprep.subr.mxu0 0.0
      %2820 = vmatpush1.msra.mxu0 0.0
      %2821 = vmatprep.subr.mxu0 0.0
      %2822 = vmatpush1.msra.mxu0 0.0
      %2823 = vmatprep.subr.mxu0 0.0
      %2824 = vmatpush1.msra.mxu0 0.0
      %2825 = vmatprep.subr.mxu0 0.0
      %2826 = vmatpush1.msra.mxu0 0.0
      %2827 = vmatprep.subr.mxu0 0.0
      %2828 = vmatpush1.msra.mxu0 0.0
      %2829 = vmatprep.subr.mxu0 0.0
      %2830 = vmatpush1.msra.mxu0 0.0
      %2831 = vmatprep.subr.mxu0 0.0
      %2832 = vmatpush1.msra.mxu0 0.0
      %2833 = vmatprep.subr.mxu0 0.0
      %2834 = vmatpush1.msra.mxu0 0.0
      %2835 = vmatprep.mubr.f32.mxu0 0.0
      %2836 = vmatmul.mubr.f32.gmra.mrb[0].mxu0 %v1509
      %v2837 = vpop.f32.mrb[0].mxu0
      %v2838 = vadd.f32 0.0, %v2837
      %v2839 = vpop.f32.mrb[0].mxu0
      %v2840 = vadd.f32 0.0, %v2839
      %2841 = vdwg.mxu0
      %v2842 = vadd.f32 %v2761, %v2838
      %v2843 = vadd.f32 %v2762, %v2840
      %2844 = vrot.lane.b32.xlu0 %v701, 127
      %v2845 = vpop.permute.xlu0 %2844
      %2846 = vrot.lane.b32.xlu0 %v703, 127
      %v2847 = vpop.permute.xlu0 %2846
      %v2848 = vsel %vm1680, %v2845, %v2847
      %v2849 = vsel %vm1680, %v2847, %v2845
      %v2850 = vmul.f32 %v2848, %v1674
      %v2851 = vmul.f32 %v2849, %v1675
      %v2853 = vsel %vm761, %v2850, 0
      %v2856 = vsel %vm761, %v2851, 0
      %2858 = vmatprep.subr.mxu0 %v2856
      %2859 = vmatpush1.msra.mxu0 %v2853
      %2860 = vmatprep.subr.mxu0 0.0
      %2861 = vmatpush1.msra.mxu0 0.0
      %2862 = vmatprep.subr.mxu0 0.0
      %2863 = vmatpush1.msra.mxu0 0.0
      %2864 = vmatprep.subr.mxu0 0.0
      %2865 = vmatpush1.msra.mxu0 0.0
      %2866 = vmatprep.subr.mxu0 0.0
      %2867 = vmatpush1.msra.mxu0 0.0
      %2868 = vmatprep.subr.mxu0 0.0
      %2869 = vmatpush1.msra.mxu0 0.0
      %2870 = vmatprep.subr.mxu0 0.0
      %2871 = vmatpush1.msra.mxu0 0.0
      %2872 = vmatprep.subr.mxu0 0.0
      %2873 = vmatpush1.msra.mxu0 0.0
      %2874 = vmatprep.subr.mxu0 0.0
      %2875 = vmatpush1.msra.mxu0 0.0
      %2876 = vmatprep.subr.mxu0 0.0
      %2877 = vmatpush1.msra.mxu0 0.0
      %2878 = vmatprep.subr.mxu0 0.0
      %2879 = vmatpush1.msra.mxu0 0.0
      %2880 = vmatprep.subr.mxu0 0.0
      %2881 = vmatpush1.msra.mxu0 0.0
      %2882 = vmatprep.subr.mxu0 0.0
      %2883 = vmatpush1.msra.mxu0 0.0
      %2884 = vmatprep.subr.mxu0 0.0
      %2885 = vmatpush1.msra.mxu0 0.0
      %2886 = vmatprep.subr.mxu0 0.0
      %2887 = vmatpush1.msra.mxu0 0.0
      %2888 = vmatprep.subr.mxu0 0.0
      %2889 = vmatpush1.msra.mxu0 0.0
      %2890 = vmatprep.subr.mxu0 0.0
      %2891 = vmatpush1.msra.mxu0 0.0
      %2892 = vmatprep.subr.mxu0 0.0
      %2893 = vmatpush1.msra.mxu0 0.0
      %2894 = vmatprep.subr.mxu0 0.0
      %2895 = vmatpush1.msra.mxu0 0.0
      %2896 = vmatprep.subr.mxu0 0.0
      %2897 = vmatpush1.msra.mxu0 0.0
      %2898 = vmatprep.subr.mxu0 0.0
      %2899 = vmatpush1.msra.mxu0 0.0
      %2900 = vmatprep.subr.mxu0 0.0
      %2901 = vmatpush1.msra.mxu0 0.0
      %2902 = vmatprep.subr.mxu0 0.0
      %2903 = vmatpush1.msra.mxu0 0.0
      %2904 = vmatprep.subr.mxu0 0.0
      %2905 = vmatpush1.msra.mxu0 0.0
      %2906 = vmatprep.subr.mxu0 0.0
      %2907 = vmatpush1.msra.mxu0 0.0
      %2908 = vmatprep.subr.mxu0 0.0
      %2909 = vmatpush1.msra.mxu0 0.0
      %2910 = vmatprep.subr.mxu0 0.0
      %2911 = vmatpush1.msra.mxu0 0.0
      %2912 = vmatprep.subr.mxu0 0.0
      %2913 = vmatpush1.msra.mxu0 0.0
      %2914 = vmatprep.subr.mxu0 0.0
      %2915 = vmatpush1.msra.mxu0 0.0
      %2916 = vmatprep.subr.mxu0 0.0
      %2917 = vmatpush1.msra.mxu0 0.0
      %2918 = vmatprep.subr.mxu0 0.0
      %2919 = vmatpush1.msra.mxu0 0.0
      %2920 = vmatprep.subr.mxu0 0.0
      %2921 = vmatpush1.msra.mxu0 0.0
      %2922 = vmatprep.mubr.f32.mxu0 0.0
      %2923 = vmatmul.mubr.f32.gmra.mrb[0].mxu0 %v1686
      %v2924 = vpop.f32.mrb[0].mxu0
      %v2925 = vadd.f32 0.0, %v2924
      %v2926 = vpop.f32.mrb[0].mxu0
      %v2927 = vadd.f32 0.0, %v2926
      %2928 = vdwg.mxu0
      %v2929 = vadd.f32 %v2842, %v2925
      %v2930 = vadd.f32 %v2843, %v2927
      %2931 = vrot.lane.b32.xlu0 %v701, 113
      %v2932 = vpop.permute.xlu0 %2931
      %2933 = vrot.lane.b32.xlu0 %v703, 113
      %v2934 = vpop.permute.xlu0 %2933
      %v2935 = vsel %vm1871, %v2932, %v2934
      %v2936 = vsel %vm1871, %v2934, %v2932
      %v2937 = vmul.f32 %v2935, %v1865
      %v2938 = vmul.f32 %v2936, %v1866
      %v2940 = vsel %vm761, %v2937, 0
      %v2943 = vsel %vm761, %v2938, 0
      %2945 = vmatprep.subr.mxu0 %v2943
      %2946 = vmatpush1.msra.mxu0 %v2940
      %2947 = vmatprep.subr.mxu0 0.0
      %2948 = vmatpush1.msra.mxu0 0.0
      %2949 = vmatprep.subr.mxu0 0.0
      %2950 = vmatpush1.msra.mxu0 0.0
      %2951 = vmatprep.subr.mxu0 0.0
      %2952 = vmatpush1.msra.mxu0 0.0
      %2953 = vmatprep.subr.mxu0 0.0
      %2954 = vmatpush1.msra.mxu0 0.0
      %2955 = vmatprep.subr.mxu0 0.0
      %2956 = vmatpush1.msra.mxu0 0.0
      %2957 = vmatprep.subr.mxu0 0.0
      %2958 = vmatpush1.msra.mxu0 0.0
      %2959 = vmatprep.subr.mxu0 0.0
      %2960 = vmatpush1.msra.mxu0 0.0
      %2961 = vmatprep.subr.mxu0 0.0
      %2962 = vmatpush1.msra.mxu0 0.0
      %2963 = vmatprep.subr.mxu0 0.0
      %2964 = vmatpush1.msra.mxu0 0.0
      %2965 = vmatprep.subr.mxu0 0.0
      %2966 = vmatpush1.msra.mxu0 0.0
      %2967 = vmatprep.subr.mxu0 0.0
      %2968 = vmatpush1.msra.mxu0 0.0
      %2969 = vmatprep.subr.mxu0 0.0
      %2970 = vmatpush1.msra.mxu0 0.0
      %2971 = vmatprep.subr.mxu0 0.0
      %2972 = vmatpush1.msra.mxu0 0.0
      %2973 = vmatprep.subr.mxu0 0.0
      %2974 = vmatpush1.msra.mxu0 0.0
      %2975 = vmatprep.subr.mxu0 0.0
      %2976 = vmatpush1.msra.mxu0 0.0
      %2977 = vmatprep.subr.mxu0 0.0
      %2978 = vmatpush1.msra.mxu0 0.0
      %2979 = vmatprep.subr.mxu0 0.0
      %2980 = vmatpush1.msra.mxu0 0.0
      %2981 = vmatprep.subr.mxu0 0.0
      %2982 = vmatpush1.msra.mxu0 0.0
      %2983 = vmatprep.subr.mxu0 0.0
      %2984 = vmatpush1.msra.mxu0 0.0
      %2985 = vmatprep.subr.mxu0 0.0
      %2986 = vmatpush1.msra.mxu0 0.0
      %2987 = vmatprep.subr.mxu0 0.0
      %2988 = vmatpush1.msra.mxu0 0.0
      %2989 = vmatprep.subr.mxu0 0.0
      %2990 = vmatpush1.msra.mxu0 0.0
      %2991 = vmatprep.subr.mxu0 0.0
      %2992 = vmatpush1.msra.mxu0 0.0
      %2993 = vmatprep.subr.mxu0 0.0
      %2994 = vmatpush1.msra.mxu0 0.0
      %2995 = vmatprep.subr.mxu0 0.0
      %2996 = vmatpush1.msra.mxu0 0.0
      %2997 = vmatprep.subr.mxu0 0.0
      %2998 = vmatpush1.msra.mxu0 0.0
      %2999 = vmatprep.subr.mxu0 0.0
      %3000 = vmatpush1.msra.mxu0 0.0
      %3001 = vmatprep.subr.mxu0 0.0
      %3002 = vmatpush1.msra.mxu0 0.0
      %3003 = vmatprep.subr.mxu0 0.0
      %3004 = vmatpush1.msra.mxu0 0.0
      %3005 = vmatprep.subr.mxu0 0.0
      %3006 = vmatpush1.msra.mxu0 0.0
      %3007 = vmatprep.subr.mxu0 0.0
      %3008 = vmatpush1.msra.mxu0 0.0
      %3009 = vmatprep.mubr.f32.mxu0 0.0
      %3010 = vmatmul.mubr.f32.gmra.mrb[0].mxu0 %v1877
      %v3011 = vpop.f32.mrb[0].mxu0
      %v3012 = vadd.f32 0.0, %v3011
      %v3013 = vpop.f32.mrb[0].mxu0
      %v3014 = vadd.f32 0.0, %v3013
      %3015 = vdwg.mxu0
      %v3016 = vadd.f32 %v2929, %v3012
      %v3017 = vadd.f32 %v2930, %v3014
      %3018 = vrot.lane.b32.xlu0 %v701, 112
      %v3019 = vpop.permute.xlu0 %3018
      %3020 = vrot.lane.b32.xlu0 %v703, 112
      %v3021 = vpop.permute.xlu0 %3020
      %v3022 = vsel %vm2054, %v3019, %v3021
      %v3023 = vsel %vm2054, %v3021, %v3019
      %v3024 = vmul.f32 %v3022, %v2048
      %v3025 = vmul.f32 %v3023, %v2049
      %v3027 = vsel %vm761, %v3024, 0
      %v3030 = vsel %vm761, %v3025, 0
      %3032 = vmatprep.subr.mxu0 %v3030
      %3033 = vmatpush1.msra.mxu0 %v3027
      %3034 = vmatprep.subr.mxu0 0.0
      %3035 = vmatpush1.msra.mxu0 0.0
      %3036 = vmatprep.subr.mxu0 0.0
      %3037 = vmatpush1.msra.mxu0 0.0
      %3038 = vmatprep.subr.mxu0 0.0
      %3039 = vmatpush1.msra.mxu0 0.0
      %3040 = vmatprep.subr.mxu0 0.0
      %3041 = vmatpush1.msra.mxu0 0.0
      %3042 = vmatprep.subr.mxu0 0.0
      %3043 = vmatpush1.msra.mxu0 0.0
      %3044 = vmatprep.subr.mxu0 0.0
      %3045 = vmatpush1.msra.mxu0 0.0
      %3046 = vmatprep.subr.mxu0 0.0
      %3047 = vmatpush1.msra.mxu0 0.0
      %3048 = vmatprep.subr.mxu0 0.0
      %3049 = vmatpush1.msra.mxu0 0.0
      %3050 = vmatprep.subr.mxu0 0.0
      %3051 = vmatpush1.msra.mxu0 0.0
      %3052 = vmatprep.subr.mxu0 0.0
      %3053 = vmatpush1.msra.mxu0 0.0
      %3054 = vmatprep.subr.mxu0 0.0
      %3055 = vmatpush1.msra.mxu0 0.0
      %3056 = vmatprep.subr.mxu0 0.0
      %3057 = vmatpush1.msra.mxu0 0.0
      %3058 = vmatprep.subr.mxu0 0.0
      %3059 = vmatpush1.msra.mxu0 0.0
      %3060 = vmatprep.subr.mxu0 0.0
      %3061 = vmatpush1.msra.mxu0 0.0
      %3062 = vmatprep.subr.mxu0 0.0
      %3063 = vmatpush1.msra.mxu0 0.0
      %3064 = vmatprep.subr.mxu0 0.0
      %3065 = vmatpush1.msra.mxu0 0.0
      %3066 = vmatprep.subr.mxu0 0.0
      %3067 = vmatpush1.msra.mxu0 0.0
      %3068 = vmatprep.subr.mxu0 0.0
      %3069 = vmatpush1.msra.mxu0 0.0
      %3070 = vmatprep.subr.mxu0 0.0
      %3071 = vmatpush1.msra.mxu0 0.0
      %3072 = vmatprep.subr.mxu0 0.0
      %3073 = vmatpush1.msra.mxu0 0.0
      %3074 = vmatprep.subr.mxu0 0.0
      %3075 = vmatpush1.msra.mxu0 0.0
      %3076 = vmatprep.subr.mxu0 0.0
      %3077 = vmatpush1.msra.mxu0 0.0
      %3078 = vmatprep.subr.mxu0 0.0
      %3079 = vmatpush1.msra.mxu0 0.0
      %3080 = vmatprep.subr.mxu0 0.0
      %3081 = vmatpush1.msra.mxu0 0.0
      %3082 = vmatprep.subr.mxu0 0.0
      %3083 = vmatpush1.msra.mxu0 0.0
      %3084 = vmatprep.subr.mxu0 0.0
      %3085 = vmatpush1.msra.mxu0 0.0
      %3086 = vmatprep.subr.mxu0 0.0
      %3087 = vmatpush1.msra.mxu0 0.0
      %3088 = vmatprep.subr.mxu0 0.0
      %3089 = vmatpush1.msra.mxu0 0.0
      %3090 = vmatprep.subr.mxu0 0.0
      %3091 = vmatpush1.msra.mxu0 0.0
      %3092 = vmatprep.subr.mxu0 0.0
      %3093 = vmatpush1.msra.mxu0 0.0
      %3094 = vmatprep.subr.mxu0 0.0
      %3095 = vmatpush1.msra.mxu0 0.0
      %3096 = vmatprep.mubr.f32.mxu0 0.0
      %3097 = vmatmul.mubr.f32.gmra.mrb[0].mxu0 %v2060
      %v3098 = vpop.f32.mrb[0].mxu0
      %v3099 = vadd.f32 0.0, %v3098
      %v3100 = vpop.f32.mrb[0].mxu0
      %v3101 = vadd.f32 0.0, %v3100
      %3102 = vdwg.mxu0
      %v3103 = vadd.f32 %v3016, %v3099
      %v3104 = vadd.f32 %v3017, %v3101
      %3105 = vrot.lane.b32.xlu0 %v701, 111
      %v3106 = vpop.permute.xlu0 %3105
      %3107 = vrot.lane.b32.xlu0 %v703, 111
      %v3108 = vpop.permute.xlu0 %3107
      %v3109 = vsel %vm2237, %v3106, %v3108
      %v3110 = vsel %vm2237, %v3108, %v3106
      %v3111 = vmul.f32 %v3109, %v2231
      %v3112 = vmul.f32 %v3110, %v2232
      %v3114 = vsel %vm761, %v3111, 0
      %v3117 = vsel %vm761, %v3112, 0
      %3119 = vmatprep.subr.mxu0 %v3117
      %3120 = vmatpush1.msra.mxu0 %v3114
      %3121 = vmatprep.subr.mxu0 0.0
      %3122 = vmatpush1.msra.mxu0 0.0
      %3123 = vmatprep.subr.mxu0 0.0
      %3124 = vmatpush1.msra.mxu0 0.0
      %3125 = vmatprep.subr.mxu0 0.0
      %3126 = vmatpush1.msra.mxu0 0.0
      %3127 = vmatprep.subr.mxu0 0.0
      %3128 = vmatpush1.msra.mxu0 0.0
      %3129 = vmatprep.subr.mxu0 0.0
      %3130 = vmatpush1.msra.mxu0 0.0
      %3131 = vmatprep.subr.mxu0 0.0
      %3132 = vmatpush1.msra.mxu0 0.0
      %3133 = vmatprep.subr.mxu0 0.0
      %3134 = vmatpush1.msra.mxu0 0.0
      %3135 = vmatprep.subr.mxu0 0.0
      %3136 = vmatpush1.msra.mxu0 0.0
      %3137 = vmatprep.subr.mxu0 0.0
      %3138 = vmatpush1.msra.mxu0 0.0
      %3139 = vmatprep.subr.mxu0 0.0
      %3140 = vmatpush1.msra.mxu0 0.0
      %3141 = vmatprep.subr.mxu0 0.0
      %3142 = vmatpush1.msra.mxu0 0.0
      %3143 = vmatprep.subr.mxu0 0.0
      %3144 = vmatpush1.msra.mxu0 0.0
      %3145 = vmatprep.subr.mxu0 0.0
      %3146 = vmatpush1.msra.mxu0 0.0
      %3147 = vmatprep.subr.mxu0 0.0
      %3148 = vmatpush1.msra.mxu0 0.0
      %3149 = vmatprep.subr.mxu0 0.0
      %3150 = vmatpush1.msra.mxu0 0.0
      %3151 = vmatprep.subr.mxu0 0.0
      %3152 = vmatpush1.msra.mxu0 0.0
      %3153 = vmatprep.subr.mxu0 0.0
      %3154 = vmatpush1.msra.mxu0 0.0
      %3155 = vmatprep.subr.mxu0 0.0
      %3156 = vmatpush1.msra.mxu0 0.0
      %3157 = vmatprep.subr.mxu0 0.0
      %3158 = vmatpush1.msra.mxu0 0.0
      %3159 = vmatprep.subr.mxu0 0.0
      %3160 = vmatpush1.msra.mxu0 0.0
      %3161 = vmatprep.subr.mxu0 0.0
      %3162 = vmatpush1.msra.mxu0 0.0
      %3163 = vmatprep.subr.mxu0 0.0
      %3164 = vmatpush1.msra.mxu0 0.0
      %3165 = vmatprep.subr.mxu0 0.0
      %3166 = vmatpush1.msra.mxu0 0.0
      %3167 = vmatprep.subr.mxu0 0.0
      %3168 = vmatpush1.msra.mxu0 0.0
      %3169 = vmatprep.subr.mxu0 0.0
      %3170 = vmatpush1.msra.mxu0 0.0
      %3171 = vmatprep.subr.mxu0 0.0
      %3172 = vmatpush1.msra.mxu0 0.0
      %3173 = vmatprep.subr.mxu0 0.0
      %3174 = vmatpush1.msra.mxu0 0.0
      %3175 = vmatprep.subr.mxu0 0.0
      %3176 = vmatpush1.msra.mxu0 0.0
      %3177 = vmatprep.subr.mxu0 0.0
      %3178 = vmatpush1.msra.mxu0 0.0
      %3179 = vmatprep.subr.mxu0 0.0
      %3180 = vmatpush1.msra.mxu0 0.0
      %3181 = vmatprep.subr.mxu0 0.0
      %3182 = vmatpush1.msra.mxu0 0.0
      %3183 = vmatprep.mubr.f32.mxu0 0.0
      %3184 = vmatmul.mubr.f32.gmra.mrb[0].mxu0 %v2243
      %v3185 = vpop.f32.mrb[0].mxu0
      %v3186 = vadd.f32 0.0, %v3185
      %v3187 = vpop.f32.mrb[0].mxu0
      %v3188 = vadd.f32 0.0, %v3187
      %3189 = vdwg.mxu0
      %v3190 = vadd.f32 %v3103, %v3186
      %v3191 = vadd.f32 %v3104, %v3188
      %v3192 = vmax.f32 %v3190, 0.0
      %v3193 = vmax.f32 %v3191, 0.0
      %v3194 = vand.u32 2147483647, %v2411
      %v3195 = vand.u32 2147483647, %v2412
      %v3196 = vand.u32 2147483647, %v2413
      %v3197 = vand.u32 2147483647, %v2414
      %vm3198 = vcmp.ge.f32.partialorder %v3194, %v3196
      %vm3199 = vcmp.ge.f32.partialorder %v3195, %v3197
      %v3200 = vsel %vm3198, %v2411, %v2413
      %v3201 = vsel %vm3199, %v2412, %v2414
      %v3202 = vadd.f32 %v718, 0.5
      %v3203 = vadd.f32 %v719, 0.5
      %v3204 = vmul.f32 %v3202, 0.0625
      %v3205 = vmul.f32 %v3203, 0.0625
      %v3206 = vadd.f32 %v714, 0.5
      %v3207 = vadd.f32 %v715, 0.5
      %v3208 = vmul.f32 %v3206, 0.0625
      %v3209 = vmul.f32 %v3207, 0.0625
      %v3210 = vld [vmem:[%s7] sm:$0x1]
      %v3211 = vld [vmem:[%s7 + $0x10] sm:$0x1]
      %3213 = vset.pattern.permute.xlu0 0
      %3214 = vperm.xlu0 %3213, %v3211
      %v3215 = vpop.permute.xlu0 %3214
      %vm3217 = vcmask 64512
      %v3219 = vsel %vm3217, %v3210, 0
      %3221 = vmatprep.subr.mxu0 %v3201
      %3222 = vmatpush1.msra.mxu0 %v3200
      %3223 = vmatprep.subr.mxu0 0.0
      %3224 = vmatpush1.msra.mxu0 0.0
      %3225 = vmatprep.subr.mxu0 0.0
      %3226 = vmatpush1.msra.mxu0 0.0
      %3227 = vmatprep.subr.mxu0 0.0
      %3228 = vmatpush1.msra.mxu0 0.0
      %3229 = vmatprep.subr.mxu0 0.0
      %3230 = vmatpush1.msra.mxu0 0.0
      %3231 = vmatprep.subr.mxu0 0.0
      %3232 = vmatpush1.msra.mxu0 0.0
      %3233 = vmatprep.subr.mxu0 0.0
      %3234 = vmatpush1.msra.mxu0 0.0
      %3235 = vmatprep.subr.mxu0 0.0
      %3236 = vmatpush1.msra.mxu0 0.0
      %3237 = vmatprep.subr.mxu0 0.0
      %3238 = vmatpush1.msra.mxu0 0.0
      %3239 = vmatprep.subr.mxu0 0.0
      %3240 = vmatpush1.msra.mxu0 0.0
      %3241 = vmatprep.subr.mxu0 0.0
      %3242 = vmatpush1.msra.mxu0 0.0
      %3243 = vmatprep.subr.mxu0 0.0
      %3244 = vmatpush1.msra.mxu0 0.0
      %3245 = vmatprep.subr.mxu0 0.0
      %3246 = vmatpush1.msra.mxu0 0.0
      %3247 = vmatprep.subr.mxu0 0.0
      %3248 = vmatpush1.msra.mxu0 0.0
      %3249 = vmatprep.subr.mxu0 0.0
      %3250 = vmatpush1.msra.mxu0 0.0
      %3251 = vmatprep.subr.mxu0 0.0
      %3252 = vmatpush1.msra.mxu0 0.0
      %3253 = vmatprep.subr.mxu0 0.0
      %3254 = vmatpush1.msra.mxu0 0.0
      %3255 = vmatprep.subr.mxu0 0.0
      %3256 = vmatpush1.msra.mxu0 0.0
      %3257 = vmatprep.subr.mxu0 0.0
      %3258 = vmatpush1.msra.mxu0 0.0
      %3259 = vmatprep.subr.mxu0 0.0
      %3260 = vmatpush1.msra.mxu0 0.0
      %3261 = vmatprep.subr.mxu0 0.0
      %3262 = vmatpush1.msra.mxu0 0.0
      %3263 = vmatprep.subr.mxu0 0.0
      %3264 = vmatpush1.msra.mxu0 0.0
      %3265 = vmatprep.subr.mxu0 0.0
      %3266 = vmatpush1.msra.mxu0 0.0
      %3267 = vmatprep.subr.mxu0 0.0
      %3268 = vmatpush1.msra.mxu0 0.0
      %3269 = vmatprep.subr.mxu0 0.0
      %3270 = vmatpush1.msra.mxu0 0.0
      %3271 = vmatprep.subr.mxu0 0.0
      %3272 = vmatpush1.msra.mxu0 0.0
      %3273 = vmatprep.subr.mxu0 0.0
      %3274 = vmatpush1.msra.mxu0 0.0
      %3275 = vmatprep.subr.mxu0 0.0
      %3276 = vmatpush1.msra.mxu0 0.0
      %3277 = vmatprep.subr.mxu0 0.0
      %3278 = vmatpush1.msra.mxu0 0.0
      %3279 = vmatprep.subr.mxu0 0.0
      %3280 = vmatpush1.msra.mxu0 0.0
      %3281 = vmatprep.subr.mxu0 0.0
      %3282 = vmatpush1.msra.mxu0 0.0
      %3283 = vmatprep.subr.mxu0 0.0
      %3284 = vmatpush1.msra.mxu0 0.0
      %3285 = vmatprep.mubr.f32.mxu0 0.0
      %3286 = vmatmul.mubr.f32.gmra.mrb[0].mxu0 %v3219
      %v3287 = vpop.f32.mrb[0].mxu0
      %v3288 = vadd.f32 %v3215, %v3287
      %v3289 = vpop.f32.mrb[0].mxu0
      %v3290 = vadd.f32 %v3215, %v3289
      %3291 = vdwg.mxu0
      %vm3292 = vcmask 1040384
      %v3293 = vsel %vm3292, %v3288, -inf
      %v3294 = vsel %vm3292, %v3290, -inf
      %v3295 = vmax.f32 %v3293, %v3294
      %3296 = vmax.xlane.f32.xlu0 %v3295
      %v3297 = vpop.xlane.xlu0 %3296
      %v3298 = vsub.f32 %v3288, %v3297
      %v3299 = vsub.f32 %v3290, %v3297
      %v3300 = vmul.f32 %v3298, 1.442695
      %v3301 = vpow.pop %v3300
      %v3302 = vmul.f32 %v3299, 1.442695
      %v3303 = vpow.pop %v3302
      %v3304 = vsel %vm3292, %v3301, 0.0
      %v3305 = vsel %vm3292, %v3303, 0.0
      %v3306 = vadd.f32 %v3304, %v3305
      %3307 = vadd.xlane.f32.xlu0 %v3306
      %v3308 = vpop.xlane.xlu0 %3307
      %v3309 = vrcp.pop %v3308
      %v3310 = vmul.f32 %v3301, %v3309
      %v3311 = vmul.f32 %v3303, %v3309
      %v3312 = vmul.f32 %v3310, %v3204
      %v3313 = vmul.f32 %v3311, %v3205
      %v3314 = vsel %vm3292, %v3312, 0.0
      %v3315 = vsel %vm3292, %v3313, 0.0
      %v3316 = vadd.f32 %v3314, %v3315
      %3317 = vadd.xlane.f32.xlu0 %v3316
      %v3318 = vpop.xlane.xlu0 %3317
      %v3319 = vmul.f32 %v3310, %v3208
      %v3320 = vmul.f32 %v3311, %v3209
      %v3321 = vsel %vm3292, %v3319, 0.0
      %v3322 = vsel %vm3292, %v3320, 0.0
      %v3323 = vadd.f32 %v3321, %v3322
      %3324 = vadd.xlane.f32.xlu0 %v3323
      %v3325 = vpop.xlane.xlu0 %3324
      %v3326 = vld [vmem:[%s7 + $0x8] sm:$0x1]
      %v3327 = vld [vmem:[%s7 + $0x18] sm:$0x1]
      %3329 = vset.pattern.permute.xlu0 0
      %3330 = vperm.xlu0 %3329, %v3327
      %v3331 = vpop.permute.xlu0 %3330
      %v3334 = vsel %vm3217, %v3326, 0
      %3336 = vmatprep.subr.mxu0 %v3201
      %3337 = vmatpush1.msra.mxu0 %v3200
      %3338 = vmatprep.subr.mxu0 0.0
      %3339 = vmatpush1.msra.mxu0 0.0
      %3340 = vmatprep.subr.mxu0 0.0
      %3341 = vmatpush1.msra.mxu0 0.0
      %3342 = vmatprep.subr.mxu0 0.0
      %3343 = vmatpush1.msra.mxu0 0.0
      %3344 = vmatprep.subr.mxu0 0.0
      %3345 = vmatpush1.msra.mxu0 0.0
      %3346 = vmatprep.subr.mxu0 0.0
      %3347 = vmatpush1.msra.mxu0 0.0
      %3348 = vmatprep.subr.mxu0 0.0
      %3349 = vmatpush1.msra.mxu0 0.0
      %3350 = vmatprep.subr.mxu0 0.0
      %3351 = vmatpush1.msra.mxu0 0.0
      %3352 = vmatprep.subr.mxu0 0.0
      %3353 = vmatpush1.msra.mxu0 0.0
      %3354 = vmatprep.subr.mxu0 0.0
      %3355 = vmatpush1.msra.mxu0 0.0
      %3356 = vmatprep.subr.mxu0 0.0
      %3357 = vmatpush1.msra.mxu0 0.0
      %3358 = vmatprep.subr.mxu0 0.0
      %3359 = vmatpush1.msra.mxu0 0.0
      %3360 = vmatprep.subr.mxu0 0.0
      %3361 = vmatpush1.msra.mxu0 0.0
      %3362 = vmatprep.subr.mxu0 0.0
      %3363 = vmatpush1.msra.mxu0 0.0
      %3364 = vmatprep.subr.mxu0 0.0
      %3365 = vmatpush1.msra.mxu0 0.0
      %3366 = vmatprep.subr.mxu0 0.0
      %3367 = vmatpush1.msra.mxu0 0.0
      %3368 = vmatprep.subr.mxu0 0.0
      %3369 = vmatpush1.msra.mxu0 0.0
      %3370 = vmatprep.subr.mxu0 0.0
      %3371 = vmatpush1.msra.mxu0 0.0
      %3372 = vmatprep.subr.mxu0 0.0
      %3373 = vmatpush1.msra.mxu0 0.0
      %3374 = vmatprep.subr.mxu0 0.0
      %3375 = vmatpush1.msra.mxu0 0.0
      %3376 = vmatprep.subr.mxu0 0.0
      %3377 = vmatpush1.msra.mxu0 0.0
      %3378 = vmatprep.subr.mxu0 0.0
      %3379 = vmatpush1.msra.mxu0 0.0
      %3380 = vmatprep.subr.mxu0 0.0
      %3381 = vmatpush1.msra.mxu0 0.0
      %3382 = vmatprep.subr.mxu0 0.0
      %3383 = vmatpush1.msra.mxu0 0.0
      %3384 = vmatprep.subr.mxu0 0.0
      %3385 = vmatpush1.msra.mxu0 0.0
      %3386 = vmatprep.subr.mxu0 0.0
      %3387 = vmatpush1.msra.mxu0 0.0
      %3388 = vmatprep.subr.mxu0 0.0
      %3389 = vmatpush1.msra.mxu0 0.0
      %3390 = vmatprep.subr.mxu0 0.0
      %3391 = vmatpush1.msra.mxu0 0.0
      %3392 = vmatprep.subr.mxu0 0.0
      %3393 = vmatpush1.msra.mxu0 0.0
      %3394 = vmatprep.subr.mxu0 0.0
      %3395 = vmatpush1.msra.mxu0 0.0
      %3396 = vmatprep.subr.mxu0 0.0
      %3397 = vmatpush1.msra.mxu0 0.0
      %3398 = vmatprep.subr.mxu0 0.0
      %3399 = vmatpush1.msra.mxu0 0.0
      %3400 = vmatprep.mubr.f32.mxu0 0.0
      %3401 = vmatmul.mubr.f32.gmra.mrb[0].mxu0 %v3334
      %v3402 = vpop.f32.mrb[0].mxu0
      %v3403 = vadd.f32 %v3331, %v3402
      %v3404 = vpop.f32.mrb[0].mxu0
      %v3405 = vadd.f32 %v3331, %v3404
      %3406 = vdwg.mxu0
      %v3407 = vsel %vm3292, %v3403, -inf
      %v3408 = vsel %vm3292, %v3405, -inf
      %v3409 = vmax.f32 %v3407, %v3408
      %3410 = vmax.xlane.f32.xlu0 %v3409
      %v3411 = vpop.xlane.xlu0 %3410
      %v3412 = vsub.f32 %v3403, %v3411
      %v3413 = vsub.f32 %v3405, %v3411
      %v3414 = vmul.f32 %v3412, 1.442695
      %v3415 = vpow.pop %v3414
      %v3416 = vmul.f32 %v3413, 1.442695
      %v3417 = vpow.pop %v3416
      %v3418 = vsel %vm3292, %v3415, 0.0
      %v3419 = vsel %vm3292, %v3417, 0.0
      %v3420 = vadd.f32 %v3418, %v3419
      %3421 = vadd.xlane.f32.xlu0 %v3420
      %v3422 = vpop.xlane.xlu0 %3421
      %v3423 = vrcp.pop %v3422
      %v3424 = vmul.f32 %v3415, %v3423
      %v3425 = vmul.f32 %v3417, %v3423
      %v3426 = vmul.f32 %v3424, %v3204
      %v3427 = vmul.f32 %v3425, %v3205
      %v3428 = vsel %vm3292, %v3426, 0.0
      %v3429 = vsel %vm3292, %v3427, 0.0
      %v3430 = vadd.f32 %v3428, %v3429
      %3431 = vadd.xlane.f32.xlu0 %v3430
      %v3432 = vpop.xlane.xlu0 %3431
      %v3433 = vmul.f32 %v3424, %v3208
      %v3434 = vmul.f32 %v3425, %v3209
      %v3435 = vsel %vm3292, %v3433, 0.0
      %v3436 = vsel %vm3292, %v3434, 0.0
      %v3437 = vadd.f32 %v3435, %v3436
      %3438 = vadd.xlane.f32.xlu0 %v3437
      %v3439 = vpop.xlane.xlu0 %3438
      %v3440 = vadd.f32 %v3318, %v3432
      %v3441 = vmul.f32 %v3440, 0.5
      %v3442 = vadd.f32 %v3325, %v3439
      %v3443 = vmul.f32 %v3442, 0.5
      %v3444 = vsub.f32 %v3432, %v3318
      %v3445 = vsub.f32 %v3439, %v3325
      %vm3446 = vcmp.eq.s32.totalorder %v706, 0
      %vm3447 = vcmp.eq.s32.totalorder %v706, 1
      %vm3448 = vcmp.eq.s32.totalorder %v706, 2
      %v3449 = vsel %vm3448, %v3444, %v3445
      %v3450 = vsel %vm3447, %v3443, %v3449
      %v3451 = vsel %vm3446, %v3441, %v3450
      %vm3452 = vcmask 24576
      %3453 = vst.msk [vmem:[%s459] sm:$0x1] %vm3452, %v3451
      %v3454 = vadd.f32 %v3200, %v3201
      %3455 = vadd.xlane.f32.xlu0 %v3454
      %v3456 = vpop.xlane.xlu0 %3455
      %v3457 = vmul.f32 %v3456, 0.00390625
      %v3458 = vadd.f32 %v3192, %v3193
      %3459 = vadd.xlane.f32.xlu0 %v3458
      %v3460 = vpop.xlane.xlu0 %3459
      %v3461 = vmul.f32 %v3460, 0.00390625
      %v3462 = vlaneseq
      %v3463 = vshrl.u32 %v3462, 7
      %vm3464 = vcmp.eq.s32.totalorder %v3463, 0
      %vm3465 = vcmp.eq.s32.totalorder %v3463, 1
      %vm3466 = vcmp.eq.s32.totalorder %v3463, 2
      %v3467 = vlaneseq
      %v3468 = vshrl.u32 %v3467, 7
      %v3469 = vsub.s32 0, %v3468
      %v3470 = vrot.slane %v3432, %v3469
      %v3471 = vlaneseq
      %v3472 = vshrl.u32 %v3471, 7
      %v3473 = vsub.s32 0, %v3472
      %v3474 = vrot.slane %v3439, %v3473
      %v3475 = vsel %vm3466, %v3470, %v3474
      %v3476 = vlaneseq
      %v3477 = vshrl.u32 %v3476, 7
      %v3478 = vsub.s32 0, %v3477
      %v3479 = vrot.slane %v3325, %v3478
      %v3480 = vsel %vm3465, %v3479, %v3475
      %v3481 = vlaneseq
      %v3482 = vshrl.u32 %v3481, 7
      %v3483 = vsub.s32 0, %v3482
      %v3484 = vrot.slane %v3318, %v3483
      %v3485 = vsel %vm3464, %v3484, %v3480
      %v3486 = vld [vmem:[%s8] sm:$0xff]
      %v3487 = vmul.f32 %v3457, %v3486
      %vm3488 = vcmask 7168
      %v3489 = vsel %vm3488, %v3487, 0.0
      %v3490 = vrot.slane %v3489, 4
      %v3491 = vadd.f32 %v3489, %v3490
      %v3492 = vrot.slane %v3491, 2
      %v3493 = vadd.f32 %v3491, %v3492
      %v3494 = vrot.slane %v3493, 1
      %v3495 = vadd.f32 %v3493, %v3494
      %v3496 = vld [vmem:[%s8 + $0x8] sm:$0xff]
      %v3497 = vmul.f32 %v3461, %v3496
      %v3498 = vsel %vm3488, %v3497, 0.0
      %v3499 = vrot.slane %v3498, 4
      %v3500 = vadd.f32 %v3498, %v3499
      %v3501 = vrot.slane %v3500, 2
      %v3502 = vadd.f32 %v3500, %v3501
      %v3503 = vrot.slane %v3502, 1
      %v3504 = vadd.f32 %v3502, %v3503
      %v3505 = vadd.f32 %v3495, %v3504
      %v3506 = vld [vmem:[%s8 + $0x10] sm:$0xf]
      %v3507 = vmul.f32 %v3485, %v3506
      %vm3508 = vcmask 3072
      %v3509 = vsel %vm3508, %v3507, 0.0
      %v3510 = vrot.slane %v3509, 4
      %v3511 = vadd.f32 %v3509, %v3510
      %v3512 = vrot.slane %v3511, 2
      %v3513 = vadd.f32 %v3511, %v3512
      %v3514 = vrot.slane %v3513, 1
      %v3515 = vadd.f32 %v3513, %v3514
      %v3516 = vadd.f32 %v3505, %v3515
      %v3517 = vld [vmem:[%s8 + $0x18] sm:$0x1]
      %v3518 = vadd.f32 %v3516, %v3517
      %vm3519 = vcmask 0
      %3520 = vst.msk [vmem:[%s462] sm:$0x1] %vm3519, %v3518
      %p3521 = scmp.lt.s32.totalorder %s23, 1
      %s3522 = scalar_select %p3521, %s23, 1
      %s3523 = scalar_lea.vmem %s10, %s3522
      %p3524 = scmp.lt.s32.totalorder %s23, 1
      %s3525 = scalar_select %p3524, %s23, 1
      %s3526 = scalar_lea.vmem %s11, %s3525
      // Predicated region
      $region61: #{hypertrack_forward.1} parent=59 // pred_check
        %p3527 = pneg %p276
      $region62: #{hypertrack_forward.1} parent=59 // pred_check_branch
        %3529 = sbr.rel (%p3527) target = $region64
      $region63: #{hypertrack_forward.1} parent=59 // pred_region
        _
      $region64: #{hypertrack_forward.1} parent=59 // pred_fallthru
        _
      // Predicated region
      $region65: #{hypertrack_forward.1} parent=59 // pred_check
        %p3530 = pneg %p302
      $region66: #{hypertrack_forward.1} parent=59 // pred_check_branch
        %3532 = sbr.rel (%p3530) target = $region68
      $region67: #{hypertrack_forward.1} parent=59 // pred_region
        _
      $region68: #{hypertrack_forward.1} parent=59 // pred_fallthru
        _
    $region60: #{hypertrack_forward.1} parent=5 // pred_fallthru
      _
    %p3533 = scmp.le.s32.totalorder 2, %s18
    // Predicated region
    $region69: #{hypertrack_forward.1} parent=5 // pred_check
      %p3534 = pneg %p3533
    $region70: #{hypertrack_forward.1} parent=5 // pred_check_branch
      %3536 = sbr.rel (%p3534) target = $region72
    $region71: #{hypertrack_forward.1} parent=5 // pred_region
      %s3537 = ssub.s32 %s18, 2
      // Predicated region
      $region73: #{hypertrack_forward.1} parent=71 // pred_check
        %p3538 = pneg %p282
      $region74: #{hypertrack_forward.1} parent=71 // pred_check_branch
        %3540 = sbr.rel (%p3538) target = $region76
      $region75: #{hypertrack_forward.1} parent=71 // pred_region
        %p3541 = scmp.lt.s32.totalorder %s24, 1
        %s3542 = scalar_select %p3541, %s24, 1
        %s3543 = scalar_lea.vmem %s10, %s3542
      $region76: #{hypertrack_forward.1} parent=71 // pred_fallthru
        _
      // Predicated region
      $region77: #{hypertrack_forward.1} parent=71 // pred_check
        %p3544 = pneg %p308
      $region78: #{hypertrack_forward.1} parent=71 // pred_check_branch
        %3546 = sbr.rel (%p3544) target = $region80
      $region79: #{hypertrack_forward.1} parent=71 // pred_region
        %p3547 = scmp.lt.s32.totalorder %s24, 1
        %s3548 = scalar_select %p3547, %s24, 1
        %s3549 = scalar_lea.vmem %s11, %s3548
      $region80: #{hypertrack_forward.1} parent=71 // pred_fallthru
        _
    $region72: #{hypertrack_forward.1} parent=5 // pred_fallthru
      _
  $region6: #{hypertrack_forward.1} parent=0 // loop_footer
    %s22 = sadd.s32 1, %s18
  $region7: #{hypertrack_forward.1} parent=0 // loop_footer_branch
    %17 = sbr.rel target = $region3
  $region8: #{hypertrack_forward.1} parent=0 // loop_exit
    _

</llo_original>
